<compile_context>
chip_gen: v7x
topology: tpu7x:2x2x1
jax: 0.10.0
libtpu: 0.0.40
codegen_flags: <defaults>
</compile_context>

<pallas_src>
import jax
import jax.numpy as jnp
from jax import lax
from jax.experimental import pallas as pl
from jax.experimental.pallas import tpu as pltpu

# ----------------------------- configuration --------------------------------
B, S = 2, 8          # batch, sequence length
VOCAB = 100          # synthetic vocab size
H = 32               # BERT hidden size
NH = 4               # attention heads
HD = H // NH         # head dim
INTER = 64           # FFN intermediate size
N_LAYERS = 2         # encoder layers
DENSE1 = 256         # module: Linear(bert_hidden, 256)
HIDDEN2 = 64         # module: hidden_size
N_CLASSES = 5        # train_classes
OUT_PAD = 128        # lane-dense padded logits width (sliced back in wrapper)
LN_EPS = 1e-12       # BERT layernorm eps

F32 = jnp.float32
BF16 = jnp.bfloat16


# ------------------------------ kernel helpers -------------------------------
def _layernorm(x, g, b):
    mu = jnp.mean(x, axis=-1, keepdims=True)
    var = jnp.mean((x - mu) ** 2, axis=-1, keepdims=True)
    return (x - mu) * lax.rsqrt(var + LN_EPS) * g + b


def fused_forward_kernel(ids_ref, wemb_ref, ptemb_ref, eg_ref, eb_ref,
                         wqkv_ref, bqkv_ref, wo_ref, bo_ref,
                         g1_ref, be1_ref, w1_ref, b1_ref,
                         w2_ref, b2_ref, g2_ref, be2_ref,
                         pw_ref, pb_ref, d1w_ref, d1b_ref,
                         d2w_ref, d2b_ref, ow_ref, ob_ref,
                         o_ref, x_scratch):
    # ---- fused BERT embedding: per-row gather (ids in SMEM) + pos/type add ----
    for i in range(B * S):
        tok = ids_ref[i]                                         # SMEM scalar
        x_scratch[pl.ds(i, 1), :] = (
            wemb_ref[pl.ds(tok, 1), :] + ptemb_ref[pl.ds(i % S, 1), :])
    x = _layernorm(x_scratch[...], eg_ref[...], eb_ref[...])     # (B*S, H) f32

    # ---- BERT encoder: static loop over layers (weights stacked on dim 0) ----
    for l in range(N_LAYERS):
        # fused QKV projection; 1/sqrt(HD) already folded into Q cols/bias.
        qkv = jnp.dot(x.astype(BF16), wqkv_ref[l],
                      preferred_element_type=F32) + bqkv_ref[l]   # (B*S, 3H)
        q = qkv[:, 0 * H:1 * H]
        k = qkv[:, 1 * H:2 * H]
        v = qkv[:, 2 * H:3 * H]

        # Attention: batched over B (single-batch-dim einsums), static loop
        # over heads.  Per-head context is folded directly into the per-head
        # output projection (wo pre-split), so no lane-concat is needed.
        attn = None
        for h in range(NH):
            c0 = h * HD
            qh = q[:, c0:c0 + HD].astype(BF16).reshape(B, S, HD)
            kh = k[:, c0:c0 + HD].astype(BF16).reshape(B, S, HD)
            vh = v[:, c0:c0 + HD].astype(BF16).reshape(B, S, HD)
            s = jnp.einsum('bqd,bkd->bqk', qh, kh,
                           preferred_element_type=F32)
            s = s - jnp.max(s, axis=-1, keepdims=True)
            p = jnp.exp(s)
            p = p * pl.reciprocal(jnp.sum(p, axis=-1, keepdims=True),
                                  approx=True)
            ch = jnp.einsum('bqk,bkd->bqd', p.astype(BF16), vh,
                            preferred_element_type=F32).reshape(B * S, HD)
            t = jnp.dot(ch.astype(BF16), wo_ref[l, h],
                        preferred_element_type=F32)
            attn = t if attn is None else attn + t
        attn_out = attn + bo_ref[l]
        h1 = _layernorm(x + attn_out, g1_ref[l], be1_ref[l])

        ffn = jnp.dot(h1.astype(BF16), w1_ref[l],
                      preferred_element_type=F32) + b1_ref[l]
        # TODO(synk): HF BERT uses exact (erf) GELU; tanh approximation here.
        ffn = jax.nn.gelu(ffn, approximate=True)
        ffn = jnp.dot(ffn.astype(BF16), w2_ref[l],
                      preferred_element_type=F32) + b2_ref[l]
        x = _layernorm(h1 + ffn, g2_ref[l], be2_ref[l])

    # ---- BERT pooler ([CLS] rows via one strided view) + classifier head ----
    cls = x.reshape(B, S, H)[:, 0, :]                             # (B, H)
    pooled = jnp.tanh(jnp.dot(cls.astype(BF16), pw_ref[...],
                              preferred_element_type=F32) + pb_ref[...])
    hd1 = jnp.maximum(jnp.dot(pooled.astype(BF16), d1w_ref[...],
                              preferred_element_type=F32) + d1b_ref[...], 0.0)
    hd2 = jnp.maximum(jnp.dot(hd1.astype(BF16), d2w_ref[...],
                              preferred_element_type=F32) + d2b_ref[...], 0.0)
    # lane-dense (128-wide, zero-padded) full-width store
    o_ref[...] = jnp.dot(hd2.astype(BF16), ow_ref[...],
                         preferred_element_type=F32) + ob_ref[...]


# ------------------------------ parameter init -------------------------------
def init_params(key):
    def normal(key, shape, std=0.02):
        return std * jax.random.normal(key, shape, dtype=F32)

    keys = iter(jax.random.split(key, 64))
    p = {
        "word_emb": normal(next(keys), (VOCAB, H)),
        "pos_emb": normal(next(keys), (S, H)),
        "tok_emb": normal(next(keys), (2, H)),
        "emb_ln_g": jnp.ones((1, H), F32),
        "emb_ln_b": jnp.zeros((1, H), F32),
        "layers": [],
    }
    for _ in range(N_LAYERS):
        p["layers"].append({
            "wq": normal(next(keys), (H, H)), "bq": jnp.zeros((1, H), F32),
            "wk": normal(next(keys), (H, H)), "bk": jnp.zeros((1, H), F32),
            "wv": normal(next(keys), (H, H)), "bv": jnp.zeros((1, H), F32),
            "wo": normal(next(keys), (H, H)), "bo": jnp.zeros((1, H), F32),
            "g1": jnp.ones((1, H), F32), "be1": jnp.zeros((1, H), F32),
            "w1": normal(next(keys), (H, INTER)), "b1": jnp.zeros((1, INTER), F32),
            "w2": normal(next(keys), (INTER, H)), "b2": jnp.zeros((1, H), F32),
            "g2": jnp.ones((1, H), F32), "be2": jnp.zeros((1, H), F32),
        })
    p["pool_w"] = normal(next(keys), (H, H))
    p["pool_b"] = jnp.zeros((1, H), F32)
    p["dense_w"] = normal(next(keys), (H, DENSE1))
    p["dense_b"] = jnp.zeros((1, DENSE1), F32)
    p["dense2_w"] = normal(next(keys), (DENSE1, HIDDEN2))
    p["dense2_b"] = jnp.zeros((1, HIDDEN2), F32)
    p["out_w"] = normal(next(keys), (HIDDEN2, N_CLASSES))
    p["out_b"] = jnp.zeros((1, N_CLASSES), F32)
    return p


def prepare_params(p):
    """One-time packing of weights into kernel-ready layouts.

    Runs ONCE (outside the per-call jitted forward): QKV fusion with the
    attention scale folded into the Q third, per-layer stacking, per-head wo
    split, pos+token-type embedding fold, lane-dense logits padding, and bf16
    casting of all MXU weight operands.
    """
    L = p["layers"]
    scale = 1.0 / (HD ** 0.5)
    wqkv = jnp.stack([jnp.concatenate([l["wq"] * scale, l["wk"], l["wv"]],
                                      axis=1) for l in L])
    bqkv = jnp.stack([jnp.concatenate([l["bq"] * scale, l["bk"], l["bv"]],
                                      axis=1) for l in L])
    ow_pad = jnp.zeros((HIDDEN2, OUT_PAD), F32).at[:, :N_CLASSES].set(p["out_w"])
    ob_pad = jnp.zeros((1, OUT_PAD), F32).at[:, :N_CLASSES].set(p["out_b"])
    return dict(
        word_emb=p["word_emb"],                                     # f32 (LN input)
        pos_tok_emb=p["pos_emb"] + p["tok_emb"][0][None, :],        # (S, H) f32
        eg=p["emb_ln_g"], eb=p["emb_ln_b"],
        wqkv=wqkv.astype(BF16), bqkv=bqkv,
        wo=jnp.stack([l["wo"].reshape(NH, HD, H) for l in L]).astype(BF16),
        bo=jnp.stack([l["bo"] for l in L]),
        g1=jnp.stack([l["g1"] for l in L]),
        be1=jnp.stack([l["be1"] for l in L]),
        w1=jnp.stack([l["w1"] for l in L]).astype(BF16),
        b1=jnp.stack([l["b1"] for l in L]),
        w2=jnp.stack([l["w2"] for l in L]).astype(BF16),
        b2=jnp.stack([l["b2"] for l in L]),
        g2=jnp.stack([l["g2"] for l in L]),
        be2=jnp.stack([l["be2"] for l in L]),
        pw=p["pool_w"].astype(BF16), pb=p["pool_b"],
        d1w=p["dense_w"].astype(BF16), d1b=p["dense_b"],
        d2w=p["dense2_w"].astype(BF16), d2b=p["dense2_b"],
        ow=ow_pad.astype(BF16), ob=ob_pad,
    )


# ------------------------------ forward pass ---------------------------------
@jax.jit
def text_transformer_forward(prep, input_ids):
    ids = input_ids.reshape(B * S).astype(jnp.int32)
    args = (ids, prep["word_emb"], prep["pos_tok_emb"], prep["eg"], prep["eb"],
            prep["wqkv"], prep["bqkv"], prep["wo"], prep["bo"],
            prep["g1"], prep["be1"], prep["w1"], prep["b1"],
            prep["w2"], prep["b2"], prep["g2"], prep["be2"],
            prep["pw"], prep["pb"], prep["d1w"], prep["d1b"],
            prep["d2w"], prep["d2b"], prep["ow"], prep["ob"])
    in_specs = ([pl.BlockSpec(memory_space=pltpu.MemorySpace.SMEM)]      # ids
                + [pl.BlockSpec(memory_space=pltpu.MemorySpace.VMEM)]
                * (len(args) - 1))
    # Single fused kernel, no grid: all weights/activations (<1 MiB) stay VMEM
    # resident on v5e/v6e/v7x; a batch grid / 2-core split would be pure
    # launch overhead at B*S = 16.
    logits_padded = pl.pallas_call(
        fused_forward_kernel,
        out_shape=jax.ShapeDtypeStruct((B, OUT_PAD), F32),
        in_specs=in_specs,
        out_specs=pl.BlockSpec(memory_space=pltpu.MemorySpace.VMEM),
        scratch_shapes=[pltpu.VMEM((B * S, H), F32)],
    )(*args)
    return logits_padded[:, :N_CLASSES]


# ----------------------------------- main ------------------------------------
if __name__ == "__main__":
    key = jax.random.PRNGKey(0)
    pkey, ikey = jax.random.split(key)
    params = init_params(pkey)
    prep = prepare_params(params)            # one-time weight packing
    input_ids = jax.random.randint(ikey, (B, S), 0, VOCAB, dtype=jnp.int32)

    logits = text_transformer_forward(prep, input_ids)
    jax.block_until_ready(logits)

    assert logits.shape == (B, N_CLASSES)
    assert logits.dtype == jnp.float32
    assert bool(jnp.all(jnp.isfinite(logits)))
    print("KERNEL_OK")
</pallas_src>

<mosaic_0001>
module attributes {stable_mosaic.version = 11 : i64} {
  func.func @fused_forward_kernel(%arg0: memref<16xi32, #tpu.memory_space<smem>>, %arg1: memref<100x32xf32, #tpu.memory_space<vmem>>, %arg2: memref<8x32xf32, #tpu.memory_space<vmem>>, %arg3: memref<1x32xf32, #tpu.memory_space<vmem>>, %arg4: memref<1x32xf32, #tpu.memory_space<vmem>>, %arg5: memref<2x32x96xbf16, #tpu.memory_space<vmem>>, %arg6: memref<2x1x96xf32, #tpu.memory_space<vmem>>, %arg7: memref<2x4x8x32xbf16, #tpu.memory_space<vmem>>, %arg8: memref<2x1x32xf32, #tpu.memory_space<vmem>>, %arg9: memref<2x1x32xf32, #tpu.memory_space<vmem>>, %arg10: memref<2x1x32xf32, #tpu.memory_space<vmem>>, %arg11: memref<2x32x64xbf16, #tpu.memory_space<vmem>>, %arg12: memref<2x1x64xf32, #tpu.memory_space<vmem>>, %arg13: memref<2x64x32xbf16, #tpu.memory_space<vmem>>, %arg14: memref<2x1x32xf32, #tpu.memory_space<vmem>>, %arg15: memref<2x1x32xf32, #tpu.memory_space<vmem>>, %arg16: memref<2x1x32xf32, #tpu.memory_space<vmem>>, %arg17: memref<32x32xbf16, #tpu.memory_space<vmem>>, %arg18: memref<1x32xf32, #tpu.memory_space<vmem>>, %arg19: memref<32x256xbf16, #tpu.memory_space<vmem>>, %arg20: memref<1x256xf32, #tpu.memory_space<vmem>>, %arg21: memref<256x64xbf16, #tpu.memory_space<vmem>>, %arg22: memref<1x64xf32, #tpu.memory_space<vmem>>, %arg23: memref<64x128xbf16, #tpu.memory_space<vmem>>, %arg24: memref<1x128xf32, #tpu.memory_space<vmem>>, %arg25: memref<2x128xf32, #tpu.memory_space<vmem>>, %arg26: memref<16x32xf32, #tpu.memory_space<vmem>>) attributes {dimension_semantics = [], scalar_prefetch = 0 : i64, scratch_operands = 1 : i64, tpu.core_type = #tpu.core_type<tc>} {
    %c0 = arith.constant 0 : index
    %0 = memref.load %arg0[%c0] : memref<16xi32, #tpu.memory_space<smem>>
    %1 = arith.index_cast %0 : i32 to index
    %c0_0 = arith.constant 0 : index
    %2 = vector.load %arg1[%1, %c0_0] : memref<100x32xf32, #tpu.memory_space<vmem>>, vector<1x32xf32>
    %c0_1 = arith.constant 0 : index
    %c0_2 = arith.constant 0 : index
    %3 = vector.load %arg2[%c0_1, %c0_2] : memref<8x32xf32, #tpu.memory_space<vmem>>, vector<1x32xf32>
    %4 = arith.addf %2, %3 : vector<1x32xf32>
    %c0_3 = arith.constant 0 : index
    %c0_4 = arith.constant 0 : index
    %5 = vector.load %arg26[%c0_3, %c0_4] : memref<16x32xf32, #tpu.memory_space<vmem>>, vector<1x32xf32>
    tpu.vector_store %arg26[%c0_3, %c0_4], %4 {strides = array<i32>} : memref<16x32xf32, #tpu.memory_space<vmem>>, vector<1x32xf32>,
    %c1 = arith.constant 1 : index
    %6 = memref.load %arg0[%c1] : memref<16xi32, #tpu.memory_space<smem>>
    %7 = arith.index_cast %6 : i32 to index
    %c0_5 = arith.constant 0 : index
    %8 = vector.load %arg1[%7, %c0_5] : memref<100x32xf32, #tpu.memory_space<vmem>>, vector<1x32xf32>
    %c1_6 = arith.constant 1 : index
    %c0_7 = arith.constant 0 : index
    %9 = vector.load %arg2[%c1_6, %c0_7] : memref<8x32xf32, #tpu.memory_space<vmem>>, vector<1x32xf32>
    %10 = arith.addf %8, %9 : vector<1x32xf32>
    %c1_8 = arith.constant 1 : index
    %c0_9 = arith.constant 0 : index
    %11 = vector.load %arg26[%c1_8, %c0_9] : memref<16x32xf32, #tpu.memory_space<vmem>>, vector<1x32xf32>
    tpu.vector_store %arg26[%c1_8, %c0_9], %10 {strides = array<i32>} : memref<16x32xf32, #tpu.memory_space<vmem>>, vector<1x32xf32>,
    %c2 = arith.constant 2 : index
    %12 = memref.load %arg0[%c2] : memref<16xi32, #tpu.memory_space<smem>>
    %13 = arith.index_cast %12 : i32 to index
    %c0_10 = arith.constant 0 : index
    %14 = vector.load %arg1[%13, %c0_10] : memref<100x32xf32, #tpu.memory_space<vmem>>, vector<1x32xf32>
    %c2_11 = arith.constant 2 : index
    %c0_12 = arith.constant 0 : index
    %15 = vector.load %arg2[%c2_11, %c0_12] : memref<8x32xf32, #tpu.memory_space<vmem>>, vector<1x32xf32>
    %16 = arith.addf %14, %15 : vector<1x32xf32>
    %c2_13 = arith.constant 2 : index
    %c0_14 = arith.constant 0 : index
    %17 = vector.load %arg26[%c2_13, %c0_14] : memref<16x32xf32, #tpu.memory_space<vmem>>, vector<1x32xf32>
    tpu.vector_store %arg26[%c2_13, %c0_14], %16 {strides = array<i32>} : memref<16x32xf32, #tpu.memory_space<vmem>>, vector<1x32xf32>,
    %c3 = arith.constant 3 : index
    %18 = memref.load %arg0[%c3] : memref<16xi32, #tpu.memory_space<smem>>
    %19 = arith.index_cast %18 : i32 to index
    %c0_15 = arith.constant 0 : index
    %20 = vector.load %arg1[%19, %c0_15] : memref<100x32xf32, #tpu.memory_space<vmem>>, vector<1x32xf32>
    %c3_16 = arith.constant 3 : index
    %c0_17 = arith.constant 0 : index
    %21 = vector.load %arg2[%c3_16, %c0_17] : memref<8x32xf32, #tpu.memory_space<vmem>>, vector<1x32xf32>
    %22 = arith.addf %20, %21 : vector<1x32xf32>
    %c3_18 = arith.constant 3 : index
    %c0_19 = arith.constant 0 : index
    %23 = vector.load %arg26[%c3_18, %c0_19] : memref<16x32xf32, #tpu.memory_space<vmem>>, vector<1x32xf32>
    tpu.vector_store %arg26[%c3_18, %c0_19], %22 {strides = array<i32>} : memref<16x32xf32, #tpu.memory_space<vmem>>, vector<1x32xf32>,
    %c4 = arith.constant 4 : index
    %24 = memref.load %arg0[%c4] : memref<16xi32, #tpu.memory_space<smem>>
    %25 = arith.index_cast %24 : i32 to index
    %c0_20 = arith.constant 0 : index
    %26 = vector.load %arg1[%25, %c0_20] : memref<100x32xf32, #tpu.memory_space<vmem>>, vector<1x32xf32>
    %c4_21 = arith.constant 4 : index
    %c0_22 = arith.constant 0 : index
    %27 = vector.load %arg2[%c4_21, %c0_22] : memref<8x32xf32, #tpu.memory_space<vmem>>, vector<1x32xf32>
    %28 = arith.addf %26, %27 : vector<1x32xf32>
    %c4_23 = arith.constant 4 : index
    %c0_24 = arith.constant 0 : index
    %29 = vector.load %arg26[%c4_23, %c0_24] : memref<16x32xf32, #tpu.memory_space<vmem>>, vector<1x32xf32>
    tpu.vector_store %arg26[%c4_23, %c0_24], %28 {strides = array<i32>} : memref<16x32xf32, #tpu.memory_space<vmem>>, vector<1x32xf32>,
    %c5 = arith.constant 5 : index
    %30 = memref.load %arg0[%c5] : memref<16xi32, #tpu.memory_space<smem>>
    %31 = arith.index_cast %30 : i32 to index
    %c0_25 = arith.constant 0 : index
    %32 = vector.load %arg1[%31, %c0_25] : memref<100x32xf32, #tpu.memory_space<vmem>>, vector<1x32xf32>
    %c5_26 = arith.constant 5 : index
    %c0_27 = arith.constant 0 : index
    %33 = vector.load %arg2[%c5_26, %c0_27] : memref<8x32xf32, #tpu.memory_space<vmem>>, vector<1x32xf32>
    %34 = arith.addf %32, %33 : vector<1x32xf32>
    %c5_28 = arith.constant 5 : index
    %c0_29 = arith.constant 0 : index
    %35 = vector.load %arg26[%c5_28, %c0_29] : memref<16x32xf32, #tpu.memory_space<vmem>>, vector<1x32xf32>
    tpu.vector_store %arg26[%c5_28, %c0_29], %34 {strides = array<i32>} : memref<16x32xf32, #tpu.memory_space<vmem>>, vector<1x32xf32>,
    %c6 = arith.constant 6 : index
    %36 = memref.load %arg0[%c6] : memref<16xi32, #tpu.memory_space<smem>>
    %37 = arith.index_cast %36 : i32 to index
    %c0_30 = arith.constant 0 : index
    %38 = vector.load %arg1[%37, %c0_30] : memref<100x32xf32, #tpu.memory_space<vmem>>, vector<1x32xf32>
    %c6_31 = arith.constant 6 : index
    %c0_32 = arith.constant 0 : index
    %39 = vector.load %arg2[%c6_31, %c0_32] : memref<8x32xf32, #tpu.memory_space<vmem>>, vector<1x32xf32>
    %40 = arith.addf %38, %39 : vector<1x32xf32>
    %c6_33 = arith.constant 6 : index
    %c0_34 = arith.constant 0 : index
    %41 = vector.load %arg26[%c6_33, %c0_34] : memref<16x32xf32, #tpu.memory_space<vmem>>, vector<1x32xf32>
    tpu.vector_store %arg26[%c6_33, %c0_34], %40 {strides = array<i32>} : memref<16x32xf32, #tpu.memory_space<vmem>>, vector<1x32xf32>,
    %c7 = arith.constant 7 : index
    %42 = memref.load %arg0[%c7] : memref<16xi32, #tpu.memory_space<smem>>
    %43 = arith.index_cast %42 : i32 to index
    %c0_35 = arith.constant 0 : index
    %44 = vector.load %arg1[%43, %c0_35] : memref<100x32xf32, #tpu.memory_space<vmem>>, vector<1x32xf32>
    %c7_36 = arith.constant 7 : index
    %c0_37 = arith.constant 0 : index
    %45 = vector.load %arg2[%c7_36, %c0_37] : memref<8x32xf32, #tpu.memory_space<vmem>>, vector<1x32xf32>
    %46 = arith.addf %44, %45 : vector<1x32xf32>
    %c7_38 = arith.constant 7 : index
    %c0_39 = arith.constant 0 : index
    %47 = vector.load %arg26[%c7_38, %c0_39] : memref<16x32xf32, #tpu.memory_space<vmem>>, vector<1x32xf32>
    tpu.vector_store %arg26[%c7_38, %c0_39], %46 {strides = array<i32>} : memref<16x32xf32, #tpu.memory_space<vmem>>, vector<1x32xf32>,
    %c8 = arith.constant 8 : index
    %48 = memref.load %arg0[%c8] : memref<16xi32, #tpu.memory_space<smem>>
    %49 = arith.index_cast %48 : i32 to index
    %c0_40 = arith.constant 0 : index
    %50 = vector.load %arg1[%49, %c0_40] : memref<100x32xf32, #tpu.memory_space<vmem>>, vector<1x32xf32>
    %c0_41 = arith.constant 0 : index
    %c0_42 = arith.constant 0 : index
    %51 = vector.load %arg2[%c0_41, %c0_42] : memref<8x32xf32, #tpu.memory_space<vmem>>, vector<1x32xf32>
    %52 = arith.addf %50, %51 : vector<1x32xf32>
    %c8_43 = arith.constant 8 : index
    %c0_44 = arith.constant 0 : index
    %53 = vector.load %arg26[%c8_43, %c0_44] : memref<16x32xf32, #tpu.memory_space<vmem>>, vector<1x32xf32>
    tpu.vector_store %arg26[%c8_43, %c0_44], %52 {strides = array<i32>} : memref<16x32xf32, #tpu.memory_space<vmem>>, vector<1x32xf32>,
    %c9 = arith.constant 9 : index
    %54 = memref.load %arg0[%c9] : memref<16xi32, #tpu.memory_space<smem>>
    %55 = arith.index_cast %54 : i32 to index
    %c0_45 = arith.constant 0 : index
    %56 = vector.load %arg1[%55, %c0_45] : memref<100x32xf32, #tpu.memory_space<vmem>>, vector<1x32xf32>
    %c1_46 = arith.constant 1 : index
    %c0_47 = arith.constant 0 : index
    %57 = vector.load %arg2[%c1_46, %c0_47] : memref<8x32xf32, #tpu.memory_space<vmem>>, vector<1x32xf32>
    %58 = arith.addf %56, %57 : vector<1x32xf32>
    %c9_48 = arith.constant 9 : index
    %c0_49 = arith.constant 0 : index
    %59 = vector.load %arg26[%c9_48, %c0_49] : memref<16x32xf32, #tpu.memory_space<vmem>>, vector<1x32xf32>
    tpu.vector_store %arg26[%c9_48, %c0_49], %58 {strides = array<i32>} : memref<16x32xf32, #tpu.memory_space<vmem>>, vector<1x32xf32>,
    %c10 = arith.constant 10 : index
    %60 = memref.load %arg0[%c10] : memref<16xi32, #tpu.memory_space<smem>>
    %61 = arith.index_cast %60 : i32 to index
    %c0_50 = arith.constant 0 : index
    %62 = vector.load %arg1[%61, %c0_50] : memref<100x32xf32, #tpu.memory_space<vmem>>, vector<1x32xf32>
    %c2_51 = arith.constant 2 : index
    %c0_52 = arith.constant 0 : index
    %63 = vector.load %arg2[%c2_51, %c0_52] : memref<8x32xf32, #tpu.memory_space<vmem>>, vector<1x32xf32>
    %64 = arith.addf %62, %63 : vector<1x32xf32>
    %c10_53 = arith.constant 10 : index
    %c0_54 = arith.constant 0 : index
    %65 = vector.load %arg26[%c10_53, %c0_54] : memref<16x32xf32, #tpu.memory_space<vmem>>, vector<1x32xf32>
    tpu.vector_store %arg26[%c10_53, %c0_54], %64 {strides = array<i32>} : memref<16x32xf32, #tpu.memory_space<vmem>>, vector<1x32xf32>,
    %c11 = arith.constant 11 : index
    %66 = memref.load %arg0[%c11] : memref<16xi32, #tpu.memory_space<smem>>
    %67 = arith.index_cast %66 : i32 to index
    %c0_55 = arith.constant 0 : index
    %68 = vector.load %arg1[%67, %c0_55] : memref<100x32xf32, #tpu.memory_space<vmem>>, vector<1x32xf32>
    %c3_56 = arith.constant 3 : index
    %c0_57 = arith.constant 0 : index
    %69 = vector.load %arg2[%c3_56, %c0_57] : memref<8x32xf32, #tpu.memory_space<vmem>>, vector<1x32xf32>
    %70 = arith.addf %68, %69 : vector<1x32xf32>
    %c11_58 = arith.constant 11 : index
    %c0_59 = arith.constant 0 : index
    %71 = vector.load %arg26[%c11_58, %c0_59] : memref<16x32xf32, #tpu.memory_space<vmem>>, vector<1x32xf32>
    tpu.vector_store %arg26[%c11_58, %c0_59], %70 {strides = array<i32>} : memref<16x32xf32, #tpu.memory_space<vmem>>, vector<1x32xf32>,
    %c12 = arith.constant 12 : index
    %72 = memref.load %arg0[%c12] : memref<16xi32, #tpu.memory_space<smem>>
    %73 = arith.index_cast %72 : i32 to index
    %c0_60 = arith.constant 0 : index
    %74 = vector.load %arg1[%73, %c0_60] : memref<100x32xf32, #tpu.memory_space<vmem>>, vector<1x32xf32>
    %c4_61 = arith.constant 4 : index
    %c0_62 = arith.constant 0 : index
    %75 = vector.load %arg2[%c4_61, %c0_62] : memref<8x32xf32, #tpu.memory_space<vmem>>, vector<1x32xf32>
    %76 = arith.addf %74, %75 : vector<1x32xf32>
    %c12_63 = arith.constant 12 : index
    %c0_64 = arith.constant 0 : index
    %77 = vector.load %arg26[%c12_63, %c0_64] : memref<16x32xf32, #tpu.memory_space<vmem>>, vector<1x32xf32>
    tpu.vector_store %arg26[%c12_63, %c0_64], %76 {strides = array<i32>} : memref<16x32xf32, #tpu.memory_space<vmem>>, vector<1x32xf32>,
    %c13 = arith.constant 13 : index
    %78 = memref.load %arg0[%c13] : memref<16xi32, #tpu.memory_space<smem>>
    %79 = arith.index_cast %78 : i32 to index
    %c0_65 = arith.constant 0 : index
    %80 = vector.load %arg1[%79, %c0_65] : memref<100x32xf32, #tpu.memory_space<vmem>>, vector<1x32xf32>
    %c5_66 = arith.constant 5 : index
    %c0_67 = arith.constant 0 : index
    %81 = vector.load %arg2[%c5_66, %c0_67] : memref<8x32xf32, #tpu.memory_space<vmem>>, vector<1x32xf32>
    %82 = arith.addf %80, %81 : vector<1x32xf32>
    %c13_68 = arith.constant 13 : index
    %c0_69 = arith.constant 0 : index
    %83 = vector.load %arg26[%c13_68, %c0_69] : memref<16x32xf32, #tpu.memory_space<vmem>>, vector<1x32xf32>
    tpu.vector_store %arg26[%c13_68, %c0_69], %82 {strides = array<i32>} : memref<16x32xf32, #tpu.memory_space<vmem>>, vector<1x32xf32>,
    %c14 = arith.constant 14 : index
    %84 = memref.load %arg0[%c14] : memref<16xi32, #tpu.memory_space<smem>>
    %85 = arith.index_cast %84 : i32 to index
    %c0_70 = arith.constant 0 : index
    %86 = vector.load %arg1[%85, %c0_70] : memref<100x32xf32, #tpu.memory_space<vmem>>, vector<1x32xf32>
    %c6_71 = arith.constant 6 : index
    %c0_72 = arith.constant 0 : index
    %87 = vector.load %arg2[%c6_71, %c0_72] : memref<8x32xf32, #tpu.memory_space<vmem>>, vector<1x32xf32>
    %88 = arith.addf %86, %87 : vector<1x32xf32>
    %c14_73 = arith.constant 14 : index
    %c0_74 = arith.constant 0 : index
    %89 = vector.load %arg26[%c14_73, %c0_74] : memref<16x32xf32, #tpu.memory_space<vmem>>, vector<1x32xf32>
    tpu.vector_store %arg26[%c14_73, %c0_74], %88 {strides = array<i32>} : memref<16x32xf32, #tpu.memory_space<vmem>>, vector<1x32xf32>,
    %c15 = arith.constant 15 : index
    %90 = memref.load %arg0[%c15] : memref<16xi32, #tpu.memory_space<smem>>
    %91 = arith.index_cast %90 : i32 to index
    %c0_75 = arith.constant 0 : index
    %92 = vector.load %arg1[%91, %c0_75] : memref<100x32xf32, #tpu.memory_space<vmem>>, vector<1x32xf32>
    %c7_76 = arith.constant 7 : index
    %c0_77 = arith.constant 0 : index
    %93 = vector.load %arg2[%c7_76, %c0_77] : memref<8x32xf32, #tpu.memory_space<vmem>>, vector<1x32xf32>
    %94 = arith.addf %92, %93 : vector<1x32xf32>
    %c15_78 = arith.constant 15 : index
    %c0_79 = arith.constant 0 : index
    %95 = vector.load %arg26[%c15_78, %c0_79] : memref<16x32xf32, #tpu.memory_space<vmem>>, vector<1x32xf32>
    tpu.vector_store %arg26[%c15_78, %c0_79], %94 {strides = array<i32>} : memref<16x32xf32, #tpu.memory_space<vmem>>, vector<1x32xf32>,
    %c0_80 = arith.constant 0 : index
    %c0_81 = arith.constant 0 : index
    %96 = vector.load %arg26[%c0_80, %c0_81] : memref<16x32xf32, #tpu.memory_space<vmem>>, vector<16x32xf32>
    %c0_82 = arith.constant 0 : index
    %c0_83 = arith.constant 0 : index
    %97 = vector.load %arg3[%c0_82, %c0_83] : memref<1x32xf32, #tpu.memory_space<vmem>>, vector<1x32xf32>
    %c0_84 = arith.constant 0 : index
    %c0_85 = arith.constant 0 : index
    %98 = vector.load %arg4[%c0_84, %c0_85] : memref<1x32xf32, #tpu.memory_space<vmem>>, vector<1x32xf32>
    %cst = arith.constant dense<0.000000e+00> : vector<16xf32>
    %99 = vector.multi_reduction <add>, %96, %cst [1] : vector<16x32xf32> to vector<16xf32>
    %100 = vector.shape_cast %99 : vector<16xf32> to vector<16x1xf32>
    %cst_86 = arith.constant 3.200000e+01 : f32
    %101 = vector.broadcast %cst_86 : f32 to vector<16x1xf32>
    %102 = arith.divf %100, %101 : vector<16x1xf32>
    %103 = vector.broadcast %102 : vector<16x1xf32> to vector<16x32xf32>
    %104 = arith.subf %96, %103 : vector<16x32xf32>
    %105 = arith.mulf %104, %104 : vector<16x32xf32>
    %cst_87 = arith.constant dense<0.000000e+00> : vector<16xf32>
    %106 = vector.multi_reduction <add>, %105, %cst_87 [1] : vector<16x32xf32> to vector<16xf32>
    %107 = vector.shape_cast %106 : vector<16xf32> to vector<16x1xf32>
    %cst_88 = arith.constant 3.200000e+01 : f32
    %108 = vector.broadcast %cst_88 : f32 to vector<16x1xf32>
    %109 = arith.divf %107, %108 : vector<16x1xf32>
    %110 = vector.broadcast %102 : vector<16x1xf32> to vector<16x32xf32>
    %111 = arith.subf %96, %110 : vector<16x32xf32>
    %cst_89 = arith.constant 9.99999996E-13 : f32
    %112 = vector.broadcast %cst_89 : f32 to vector<16x1xf32>
    %113 = arith.addf %109, %112 : vector<16x1xf32>
    %114 = math.rsqrt %113 : vector<16x1xf32>
    %115 = vector.broadcast %114 : vector<16x1xf32> to vector<16x32xf32>
    %116 = arith.mulf %111, %115 : vector<16x32xf32>
    %117 = vector.broadcast %97 : vector<1x32xf32> to vector<16x32xf32>
    %118 = arith.mulf %116, %117 : vector<16x32xf32>
    %119 = vector.broadcast %98 : vector<1x32xf32> to vector<16x32xf32>
    %120 = arith.addf %118, %119 : vector<16x32xf32>
    %121 = arith.truncf %120 : vector<16x32xf32> to vector<16x32xbf16>
    %c0_90 = arith.constant 0 : index
    %c0_91 = arith.constant 0 : index
    %c0_92 = arith.constant 0 : index
    %122 = vector.load %arg5[%c0_90, %c0_91, %c0_92] : memref<2x32x96xbf16, #tpu.memory_space<vmem>>, vector<1x32x96xbf16>
    %123 = vector.shape_cast %122 : vector<1x32x96xbf16> to vector<32x96xbf16>
    %cst_93 = arith.constant dense<0.000000e+00> : vector<16x96xf32>
    %124 = tpu.matmul %121, %123, %cst_93 {dimension_numbers = #tpu.dot_dimension_numbers<[1], [0], [0], [1], [0, 0, 1, 1], [], []>} : vector<16x32xbf16>, vector<32x96xbf16>, vector<16x96xf32> -> vector<16x96xf32>
    %c0_94 = arith.constant 0 : index
    %c0_95 = arith.constant 0 : index
    %c0_96 = arith.constant 0 : index
    %125 = vector.load %arg6[%c0_94, %c0_95, %c0_96] : memref<2x1x96xf32, #tpu.memory_space<vmem>>, vector<1x1x96xf32>
    %126 = vector.shape_cast %125 : vector<1x1x96xf32> to vector<1x96xf32>
    %127 = vector.broadcast %126 : vector<1x96xf32> to vector<16x96xf32>
    %128 = arith.addf %124, %127 : vector<16x96xf32>
    %129 = vector.extract_strided_slice %128 {offsets = [0, 0], sizes = [16, 32], strides = [1, 1]} : vector<16x96xf32> to vector<16x32xf32>
    %130 = vector.extract_strided_slice %128 {offsets = [0, 32], sizes = [16, 32], strides = [1, 1]} : vector<16x96xf32> to vector<16x32xf32>
    %131 = vector.extract_strided_slice %128 {offsets = [0, 64], sizes = [16, 32], strides = [1, 1]} : vector<16x96xf32> to vector<16x32xf32>
    %132 = vector.extract_strided_slice %129 {offsets = [0, 0], sizes = [16, 8], strides = [1, 1]} : vector<16x32xf32> to vector<16x8xf32>
    %133 = arith.truncf %132 : vector<16x8xf32> to vector<16x8xbf16>
    %134 = vector.shape_cast %133 : vector<16x8xbf16> to vector<2x8x8xbf16>
    %135 = vector.extract_strided_slice %130 {offsets = [0, 0], sizes = [16, 8], strides = [1, 1]} : vector<16x32xf32> to vector<16x8xf32>
    %136 = arith.truncf %135 : vector<16x8xf32> to vector<16x8xbf16>
    %137 = vector.shape_cast %136 : vector<16x8xbf16> to vector<2x8x8xbf16>
    %138 = vector.extract_strided_slice %131 {offsets = [0, 0], sizes = [16, 8], strides = [1, 1]} : vector<16x32xf32> to vector<16x8xf32>
    %139 = arith.truncf %138 : vector<16x8xf32> to vector<16x8xbf16>
    %140 = vector.shape_cast %139 : vector<16x8xbf16> to vector<2x8x8xbf16>
    "tpu.trace_start"() <{level = 10 : i32, message = "bqd,bkd->bqk"}> : () -> ()
    %cst_97 = arith.constant dense<0.000000e+00> : vector<2x8x8xf32>
    %141 = tpu.matmul %134, %137, %cst_97 {dimension_numbers = #tpu.dot_dimension_numbers<[2], [2], [1], [1], [0, 0, 0, 1, 1, 1], [0], [0]>} : vector<2x8x8xbf16>, vector<2x8x8xbf16>, vector<2x8x8xf32> -> vector<2x8x8xf32>
    "tpu.trace_stop"() : () -> ()
    %cst_98 = arith.constant dense<0xFF800000> : vector<2x8xf32>
    %142 = vector.multi_reduction <maximumf>, %141, %cst_98 [2] : vector<2x8x8xf32> to vector<2x8xf32>
    %143 = vector.shape_cast %142 : vector<2x8xf32> to vector<2x8x1xf32>
    %144 = vector.broadcast %143 : vector<2x8x1xf32> to vector<2x8x8xf32>
    %145 = arith.subf %141, %144 : vector<2x8x8xf32>
    %146 = math.exp %145 : vector<2x8x8xf32>
    %cst_99 = arith.constant dense<0.000000e+00> : vector<2x8xf32>
    %147 = vector.multi_reduction <add>, %146, %cst_99 [2] : vector<2x8x8xf32> to vector<2x8xf32>
    %148 = vector.shape_cast %147 : vector<2x8xf32> to vector<2x8x1xf32>
    %149 = tpu.reciprocal %148 {approx = true} : vector<2x8x1xf32> -> vector<2x8x1xf32>
    %150 = vector.broadcast %149 : vector<2x8x1xf32> to vector<2x8x8xf32>
    %151 = arith.mulf %146, %150 : vector<2x8x8xf32>
    %152 = arith.truncf %151 : vector<2x8x8xf32> to vector<2x8x8xbf16>
    "tpu.trace_start"() <{level = 10 : i32, message = "bqk,bkd->bqd"}> : () -> ()
    %cst_100 = arith.constant dense<0.000000e+00> : vector<2x8x8xf32>
    %153 = tpu.matmul %152, %140, %cst_100 {dimension_numbers = #tpu.dot_dimension_numbers<[2], [1], [1], [2], [0, 0, 0, 1, 1, 2], [0], [0]>} : vector<2x8x8xbf16>, vector<2x8x8xbf16>, vector<2x8x8xf32> -> vector<2x8x8xf32>
    "tpu.trace_stop"() : () -> ()
    %154 = vector.shape_cast %153 : vector<2x8x8xf32> to vector<16x8xf32>
    %155 = arith.truncf %154 : vector<16x8xf32> to vector<16x8xbf16>
    %c0_101 = arith.constant 0 : index
    %c0_102 = arith.constant 0 : index
    %c0_103 = arith.constant 0 : index
    %c0_104 = arith.constant 0 : index
    %156 = vector.load %arg7[%c0_101, %c0_102, %c0_103, %c0_104] : memref<2x4x8x32xbf16, #tpu.memory_space<vmem>>, vector<1x1x8x32xbf16>
    %157 = vector.shape_cast %156 : vector<1x1x8x32xbf16> to vector<8x32xbf16>
    %cst_105 = arith.constant dense<0.000000e+00> : vector<16x32xf32>
    %158 = tpu.matmul %155, %157, %cst_105 {dimension_numbers = #tpu.dot_dimension_numbers<[1], [0], [0], [1], [0, 0, 1, 1], [], []>} : vector<16x8xbf16>, vector<8x32xbf16>, vector<16x32xf32> -> vector<16x32xf32>
    %159 = vector.extract_strided_slice %129 {offsets = [0, 8], sizes = [16, 8], strides = [1, 1]} : vector<16x32xf32> to vector<16x8xf32>
    %160 = arith.truncf %159 : vector<16x8xf32> to vector<16x8xbf16>
    %161 = vector.shape_cast %160 : vector<16x8xbf16> to vector<2x8x8xbf16>
    %162 = vector.extract_strided_slice %130 {offsets = [0, 8], sizes = [16, 8], strides = [1, 1]} : vector<16x32xf32> to vector<16x8xf32>
    %163 = arith.truncf %162 : vector<16x8xf32> to vector<16x8xbf16>
    %164 = vector.shape_cast %163 : vector<16x8xbf16> to vector<2x8x8xbf16>
    %165 = vector.extract_strided_slice %131 {offsets = [0, 8], sizes = [16, 8], strides = [1, 1]} : vector<16x32xf32> to vector<16x8xf32>
    %166 = arith.truncf %165 : vector<16x8xf32> to vector<16x8xbf16>
    %167 = vector.shape_cast %166 : vector<16x8xbf16> to vector<2x8x8xbf16>
    "tpu.trace_start"() <{level = 10 : i32, message = "bqd,bkd->bqk"}> : () -> ()
    %cst_106 = arith.constant dense<0.000000e+00> : vector<2x8x8xf32>
    %168 = tpu.matmul %161, %164, %cst_106 {dimension_numbers = #tpu.dot_dimension_numbers<[2], [2], [1], [1], [0, 0, 0, 1, 1, 1], [0], [0]>} : vector<2x8x8xbf16>, vector<2x8x8xbf16>, vector<2x8x8xf32> -> vector<2x8x8xf32>
    "tpu.trace_stop"() : () -> ()
    %cst_107 = arith.constant dense<0xFF800000> : vector<2x8xf32>
    %169 = vector.multi_reduction <maximumf>, %168, %cst_107 [2] : vector<2x8x8xf32> to vector<2x8xf32>
    %170 = vector.shape_cast %169 : vector<2x8xf32> to vector<2x8x1xf32>
    %171 = vector.broadcast %170 : vector<2x8x1xf32> to vector<2x8x8xf32>
    %172 = arith.subf %168, %171 : vector<2x8x8xf32>
    %173 = math.exp %172 : vector<2x8x8xf32>
    %cst_108 = arith.constant dense<0.000000e+00> : vector<2x8xf32>
    %174 = vector.multi_reduction <add>, %173, %cst_108 [2] : vector<2x8x8xf32> to vector<2x8xf32>
    %175 = vector.shape_cast %174 : vector<2x8xf32> to vector<2x8x1xf32>
    %176 = tpu.reciprocal %175 {approx = true} : vector<2x8x1xf32> -> vector<2x8x1xf32>
    %177 = vector.broadcast %176 : vector<2x8x1xf32> to vector<2x8x8xf32>
    %178 = arith.mulf %173, %177 : vector<2x8x8xf32>
    %179 = arith.truncf %178 : vector<2x8x8xf32> to vector<2x8x8xbf16>
    "tpu.trace_start"() <{level = 10 : i32, message = "bqk,bkd->bqd"}> : () -> ()
    %cst_109 = arith.constant dense<0.000000e+00> : vector<2x8x8xf32>
    %180 = tpu.matmul %179, %167, %cst_109 {dimension_numbers = #tpu.dot_dimension_numbers<[2], [1], [1], [2], [0, 0, 0, 1, 1, 2], [0], [0]>} : vector<2x8x8xbf16>, vector<2x8x8xbf16>, vector<2x8x8xf32> -> vector<2x8x8xf32>
    "tpu.trace_stop"() : () -> ()
    %181 = vector.shape_cast %180 : vector<2x8x8xf32> to vector<16x8xf32>
    %182 = arith.truncf %181 : vector<16x8xf32> to vector<16x8xbf16>
    %c0_110 = arith.constant 0 : index
    %c1_111 = arith.constant 1 : index
    %c0_112 = arith.constant 0 : index
    %c0_113 = arith.constant 0 : index
    %183 = vector.load %arg7[%c0_110, %c1_111, %c0_112, %c0_113] : memref<2x4x8x32xbf16, #tpu.memory_space<vmem>>, vector<1x1x8x32xbf16>
    %184 = vector.shape_cast %183 : vector<1x1x8x32xbf16> to vector<8x32xbf16>
    %cst_114 = arith.constant dense<0.000000e+00> : vector<16x32xf32>
    %185 = tpu.matmul %182, %184, %cst_114 {dimension_numbers = #tpu.dot_dimension_numbers<[1], [0], [0], [1], [0, 0, 1, 1], [], []>} : vector<16x8xbf16>, vector<8x32xbf16>, vector<16x32xf32> -> vector<16x32xf32>
    %186 = arith.addf %158, %185 : vector<16x32xf32>
    %187 = vector.extract_strided_slice %129 {offsets = [0, 16], sizes = [16, 8], strides = [1, 1]} : vector<16x32xf32> to vector<16x8xf32>
    %188 = arith.truncf %187 : vector<16x8xf32> to vector<16x8xbf16>
    %189 = vector.shape_cast %188 : vector<16x8xbf16> to vector<2x8x8xbf16>
    %190 = vector.extract_strided_slice %130 {offsets = [0, 16], sizes = [16, 8], strides = [1, 1]} : vector<16x32xf32> to vector<16x8xf32>
    %191 = arith.truncf %190 : vector<16x8xf32> to vector<16x8xbf16>
    %192 = vector.shape_cast %191 : vector<16x8xbf16> to vector<2x8x8xbf16>
    %193 = vector.extract_strided_slice %131 {offsets = [0, 16], sizes = [16, 8], strides = [1, 1]} : vector<16x32xf32> to vector<16x8xf32>
    %194 = arith.truncf %193 : vector<16x8xf32> to vector<16x8xbf16>
    %195 = vector.shape_cast %194 : vector<16x8xbf16> to vector<2x8x8xbf16>
    "tpu.trace_start"() <{level = 10 : i32, message = "bqd,bkd->bqk"}> : () -> ()
    %cst_115 = arith.constant dense<0.000000e+00> : vector<2x8x8xf32>
    %196 = tpu.matmul %189, %192, %cst_115 {dimension_numbers = #tpu.dot_dimension_numbers<[2], [2], [1], [1], [0, 0, 0, 1, 1, 1], [0], [0]>} : vector<2x8x8xbf16>, vector<2x8x8xbf16>, vector<2x8x8xf32> -> vector<2x8x8xf32>
    "tpu.trace_stop"() : () -> ()
    %cst_116 = arith.constant dense<0xFF800000> : vector<2x8xf32>
    %197 = vector.multi_reduction <maximumf>, %196, %cst_116 [2] : vector<2x8x8xf32> to vector<2x8xf32>
    %198 = vector.shape_cast %197 : vector<2x8xf32> to vector<2x8x1xf32>
    %199 = vector.broadcast %198 : vector<2x8x1xf32> to vector<2x8x8xf32>
    %200 = arith.subf %196, %199 : vector<2x8x8xf32>
    %201 = math.exp %200 : vector<2x8x8xf32>
    %cst_117 = arith.constant dense<0.000000e+00> : vector<2x8xf32>
    %202 = vector.multi_reduction <add>, %201, %cst_117 [2] : vector<2x8x8xf32> to vector<2x8xf32>
    %203 = vector.shape_cast %202 : vector<2x8xf32> to vector<2x8x1xf32>
    %204 = tpu.reciprocal %203 {approx = true} : vector<2x8x1xf32> -> vector<2x8x1xf32>
    %205 = vector.broadcast %204 : vector<2x8x1xf32> to vector<2x8x8xf32>
    %206 = arith.mulf %201, %205 : vector<2x8x8xf32>
    %207 = arith.truncf %206 : vector<2x8x8xf32> to vector<2x8x8xbf16>
    "tpu.trace_start"() <{level = 10 : i32, message = "bqk,bkd->bqd"}> : () -> ()
    %cst_118 = arith.constant dense<0.000000e+00> : vector<2x8x8xf32>
    %208 = tpu.matmul %207, %195, %cst_118 {dimension_numbers = #tpu.dot_dimension_numbers<[2], [1], [1], [2], [0, 0, 0, 1, 1, 2], [0], [0]>} : vector<2x8x8xbf16>, vector<2x8x8xbf16>, vector<2x8x8xf32> -> vector<2x8x8xf32>
    "tpu.trace_stop"() : () -> ()
    %209 = vector.shape_cast %208 : vector<2x8x8xf32> to vector<16x8xf32>
    %210 = arith.truncf %209 : vector<16x8xf32> to vector<16x8xbf16>
    %c0_119 = arith.constant 0 : index
    %c2_120 = arith.constant 2 : index
    %c0_121 = arith.constant 0 : index
    %c0_122 = arith.constant 0 : index
    %211 = vector.load %arg7[%c0_119, %c2_120, %c0_121, %c0_122] : memref<2x4x8x32xbf16, #tpu.memory_space<vmem>>, vector<1x1x8x32xbf16>
    %212 = vector.shape_cast %211 : vector<1x1x8x32xbf16> to vector<8x32xbf16>
    %cst_123 = arith.constant dense<0.000000e+00> : vector<16x32xf32>
    %213 = tpu.matmul %210, %212, %cst_123 {dimension_numbers = #tpu.dot_dimension_numbers<[1], [0], [0], [1], [0, 0, 1, 1], [], []>} : vector<16x8xbf16>, vector<8x32xbf16>, vector<16x32xf32> -> vector<16x32xf32>
    %214 = arith.addf %186, %213 : vector<16x32xf32>
    %215 = vector.extract_strided_slice %129 {offsets = [0, 24], sizes = [16, 8], strides = [1, 1]} : vector<16x32xf32> to vector<16x8xf32>
    %216 = arith.truncf %215 : vector<16x8xf32> to vector<16x8xbf16>
    %217 = vector.shape_cast %216 : vector<16x8xbf16> to vector<2x8x8xbf16>
    %218 = vector.extract_strided_slice %130 {offsets = [0, 24], sizes = [16, 8], strides = [1, 1]} : vector<16x32xf32> to vector<16x8xf32>
    %219 = arith.truncf %218 : vector<16x8xf32> to vector<16x8xbf16>
    %220 = vector.shape_cast %219 : vector<16x8xbf16> to vector<2x8x8xbf16>
    %221 = vector.extract_strided_slice %131 {offsets = [0, 24], sizes = [16, 8], strides = [1, 1]} : vector<16x32xf32> to vector<16x8xf32>
    %222 = arith.truncf %221 : vector<16x8xf32> to vector<16x8xbf16>
    %223 = vector.shape_cast %222 : vector<16x8xbf16> to vector<2x8x8xbf16>
    "tpu.trace_start"() <{level = 10 : i32, message = "bqd,bkd->bqk"}> : () -> ()
    %cst_124 = arith.constant dense<0.000000e+00> : vector<2x8x8xf32>
    %224 = tpu.matmul %217, %220, %cst_124 {dimension_numbers = #tpu.dot_dimension_numbers<[2], [2], [1], [1], [0, 0, 0, 1, 1, 1], [0], [0]>} : vector<2x8x8xbf16>, vector<2x8x8xbf16>, vector<2x8x8xf32> -> vector<2x8x8xf32>
    "tpu.trace_stop"() : () -> ()
    %cst_125 = arith.constant dense<0xFF800000> : vector<2x8xf32>
    %225 = vector.multi_reduction <maximumf>, %224, %cst_125 [2] : vector<2x8x8xf32> to vector<2x8xf32>
    %226 = vector.shape_cast %225 : vector<2x8xf32> to vector<2x8x1xf32>
    %227 = vector.broadcast %226 : vector<2x8x1xf32> to vector<2x8x8xf32>
    %228 = arith.subf %224, %227 : vector<2x8x8xf32>
    %229 = math.exp %228 : vector<2x8x8xf32>
    %cst_126 = arith.constant dense<0.000000e+00> : vector<2x8xf32>
    %230 = vector.multi_reduction <add>, %229, %cst_126 [2] : vector<2x8x8xf32> to vector<2x8xf32>
    %231 = vector.shape_cast %230 : vector<2x8xf32> to vector<2x8x1xf32>
    %232 = tpu.reciprocal %231 {approx = true} : vector<2x8x1xf32> -> vector<2x8x1xf32>
    %233 = vector.broadcast %232 : vector<2x8x1xf32> to vector<2x8x8xf32>
    %234 = arith.mulf %229, %233 : vector<2x8x8xf32>
    %235 = arith.truncf %234 : vector<2x8x8xf32> to vector<2x8x8xbf16>
    "tpu.trace_start"() <{level = 10 : i32, message = "bqk,bkd->bqd"}> : () -> ()
    %cst_127 = arith.constant dense<0.000000e+00> : vector<2x8x8xf32>
    %236 = tpu.matmul %235, %223, %cst_127 {dimension_numbers = #tpu.dot_dimension_numbers<[2], [1], [1], [2], [0, 0, 0, 1, 1, 2], [0], [0]>} : vector<2x8x8xbf16>, vector<2x8x8xbf16>, vector<2x8x8xf32> -> vector<2x8x8xf32>
    "tpu.trace_stop"() : () -> ()
    %237 = vector.shape_cast %236 : vector<2x8x8xf32> to vector<16x8xf32>
    %238 = arith.truncf %237 : vector<16x8xf32> to vector<16x8xbf16>
    %c0_128 = arith.constant 0 : index
    %c3_129 = arith.constant 3 : index
    %c0_130 = arith.constant 0 : index
    %c0_131 = arith.constant 0 : index
    %239 = vector.load %arg7[%c0_128, %c3_129, %c0_130, %c0_131] : memref<2x4x8x32xbf16, #tpu.memory_space<vmem>>, vector<1x1x8x32xbf16>
    %240 = vector.shape_cast %239 : vector<1x1x8x32xbf16> to vector<8x32xbf16>
    %cst_132 = arith.constant dense<0.000000e+00> : vector<16x32xf32>
    %241 = tpu.matmul %238, %240, %cst_132 {dimension_numbers = #tpu.dot_dimension_numbers<[1], [0], [0], [1], [0, 0, 1, 1], [], []>} : vector<16x8xbf16>, vector<8x32xbf16>, vector<16x32xf32> -> vector<16x32xf32>
    %242 = arith.addf %214, %241 : vector<16x32xf32>
    %c0_133 = arith.constant 0 : index
    %c0_134 = arith.constant 0 : index
    %c0_135 = arith.constant 0 : index
    %243 = vector.load %arg8[%c0_133, %c0_134, %c0_135] : memref<2x1x32xf32, #tpu.memory_space<vmem>>, vector<1x1x32xf32>
    %244 = vector.shape_cast %243 : vector<1x1x32xf32> to vector<1x32xf32>
    %245 = vector.broadcast %244 : vector<1x32xf32> to vector<16x32xf32>
    %246 = arith.addf %242, %245 : vector<16x32xf32>
    %247 = arith.addf %120, %246 : vector<16x32xf32>
    %c0_136 = arith.constant 0 : index
    %c0_137 = arith.constant 0 : index
    %c0_138 = arith.constant 0 : index
    %248 = vector.load %arg9[%c0_136, %c0_137, %c0_138] : memref<2x1x32xf32, #tpu.memory_space<vmem>>, vector<1x1x32xf32>
    %249 = vector.shape_cast %248 : vector<1x1x32xf32> to vector<1x32xf32>
    %c0_139 = arith.constant 0 : index
    %c0_140 = arith.constant 0 : index
    %c0_141 = arith.constant 0 : index
    %250 = vector.load %arg10[%c0_139, %c0_140, %c0_141] : memref<2x1x32xf32, #tpu.memory_space<vmem>>, vector<1x1x32xf32>
    %251 = vector.shape_cast %250 : vector<1x1x32xf32> to vector<1x32xf32>
    %cst_142 = arith.constant dense<0.000000e+00> : vector<16xf32>
    %252 = vector.multi_reduction <add>, %247, %cst_142 [1] : vector<16x32xf32> to vector<16xf32>
    %253 = vector.shape_cast %252 : vector<16xf32> to vector<16x1xf32>
    %cst_143 = arith.constant 3.200000e+01 : f32
    %254 = vector.broadcast %cst_143 : f32 to vector<16x1xf32>
    %255 = arith.divf %253, %254 : vector<16x1xf32>
    %256 = vector.broadcast %255 : vector<16x1xf32> to vector<16x32xf32>
    %257 = arith.subf %247, %256 : vector<16x32xf32>
    %258 = arith.mulf %257, %257 : vector<16x32xf32>
    %cst_144 = arith.constant dense<0.000000e+00> : vector<16xf32>
    %259 = vector.multi_reduction <add>, %258, %cst_144 [1] : vector<16x32xf32> to vector<16xf32>
    %260 = vector.shape_cast %259 : vector<16xf32> to vector<16x1xf32>
    %cst_145 = arith.constant 3.200000e+01 : f32
    %261 = vector.broadcast %cst_145 : f32 to vector<16x1xf32>
    %262 = arith.divf %260, %261 : vector<16x1xf32>
    %263 = vector.broadcast %255 : vector<16x1xf32> to vector<16x32xf32>
    %264 = arith.subf %247, %263 : vector<16x32xf32>
    %cst_146 = arith.constant 9.99999996E-13 : f32
    %265 = vector.broadcast %cst_146 : f32 to vector<16x1xf32>
    %266 = arith.addf %262, %265 : vector<16x1xf32>
    %267 = math.rsqrt %266 : vector<16x1xf32>
    %268 = vector.broadcast %267 : vector<16x1xf32> to vector<16x32xf32>
    %269 = arith.mulf %264, %268 : vector<16x32xf32>
    %270 = vector.broadcast %249 : vector<1x32xf32> to vector<16x32xf32>
    %271 = arith.mulf %269, %270 : vector<16x32xf32>
    %272 = vector.broadcast %251 : vector<1x32xf32> to vector<16x32xf32>
    %273 = arith.addf %271, %272 : vector<16x32xf32>
    %274 = arith.truncf %273 : vector<16x32xf32> to vector<16x32xbf16>
    %c0_147 = arith.constant 0 : index
    %c0_148 = arith.constant 0 : index
    %c0_149 = arith.constant 0 : index
    %275 = vector.load %arg11[%c0_147, %c0_148, %c0_149] : memref<2x32x64xbf16, #tpu.memory_space<vmem>>, vector<1x32x64xbf16>
    %276 = vector.shape_cast %275 : vector<1x32x64xbf16> to vector<32x64xbf16>
    %cst_150 = arith.constant dense<0.000000e+00> : vector<16x64xf32>
    %277 = tpu.matmul %274, %276, %cst_150 {dimension_numbers = #tpu.dot_dimension_numbers<[1], [0], [0], [1], [0, 0, 1, 1], [], []>} : vector<16x32xbf16>, vector<32x64xbf16>, vector<16x64xf32> -> vector<16x64xf32>
    %c0_151 = arith.constant 0 : index
    %c0_152 = arith.constant 0 : index
    %c0_153 = arith.constant 0 : index
    %278 = vector.load %arg12[%c0_151, %c0_152, %c0_153] : memref<2x1x64xf32, #tpu.memory_space<vmem>>, vector<1x1x64xf32>
    %279 = vector.shape_cast %278 : vector<1x1x64xf32> to vector<1x64xf32>
    %280 = vector.broadcast %279 : vector<1x64xf32> to vector<16x64xf32>
    %281 = arith.addf %277, %280 : vector<16x64xf32>
    %282 = arith.mulf %281, %281 : vector<16x64xf32>
    %283 = arith.mulf %281, %282 : vector<16x64xf32>
    %cst_154 = arith.constant 4.471500e-02 : f32
    %284 = vector.broadcast %cst_154 : f32 to vector<16x64xf32>
    %285 = arith.mulf %284, %283 : vector<16x64xf32>
    %286 = arith.addf %281, %285 : vector<16x64xf32>
    %cst_155 = arith.constant 0.797884583 : f32
    %287 = vector.broadcast %cst_155 : f32 to vector<16x64xf32>
    %288 = arith.mulf %287, %286 : vector<16x64xf32>
    %289 = math.tanh %288 : vector<16x64xf32>
    %cst_156 = arith.constant 1.000000e+00 : f32
    %290 = vector.broadcast %cst_156 : f32 to vector<16x64xf32>
    %291 = arith.addf %290, %289 : vector<16x64xf32>
    %cst_157 = arith.constant 5.000000e-01 : f32
    %292 = vector.broadcast %cst_157 : f32 to vector<16x64xf32>
    %293 = arith.mulf %292, %291 : vector<16x64xf32>
    %294 = arith.mulf %281, %293 : vector<16x64xf32>
    %295 = arith.truncf %294 : vector<16x64xf32> to vector<16x64xbf16>
    %c0_158 = arith.constant 0 : index
    %c0_159 = arith.constant 0 : index
    %c0_160 = arith.constant 0 : index
    %296 = vector.load %arg13[%c0_158, %c0_159, %c0_160] : memref<2x64x32xbf16, #tpu.memory_space<vmem>>, vector<1x64x32xbf16>
    %297 = vector.shape_cast %296 : vector<1x64x32xbf16> to vector<64x32xbf16>
    %cst_161 = arith.constant dense<0.000000e+00> : vector<16x32xf32>
    %298 = tpu.matmul %295, %297, %cst_161 {dimension_numbers = #tpu.dot_dimension_numbers<[1], [0], [0], [1], [0, 0, 1, 1], [], []>} : vector<16x64xbf16>, vector<64x32xbf16>, vector<16x32xf32> -> vector<16x32xf32>
    %c0_162 = arith.constant 0 : index
    %c0_163 = arith.constant 0 : index
    %c0_164 = arith.constant 0 : index
    %299 = vector.load %arg14[%c0_162, %c0_163, %c0_164] : memref<2x1x32xf32, #tpu.memory_space<vmem>>, vector<1x1x32xf32>
    %300 = vector.shape_cast %299 : vector<1x1x32xf32> to vector<1x32xf32>
    %301 = vector.broadcast %300 : vector<1x32xf32> to vector<16x32xf32>
    %302 = arith.addf %298, %301 : vector<16x32xf32>
    %303 = arith.addf %273, %302 : vector<16x32xf32>
    %c0_165 = arith.constant 0 : index
    %c0_166 = arith.constant 0 : index
    %c0_167 = arith.constant 0 : index
    %304 = vector.load %arg15[%c0_165, %c0_166, %c0_167] : memref<2x1x32xf32, #tpu.memory_space<vmem>>, vector<1x1x32xf32>
    %305 = vector.shape_cast %304 : vector<1x1x32xf32> to vector<1x32xf32>
    %c0_168 = arith.constant 0 : index
    %c0_169 = arith.constant 0 : index
    %c0_170 = arith.constant 0 : index
    %306 = vector.load %arg16[%c0_168, %c0_169, %c0_170] : memref<2x1x32xf32, #tpu.memory_space<vmem>>, vector<1x1x32xf32>
    %307 = vector.shape_cast %306 : vector<1x1x32xf32> to vector<1x32xf32>
    %cst_171 = arith.constant dense<0.000000e+00> : vector<16xf32>
    %308 = vector.multi_reduction <add>, %303, %cst_171 [1] : vector<16x32xf32> to vector<16xf32>
    %309 = vector.shape_cast %308 : vector<16xf32> to vector<16x1xf32>
    %cst_172 = arith.constant 3.200000e+01 : f32
    %310 = vector.broadcast %cst_172 : f32 to vector<16x1xf32>
    %311 = arith.divf %309, %310 : vector<16x1xf32>
    %312 = vector.broadcast %311 : vector<16x1xf32> to vector<16x32xf32>
    %313 = arith.subf %303, %312 : vector<16x32xf32>
    %314 = arith.mulf %313, %313 : vector<16x32xf32>
    %cst_173 = arith.constant dense<0.000000e+00> : vector<16xf32>
    %315 = vector.multi_reduction <add>, %314, %cst_173 [1] : vector<16x32xf32> to vector<16xf32>
    %316 = vector.shape_cast %315 : vector<16xf32> to vector<16x1xf32>
    %cst_174 = arith.constant 3.200000e+01 : f32
    %317 = vector.broadcast %cst_174 : f32 to vector<16x1xf32>
    %318 = arith.divf %316, %317 : vector<16x1xf32>
    %319 = vector.broadcast %311 : vector<16x1xf32> to vector<16x32xf32>
    %320 = arith.subf %303, %319 : vector<16x32xf32>
    %cst_175 = arith.constant 9.99999996E-13 : f32
    %321 = vector.broadcast %cst_175 : f32 to vector<16x1xf32>
    %322 = arith.addf %318, %321 : vector<16x1xf32>
    %323 = math.rsqrt %322 : vector<16x1xf32>
    %324 = vector.broadcast %323 : vector<16x1xf32> to vector<16x32xf32>
    %325 = arith.mulf %320, %324 : vector<16x32xf32>
    %326 = vector.broadcast %305 : vector<1x32xf32> to vector<16x32xf32>
    %327 = arith.mulf %325, %326 : vector<16x32xf32>
    %328 = vector.broadcast %307 : vector<1x32xf32> to vector<16x32xf32>
    %329 = arith.addf %327, %328 : vector<16x32xf32>
    %330 = arith.truncf %329 : vector<16x32xf32> to vector<16x32xbf16>
    %c1_176 = arith.constant 1 : index
    %c0_177 = arith.constant 0 : index
    %c0_178 = arith.constant 0 : index
    %331 = vector.load %arg5[%c1_176, %c0_177, %c0_178] : memref<2x32x96xbf16, #tpu.memory_space<vmem>>, vector<1x32x96xbf16>
    %332 = vector.shape_cast %331 : vector<1x32x96xbf16> to vector<32x96xbf16>
    %cst_179 = arith.constant dense<0.000000e+00> : vector<16x96xf32>
    %333 = tpu.matmul %330, %332, %cst_179 {dimension_numbers = #tpu.dot_dimension_numbers<[1], [0], [0], [1], [0, 0, 1, 1], [], []>} : vector<16x32xbf16>, vector<32x96xbf16>, vector<16x96xf32> -> vector<16x96xf32>
    %c1_180 = arith.constant 1 : index
    %c0_181 = arith.constant 0 : index
    %c0_182 = arith.constant 0 : index
    %334 = vector.load %arg6[%c1_180, %c0_181, %c0_182] : memref<2x1x96xf32, #tpu.memory_space<vmem>>, vector<1x1x96xf32>
    %335 = vector.shape_cast %334 : vector<1x1x96xf32> to vector<1x96xf32>
    %336 = vector.broadcast %335 : vector<1x96xf32> to vector<16x96xf32>
    %337 = arith.addf %333, %336 : vector<16x96xf32>
    %338 = vector.extract_strided_slice %337 {offsets = [0, 0], sizes = [16, 32], strides = [1, 1]} : vector<16x96xf32> to vector<16x32xf32>
    %339 = vector.extract_strided_slice %337 {offsets = [0, 32], sizes = [16, 32], strides = [1, 1]} : vector<16x96xf32> to vector<16x32xf32>
    %340 = vector.extract_strided_slice %337 {offsets = [0, 64], sizes = [16, 32], strides = [1, 1]} : vector<16x96xf32> to vector<16x32xf32>
    %341 = vector.extract_strided_slice %338 {offsets = [0, 0], sizes = [16, 8], strides = [1, 1]} : vector<16x32xf32> to vector<16x8xf32>
    %342 = arith.truncf %341 : vector<16x8xf32> to vector<16x8xbf16>
    %343 = vector.shape_cast %342 : vector<16x8xbf16> to vector<2x8x8xbf16>
    %344 = vector.extract_strided_slice %339 {offsets = [0, 0], sizes = [16, 8], strides = [1, 1]} : vector<16x32xf32> to vector<16x8xf32>
    %345 = arith.truncf %344 : vector<16x8xf32> to vector<16x8xbf16>
    %346 = vector.shape_cast %345 : vector<16x8xbf16> to vector<2x8x8xbf16>
    %347 = vector.extract_strided_slice %340 {offsets = [0, 0], sizes = [16, 8], strides = [1, 1]} : vector<16x32xf32> to vector<16x8xf32>
    %348 = arith.truncf %347 : vector<16x8xf32> to vector<16x8xbf16>
    %349 = vector.shape_cast %348 : vector<16x8xbf16> to vector<2x8x8xbf16>
    "tpu.trace_start"() <{level = 10 : i32, message = "bqd,bkd->bqk"}> : () -> ()
    %cst_183 = arith.constant dense<0.000000e+00> : vector<2x8x8xf32>
    %350 = tpu.matmul %343, %346, %cst_183 {dimension_numbers = #tpu.dot_dimension_numbers<[2], [2], [1], [1], [0, 0, 0, 1, 1, 1], [0], [0]>} : vector<2x8x8xbf16>, vector<2x8x8xbf16>, vector<2x8x8xf32> -> vector<2x8x8xf32>
    "tpu.trace_stop"() : () -> ()
    %cst_184 = arith.constant dense<0xFF800000> : vector<2x8xf32>
    %351 = vector.multi_reduction <maximumf>, %350, %cst_184 [2] : vector<2x8x8xf32> to vector<2x8xf32>
    %352 = vector.shape_cast %351 : vector<2x8xf32> to vector<2x8x1xf32>
    %353 = vector.broadcast %352 : vector<2x8x1xf32> to vector<2x8x8xf32>
    %354 = arith.subf %350, %353 : vector<2x8x8xf32>
    %355 = math.exp %354 : vector<2x8x8xf32>
    %cst_185 = arith.constant dense<0.000000e+00> : vector<2x8xf32>
    %356 = vector.multi_reduction <add>, %355, %cst_185 [2] : vector<2x8x8xf32> to vector<2x8xf32>
    %357 = vector.shape_cast %356 : vector<2x8xf32> to vector<2x8x1xf32>
    %358 = tpu.reciprocal %357 {approx = true} : vector<2x8x1xf32> -> vector<2x8x1xf32>
    %359 = vector.broadcast %358 : vector<2x8x1xf32> to vector<2x8x8xf32>
    %360 = arith.mulf %355, %359 : vector<2x8x8xf32>
    %361 = arith.truncf %360 : vector<2x8x8xf32> to vector<2x8x8xbf16>
    "tpu.trace_start"() <{level = 10 : i32, message = "bqk,bkd->bqd"}> : () -> ()
    %cst_186 = arith.constant dense<0.000000e+00> : vector<2x8x8xf32>
    %362 = tpu.matmul %361, %349, %cst_186 {dimension_numbers = #tpu.dot_dimension_numbers<[2], [1], [1], [2], [0, 0, 0, 1, 1, 2], [0], [0]>} : vector<2x8x8xbf16>, vector<2x8x8xbf16>, vector<2x8x8xf32> -> vector<2x8x8xf32>
    "tpu.trace_stop"() : () -> ()
    %363 = vector.shape_cast %362 : vector<2x8x8xf32> to vector<16x8xf32>
    %364 = arith.truncf %363 : vector<16x8xf32> to vector<16x8xbf16>
    %c1_187 = arith.constant 1 : index
    %c0_188 = arith.constant 0 : index
    %c0_189 = arith.constant 0 : index
    %c0_190 = arith.constant 0 : index
    %365 = vector.load %arg7[%c1_187, %c0_188, %c0_189, %c0_190] : memref<2x4x8x32xbf16, #tpu.memory_space<vmem>>, vector<1x1x8x32xbf16>
    %366 = vector.shape_cast %365 : vector<1x1x8x32xbf16> to vector<8x32xbf16>
    %cst_191 = arith.constant dense<0.000000e+00> : vector<16x32xf32>
    %367 = tpu.matmul %364, %366, %cst_191 {dimension_numbers = #tpu.dot_dimension_numbers<[1], [0], [0], [1], [0, 0, 1, 1], [], []>} : vector<16x8xbf16>, vector<8x32xbf16>, vector<16x32xf32> -> vector<16x32xf32>
    %368 = vector.extract_strided_slice %338 {offsets = [0, 8], sizes = [16, 8], strides = [1, 1]} : vector<16x32xf32> to vector<16x8xf32>
    %369 = arith.truncf %368 : vector<16x8xf32> to vector<16x8xbf16>
    %370 = vector.shape_cast %369 : vector<16x8xbf16> to vector<2x8x8xbf16>
    %371 = vector.extract_strided_slice %339 {offsets = [0, 8], sizes = [16, 8], strides = [1, 1]} : vector<16x32xf32> to vector<16x8xf32>
    %372 = arith.truncf %371 : vector<16x8xf32> to vector<16x8xbf16>
    %373 = vector.shape_cast %372 : vector<16x8xbf16> to vector<2x8x8xbf16>
    %374 = vector.extract_strided_slice %340 {offsets = [0, 8], sizes = [16, 8], strides = [1, 1]} : vector<16x32xf32> to vector<16x8xf32>
    %375 = arith.truncf %374 : vector<16x8xf32> to vector<16x8xbf16>
    %376 = vector.shape_cast %375 : vector<16x8xbf16> to vector<2x8x8xbf16>
    "tpu.trace_start"() <{level = 10 : i32, message = "bqd,bkd->bqk"}> : () -> ()
    %cst_192 = arith.constant dense<0.000000e+00> : vector<2x8x8xf32>
    %377 = tpu.matmul %370, %373, %cst_192 {dimension_numbers = #tpu.dot_dimension_numbers<[2], [2], [1], [1], [0, 0, 0, 1, 1, 1], [0], [0]>} : vector<2x8x8xbf16>, vector<2x8x8xbf16>, vector<2x8x8xf32> -> vector<2x8x8xf32>
    "tpu.trace_stop"() : () -> ()
    %cst_193 = arith.constant dense<0xFF800000> : vector<2x8xf32>
    %378 = vector.multi_reduction <maximumf>, %377, %cst_193 [2] : vector<2x8x8xf32> to vector<2x8xf32>
    %379 = vector.shape_cast %378 : vector<2x8xf32> to vector<2x8x1xf32>
    %380 = vector.broadcast %379 : vector<2x8x1xf32> to vector<2x8x8xf32>
    %381 = arith.subf %377, %380 : vector<2x8x8xf32>
    %382 = math.exp %381 : vector<2x8x8xf32>
    %cst_194 = arith.constant dense<0.000000e+00> : vector<2x8xf32>
    %383 = vector.multi_reduction <add>, %382, %cst_194 [2] : vector<2x8x8xf32> to vector<2x8xf32>
    %384 = vector.shape_cast %383 : vector<2x8xf32> to vector<2x8x1xf32>
    %385 = tpu.reciprocal %384 {approx = true} : vector<2x8x1xf32> -> vector<2x8x1xf32>
    %386 = vector.broadcast %385 : vector<2x8x1xf32> to vector<2x8x8xf32>
    %387 = arith.mulf %382, %386 : vector<2x8x8xf32>
    %388 = arith.truncf %387 : vector<2x8x8xf32> to vector<2x8x8xbf16>
    "tpu.trace_start"() <{level = 10 : i32, message = "bqk,bkd->bqd"}> : () -> ()
    %cst_195 = arith.constant dense<0.000000e+00> : vector<2x8x8xf32>
    %389 = tpu.matmul %388, %376, %cst_195 {dimension_numbers = #tpu.dot_dimension_numbers<[2], [1], [1], [2], [0, 0, 0, 1, 1, 2], [0], [0]>} : vector<2x8x8xbf16>, vector<2x8x8xbf16>, vector<2x8x8xf32> -> vector<2x8x8xf32>
    "tpu.trace_stop"() : () -> ()
    %390 = vector.shape_cast %389 : vector<2x8x8xf32> to vector<16x8xf32>
    %391 = arith.truncf %390 : vector<16x8xf32> to vector<16x8xbf16>
    %c1_196 = arith.constant 1 : index
    %c1_197 = arith.constant 1 : index
    %c0_198 = arith.constant 0 : index
    %c0_199 = arith.constant 0 : index
    %392 = vector.load %arg7[%c1_196, %c1_197, %c0_198, %c0_199] : memref<2x4x8x32xbf16, #tpu.memory_space<vmem>>, vector<1x1x8x32xbf16>
    %393 = vector.shape_cast %392 : vector<1x1x8x32xbf16> to vector<8x32xbf16>
    %cst_200 = arith.constant dense<0.000000e+00> : vector<16x32xf32>
    %394 = tpu.matmul %391, %393, %cst_200 {dimension_numbers = #tpu.dot_dimension_numbers<[1], [0], [0], [1], [0, 0, 1, 1], [], []>} : vector<16x8xbf16>, vector<8x32xbf16>, vector<16x32xf32> -> vector<16x32xf32>
    %395 = arith.addf %367, %394 : vector<16x32xf32>
    %396 = vector.extract_strided_slice %338 {offsets = [0, 16], sizes = [16, 8], strides = [1, 1]} : vector<16x32xf32> to vector<16x8xf32>
    %397 = arith.truncf %396 : vector<16x8xf32> to vector<16x8xbf16>
    %398 = vector.shape_cast %397 : vector<16x8xbf16> to vector<2x8x8xbf16>
    %399 = vector.extract_strided_slice %339 {offsets = [0, 16], sizes = [16, 8], strides = [1, 1]} : vector<16x32xf32> to vector<16x8xf32>
    %400 = arith.truncf %399 : vector<16x8xf32> to vector<16x8xbf16>
    %401 = vector.shape_cast %400 : vector<16x8xbf16> to vector<2x8x8xbf16>
    %402 = vector.extract_strided_slice %340 {offsets = [0, 16], sizes = [16, 8], strides = [1, 1]} : vector<16x32xf32> to vector<16x8xf32>
    %403 = arith.truncf %402 : vector<16x8xf32> to vector<16x8xbf16>
    %404 = vector.shape_cast %403 : vector<16x8xbf16> to vector<2x8x8xbf16>
    "tpu.trace_start"() <{level = 10 : i32, message = "bqd,bkd->bqk"}> : () -> ()
    %cst_201 = arith.constant dense<0.000000e+00> : vector<2x8x8xf32>
    %405 = tpu.matmul %398, %401, %cst_201 {dimension_numbers = #tpu.dot_dimension_numbers<[2], [2], [1], [1], [0, 0, 0, 1, 1, 1], [0], [0]>} : vector<2x8x8xbf16>, vector<2x8x8xbf16>, vector<2x8x8xf32> -> vector<2x8x8xf32>
    "tpu.trace_stop"() : () -> ()
    %cst_202 = arith.constant dense<0xFF800000> : vector<2x8xf32>
    %406 = vector.multi_reduction <maximumf>, %405, %cst_202 [2] : vector<2x8x8xf32> to vector<2x8xf32>
    %407 = vector.shape_cast %406 : vector<2x8xf32> to vector<2x8x1xf32>
    %408 = vector.broadcast %407 : vector<2x8x1xf32> to vector<2x8x8xf32>
    %409 = arith.subf %405, %408 : vector<2x8x8xf32>
    %410 = math.exp %409 : vector<2x8x8xf32>
    %cst_203 = arith.constant dense<0.000000e+00> : vector<2x8xf32>
    %411 = vector.multi_reduction <add>, %410, %cst_203 [2] : vector<2x8x8xf32> to vector<2x8xf32>
    %412 = vector.shape_cast %411 : vector<2x8xf32> to vector<2x8x1xf32>
    %413 = tpu.reciprocal %412 {approx = true} : vector<2x8x1xf32> -> vector<2x8x1xf32>
    %414 = vector.broadcast %413 : vector<2x8x1xf32> to vector<2x8x8xf32>
    %415 = arith.mulf %410, %414 : vector<2x8x8xf32>
    %416 = arith.truncf %415 : vector<2x8x8xf32> to vector<2x8x8xbf16>
    "tpu.trace_start"() <{level = 10 : i32, message = "bqk,bkd->bqd"}> : () -> ()
    %cst_204 = arith.constant dense<0.000000e+00> : vector<2x8x8xf32>
    %417 = tpu.matmul %416, %404, %cst_204 {dimension_numbers = #tpu.dot_dimension_numbers<[2], [1], [1], [2], [0, 0, 0, 1, 1, 2], [0], [0]>} : vector<2x8x8xbf16>, vector<2x8x8xbf16>, vector<2x8x8xf32> -> vector<2x8x8xf32>
    "tpu.trace_stop"() : () -> ()
    %418 = vector.shape_cast %417 : vector<2x8x8xf32> to vector<16x8xf32>
    %419 = arith.truncf %418 : vector<16x8xf32> to vector<16x8xbf16>
    %c1_205 = arith.constant 1 : index
    %c2_206 = arith.constant 2 : index
    %c0_207 = arith.constant 0 : index
    %c0_208 = arith.constant 0 : index
    %420 = vector.load %arg7[%c1_205, %c2_206, %c0_207, %c0_208] : memref<2x4x8x32xbf16, #tpu.memory_space<vmem>>, vector<1x1x8x32xbf16>
    %421 = vector.shape_cast %420 : vector<1x1x8x32xbf16> to vector<8x32xbf16>
    %cst_209 = arith.constant dense<0.000000e+00> : vector<16x32xf32>
    %422 = tpu.matmul %419, %421, %cst_209 {dimension_numbers = #tpu.dot_dimension_numbers<[1], [0], [0], [1], [0, 0, 1, 1], [], []>} : vector<16x8xbf16>, vector<8x32xbf16>, vector<16x32xf32> -> vector<16x32xf32>
    %423 = arith.addf %395, %422 : vector<16x32xf32>
    %424 = vector.extract_strided_slice %338 {offsets = [0, 24], sizes = [16, 8], strides = [1, 1]} : vector<16x32xf32> to vector<16x8xf32>
    %425 = arith.truncf %424 : vector<16x8xf32> to vector<16x8xbf16>
    %426 = vector.shape_cast %425 : vector<16x8xbf16> to vector<2x8x8xbf16>
    %427 = vector.extract_strided_slice %339 {offsets = [0, 24], sizes = [16, 8], strides = [1, 1]} : vector<16x32xf32> to vector<16x8xf32>
    %428 = arith.truncf %427 : vector<16x8xf32> to vector<16x8xbf16>
    %429 = vector.shape_cast %428 : vector<16x8xbf16> to vector<2x8x8xbf16>
    %430 = vector.extract_strided_slice %340 {offsets = [0, 24], sizes = [16, 8], strides = [1, 1]} : vector<16x32xf32> to vector<16x8xf32>
    %431 = arith.truncf %430 : vector<16x8xf32> to vector<16x8xbf16>
    %432 = vector.shape_cast %431 : vector<16x8xbf16> to vector<2x8x8xbf16>
    "tpu.trace_start"() <{level = 10 : i32, message = "bqd,bkd->bqk"}> : () -> ()
    %cst_210 = arith.constant dense<0.000000e+00> : vector<2x8x8xf32>
    %433 = tpu.matmul %426, %429, %cst_210 {dimension_numbers = #tpu.dot_dimension_numbers<[2], [2], [1], [1], [0, 0, 0, 1, 1, 1], [0], [0]>} : vector<2x8x8xbf16>, vector<2x8x8xbf16>, vector<2x8x8xf32> -> vector<2x8x8xf32>
    "tpu.trace_stop"() : () -> ()
    %cst_211 = arith.constant dense<0xFF800000> : vector<2x8xf32>
    %434 = vector.multi_reduction <maximumf>, %433, %cst_211 [2] : vector<2x8x8xf32> to vector<2x8xf32>
    %435 = vector.shape_cast %434 : vector<2x8xf32> to vector<2x8x1xf32>
    %436 = vector.broadcast %435 : vector<2x8x1xf32> to vector<2x8x8xf32>
    %437 = arith.subf %433, %436 : vector<2x8x8xf32>
    %438 = math.exp %437 : vector<2x8x8xf32>
    %cst_212 = arith.constant dense<0.000000e+00> : vector<2x8xf32>
    %439 = vector.multi_reduction <add>, %438, %cst_212 [2] : vector<2x8x8xf32> to vector<2x8xf32>
    %440 = vector.shape_cast %439 : vector<2x8xf32> to vector<2x8x1xf32>
    %441 = tpu.reciprocal %440 {approx = true} : vector<2x8x1xf32> -> vector<2x8x1xf32>
    %442 = vector.broadcast %441 : vector<2x8x1xf32> to vector<2x8x8xf32>
    %443 = arith.mulf %438, %442 : vector<2x8x8xf32>
    %444 = arith.truncf %443 : vector<2x8x8xf32> to vector<2x8x8xbf16>
    "tpu.trace_start"() <{level = 10 : i32, message = "bqk,bkd->bqd"}> : () -> ()
    %cst_213 = arith.constant dense<0.000000e+00> : vector<2x8x8xf32>
    %445 = tpu.matmul %444, %432, %cst_213 {dimension_numbers = #tpu.dot_dimension_numbers<[2], [1], [1], [2], [0, 0, 0, 1, 1, 2], [0], [0]>} : vector<2x8x8xbf16>, vector<2x8x8xbf16>, vector<2x8x8xf32> -> vector<2x8x8xf32>
    "tpu.trace_stop"() : () -> ()
    %446 = vector.shape_cast %445 : vector<2x8x8xf32> to vector<16x8xf32>
    %447 = arith.truncf %446 : vector<16x8xf32> to vector<16x8xbf16>
    %c1_214 = arith.constant 1 : index
    %c3_215 = arith.constant 3 : index
    %c0_216 = arith.constant 0 : index
    %c0_217 = arith.constant 0 : index
    %448 = vector.load %arg7[%c1_214, %c3_215, %c0_216, %c0_217] : memref<2x4x8x32xbf16, #tpu.memory_space<vmem>>, vector<1x1x8x32xbf16>
    %449 = vector.shape_cast %448 : vector<1x1x8x32xbf16> to vector<8x32xbf16>
    %cst_218 = arith.constant dense<0.000000e+00> : vector<16x32xf32>
    %450 = tpu.matmul %447, %449, %cst_218 {dimension_numbers = #tpu.dot_dimension_numbers<[1], [0], [0], [1], [0, 0, 1, 1], [], []>} : vector<16x8xbf16>, vector<8x32xbf16>, vector<16x32xf32> -> vector<16x32xf32>
    %451 = arith.addf %423, %450 : vector<16x32xf32>
    %c1_219 = arith.constant 1 : index
    %c0_220 = arith.constant 0 : index
    %c0_221 = arith.constant 0 : index
    %452 = vector.load %arg8[%c1_219, %c0_220, %c0_221] : memref<2x1x32xf32, #tpu.memory_space<vmem>>, vector<1x1x32xf32>
    %453 = vector.shape_cast %452 : vector<1x1x32xf32> to vector<1x32xf32>
    %454 = vector.broadcast %453 : vector<1x32xf32> to vector<16x32xf32>
    %455 = arith.addf %451, %454 : vector<16x32xf32>
    %456 = arith.addf %329, %455 : vector<16x32xf32>
    %c1_222 = arith.constant 1 : index
    %c0_223 = arith.constant 0 : index
    %c0_224 = arith.constant 0 : index
    %457 = vector.load %arg9[%c1_222, %c0_223, %c0_224] : memref<2x1x32xf32, #tpu.memory_space<vmem>>, vector<1x1x32xf32>
    %458 = vector.shape_cast %457 : vector<1x1x32xf32> to vector<1x32xf32>
    %c1_225 = arith.constant 1 : index
    %c0_226 = arith.constant 0 : index
    %c0_227 = arith.constant 0 : index
    %459 = vector.load %arg10[%c1_225, %c0_226, %c0_227] : memref<2x1x32xf32, #tpu.memory_space<vmem>>, vector<1x1x32xf32>
    %460 = vector.shape_cast %459 : vector<1x1x32xf32> to vector<1x32xf32>
    %cst_228 = arith.constant dense<0.000000e+00> : vector<16xf32>
    %461 = vector.multi_reduction <add>, %456, %cst_228 [1] : vector<16x32xf32> to vector<16xf32>
    %462 = vector.shape_cast %461 : vector<16xf32> to vector<16x1xf32>
    %cst_229 = arith.constant 3.200000e+01 : f32
    %463 = vector.broadcast %cst_229 : f32 to vector<16x1xf32>
    %464 = arith.divf %462, %463 : vector<16x1xf32>
    %465 = vector.broadcast %464 : vector<16x1xf32> to vector<16x32xf32>
    %466 = arith.subf %456, %465 : vector<16x32xf32>
    %467 = arith.mulf %466, %466 : vector<16x32xf32>
    %cst_230 = arith.constant dense<0.000000e+00> : vector<16xf32>
    %468 = vector.multi_reduction <add>, %467, %cst_230 [1] : vector<16x32xf32> to vector<16xf32>
    %469 = vector.shape_cast %468 : vector<16xf32> to vector<16x1xf32>
    %cst_231 = arith.constant 3.200000e+01 : f32
    %470 = vector.broadcast %cst_231 : f32 to vector<16x1xf32>
    %471 = arith.divf %469, %470 : vector<16x1xf32>
    %472 = vector.broadcast %464 : vector<16x1xf32> to vector<16x32xf32>
    %473 = arith.subf %456, %472 : vector<16x32xf32>
    %cst_232 = arith.constant 9.99999996E-13 : f32
    %474 = vector.broadcast %cst_232 : f32 to vector<16x1xf32>
    %475 = arith.addf %471, %474 : vector<16x1xf32>
    %476 = math.rsqrt %475 : vector<16x1xf32>
    %477 = vector.broadcast %476 : vector<16x1xf32> to vector<16x32xf32>
    %478 = arith.mulf %473, %477 : vector<16x32xf32>
    %479 = vector.broadcast %458 : vector<1x32xf32> to vector<16x32xf32>
    %480 = arith.mulf %478, %479 : vector<16x32xf32>
    %481 = vector.broadcast %460 : vector<1x32xf32> to vector<16x32xf32>
    %482 = arith.addf %480, %481 : vector<16x32xf32>
    %483 = arith.truncf %482 : vector<16x32xf32> to vector<16x32xbf16>
    %c1_233 = arith.constant 1 : index
    %c0_234 = arith.constant 0 : index
    %c0_235 = arith.constant 0 : index
    %484 = vector.load %arg11[%c1_233, %c0_234, %c0_235] : memref<2x32x64xbf16, #tpu.memory_space<vmem>>, vector<1x32x64xbf16>
    %485 = vector.shape_cast %484 : vector<1x32x64xbf16> to vector<32x64xbf16>
    %cst_236 = arith.constant dense<0.000000e+00> : vector<16x64xf32>
    %486 = tpu.matmul %483, %485, %cst_236 {dimension_numbers = #tpu.dot_dimension_numbers<[1], [0], [0], [1], [0, 0, 1, 1], [], []>} : vector<16x32xbf16>, vector<32x64xbf16>, vector<16x64xf32> -> vector<16x64xf32>
    %c1_237 = arith.constant 1 : index
    %c0_238 = arith.constant 0 : index
    %c0_239 = arith.constant 0 : index
    %487 = vector.load %arg12[%c1_237, %c0_238, %c0_239] : memref<2x1x64xf32, #tpu.memory_space<vmem>>, vector<1x1x64xf32>
    %488 = vector.shape_cast %487 : vector<1x1x64xf32> to vector<1x64xf32>
    %489 = vector.broadcast %488 : vector<1x64xf32> to vector<16x64xf32>
    %490 = arith.addf %486, %489 : vector<16x64xf32>
    %491 = arith.mulf %490, %490 : vector<16x64xf32>
    %492 = arith.mulf %490, %491 : vector<16x64xf32>
    %cst_240 = arith.constant 4.471500e-02 : f32
    %493 = vector.broadcast %cst_240 : f32 to vector<16x64xf32>
    %494 = arith.mulf %493, %492 : vector<16x64xf32>
    %495 = arith.addf %490, %494 : vector<16x64xf32>
    %cst_241 = arith.constant 0.797884583 : f32
    %496 = vector.broadcast %cst_241 : f32 to vector<16x64xf32>
    %497 = arith.mulf %496, %495 : vector<16x64xf32>
    %498 = math.tanh %497 : vector<16x64xf32>
    %cst_242 = arith.constant 1.000000e+00 : f32
    %499 = vector.broadcast %cst_242 : f32 to vector<16x64xf32>
    %500 = arith.addf %499, %498 : vector<16x64xf32>
    %cst_243 = arith.constant 5.000000e-01 : f32
    %501 = vector.broadcast %cst_243 : f32 to vector<16x64xf32>
    %502 = arith.mulf %501, %500 : vector<16x64xf32>
    %503 = arith.mulf %490, %502 : vector<16x64xf32>
    %504 = arith.truncf %503 : vector<16x64xf32> to vector<16x64xbf16>
    %c1_244 = arith.constant 1 : index
    %c0_245 = arith.constant 0 : index
    %c0_246 = arith.constant 0 : index
    %505 = vector.load %arg13[%c1_244, %c0_245, %c0_246] : memref<2x64x32xbf16, #tpu.memory_space<vmem>>, vector<1x64x32xbf16>
    %506 = vector.shape_cast %505 : vector<1x64x32xbf16> to vector<64x32xbf16>
    %cst_247 = arith.constant dense<0.000000e+00> : vector<16x32xf32>
    %507 = tpu.matmul %504, %506, %cst_247 {dimension_numbers = #tpu.dot_dimension_numbers<[1], [0], [0], [1], [0, 0, 1, 1], [], []>} : vector<16x64xbf16>, vector<64x32xbf16>, vector<16x32xf32> -> vector<16x32xf32>
    %c1_248 = arith.constant 1 : index
    %c0_249 = arith.constant 0 : index
    %c0_250 = arith.constant 0 : index
    %508 = vector.load %arg14[%c1_248, %c0_249, %c0_250] : memref<2x1x32xf32, #tpu.memory_space<vmem>>, vector<1x1x32xf32>
    %509 = vector.shape_cast %508 : vector<1x1x32xf32> to vector<1x32xf32>
    %510 = vector.broadcast %509 : vector<1x32xf32> to vector<16x32xf32>
    %511 = arith.addf %507, %510 : vector<16x32xf32>
    %512 = arith.addf %482, %511 : vector<16x32xf32>
    %c1_251 = arith.constant 1 : index
    %c0_252 = arith.constant 0 : index
    %c0_253 = arith.constant 0 : index
    %513 = vector.load %arg15[%c1_251, %c0_252, %c0_253] : memref<2x1x32xf32, #tpu.memory_space<vmem>>, vector<1x1x32xf32>
    %514 = vector.shape_cast %513 : vector<1x1x32xf32> to vector<1x32xf32>
    %c1_254 = arith.constant 1 : index
    %c0_255 = arith.constant 0 : index
    %c0_256 = arith.constant 0 : index
    %515 = vector.load %arg16[%c1_254, %c0_255, %c0_256] : memref<2x1x32xf32, #tpu.memory_space<vmem>>, vector<1x1x32xf32>
    %516 = vector.shape_cast %515 : vector<1x1x32xf32> to vector<1x32xf32>
    %cst_257 = arith.constant dense<0.000000e+00> : vector<16xf32>
    %517 = vector.multi_reduction <add>, %512, %cst_257 [1] : vector<16x32xf32> to vector<16xf32>
    %518 = vector.shape_cast %517 : vector<16xf32> to vector<16x1xf32>
    %cst_258 = arith.constant 3.200000e+01 : f32
    %519 = vector.broadcast %cst_258 : f32 to vector<16x1xf32>
    %520 = arith.divf %518, %519 : vector<16x1xf32>
    %521 = vector.broadcast %520 : vector<16x1xf32> to vector<16x32xf32>
    %522 = arith.subf %512, %521 : vector<16x32xf32>
    %523 = arith.mulf %522, %522 : vector<16x32xf32>
    %cst_259 = arith.constant dense<0.000000e+00> : vector<16xf32>
    %524 = vector.multi_reduction <add>, %523, %cst_259 [1] : vector<16x32xf32> to vector<16xf32>
    %525 = vector.shape_cast %524 : vector<16xf32> to vector<16x1xf32>
    %cst_260 = arith.constant 3.200000e+01 : f32
    %526 = vector.broadcast %cst_260 : f32 to vector<16x1xf32>
    %527 = arith.divf %525, %526 : vector<16x1xf32>
    %528 = vector.broadcast %520 : vector<16x1xf32> to vector<16x32xf32>
    %529 = arith.subf %512, %528 : vector<16x32xf32>
    %cst_261 = arith.constant 9.99999996E-13 : f32
    %530 = vector.broadcast %cst_261 : f32 to vector<16x1xf32>
    %531 = arith.addf %527, %530 : vector<16x1xf32>
    %532 = math.rsqrt %531 : vector<16x1xf32>
    %533 = vector.broadcast %532 : vector<16x1xf32> to vector<16x32xf32>
    %534 = arith.mulf %529, %533 : vector<16x32xf32>
    %535 = vector.broadcast %514 : vector<1x32xf32> to vector<16x32xf32>
    %536 = arith.mulf %534, %535 : vector<16x32xf32>
    %537 = vector.broadcast %516 : vector<1x32xf32> to vector<16x32xf32>
    %538 = arith.addf %536, %537 : vector<16x32xf32>
    %539 = vector.shape_cast %538 : vector<16x32xf32> to vector<2x8x32xf32>
    %540 = vector.extract_strided_slice %539 {offsets = [0, 0, 0], sizes = [2, 1, 32], strides = [1, 1, 1]} : vector<2x8x32xf32> to vector<2x1x32xf32>
    %541 = vector.shape_cast %540 : vector<2x1x32xf32> to vector<2x32xf32>
    %542 = arith.truncf %541 : vector<2x32xf32> to vector<2x32xbf16>
    %c0_262 = arith.constant 0 : index
    %c0_263 = arith.constant 0 : index
    %543 = vector.load %arg17[%c0_262, %c0_263] : memref<32x32xbf16, #tpu.memory_space<vmem>>, vector<32x32xbf16>
    %cst_264 = arith.constant dense<0.000000e+00> : vector<2x32xf32>
    %544 = tpu.matmul %542, %543, %cst_264 {dimension_numbers = #tpu.dot_dimension_numbers<[1], [0], [0], [1], [0, 0, 1, 1], [], []>} : vector<2x32xbf16>, vector<32x32xbf16>, vector<2x32xf32> -> vector<2x32xf32>
    %c0_265 = arith.constant 0 : index
    %c0_266 = arith.constant 0 : index
    %545 = vector.load %arg18[%c0_265, %c0_266] : memref<1x32xf32, #tpu.memory_space<vmem>>, vector<1x32xf32>
    %546 = vector.broadcast %545 : vector<1x32xf32> to vector<2x32xf32>
    %547 = arith.addf %544, %546 : vector<2x32xf32>
    %548 = math.tanh %547 : vector<2x32xf32>
    %549 = arith.truncf %548 : vector<2x32xf32> to vector<2x32xbf16>
    %c0_267 = arith.constant 0 : index
    %c0_268 = arith.constant 0 : index
    %550 = vector.load %arg19[%c0_267, %c0_268] : memref<32x256xbf16, #tpu.memory_space<vmem>>, vector<32x256xbf16>
    %cst_269 = arith.constant dense<0.000000e+00> : vector<2x256xf32>
    %551 = tpu.matmul %549, %550, %cst_269 {dimension_numbers = #tpu.dot_dimension_numbers<[1], [0], [0], [1], [0, 0, 1, 1], [], []>} : vector<2x32xbf16>, vector<32x256xbf16>, vector<2x256xf32> -> vector<2x256xf32>
    %c0_270 = arith.constant 0 : index
    %c0_271 = arith.constant 0 : index
    %552 = vector.load %arg20[%c0_270, %c0_271] : memref<1x256xf32, #tpu.memory_space<vmem>>, vector<1x256xf32>
    %553 = vector.broadcast %552 : vector<1x256xf32> to vector<2x256xf32>
    %554 = arith.addf %551, %553 : vector<2x256xf32>
    %cst_272 = arith.constant 0.000000e+00 : f32
    %555 = vector.broadcast %cst_272 : f32 to vector<2x256xf32>
    %556 = arith.maximumf %554, %555 : vector<2x256xf32>
    %557 = arith.truncf %556 : vector<2x256xf32> to vector<2x256xbf16>
    %c0_273 = arith.constant 0 : index
    %c0_274 = arith.constant 0 : index
    %558 = vector.load %arg21[%c0_273, %c0_274] : memref<256x64xbf16, #tpu.memory_space<vmem>>, vector<256x64xbf16>
    %cst_275 = arith.constant dense<0.000000e+00> : vector<2x64xf32>
    %559 = tpu.matmul %557, %558, %cst_275 {dimension_numbers = #tpu.dot_dimension_numbers<[1], [0], [0], [1], [0, 0, 1, 1], [], []>} : vector<2x256xbf16>, vector<256x64xbf16>, vector<2x64xf32> -> vector<2x64xf32>
    %c0_276 = arith.constant 0 : index
    %c0_277 = arith.constant 0 : index
    %560 = vector.load %arg22[%c0_276, %c0_277] : memref<1x64xf32, #tpu.memory_space<vmem>>, vector<1x64xf32>
    %561 = vector.broadcast %560 : vector<1x64xf32> to vector<2x64xf32>
    %562 = arith.addf %559, %561 : vector<2x64xf32>
    %cst_278 = arith.constant 0.000000e+00 : f32
    %563 = vector.broadcast %cst_278 : f32 to vector<2x64xf32>
    %564 = arith.maximumf %562, %563 : vector<2x64xf32>
    %565 = arith.truncf %564 : vector<2x64xf32> to vector<2x64xbf16>
    %c0_279 = arith.constant 0 : index
    %c0_280 = arith.constant 0 : index
    %566 = vector.load %arg23[%c0_279, %c0_280] : memref<64x128xbf16, #tpu.memory_space<vmem>>, vector<64x128xbf16>
    %cst_281 = arith.constant dense<0.000000e+00> : vector<2x128xf32>
    %567 = tpu.matmul %565, %566, %cst_281 {dimension_numbers = #tpu.dot_dimension_numbers<[1], [0], [0], [1], [0, 0, 1, 1], [], []>} : vector<2x64xbf16>, vector<64x128xbf16>, vector<2x128xf32> -> vector<2x128xf32>
    %c0_282 = arith.constant 0 : index
    %c0_283 = arith.constant 0 : index
    %568 = vector.load %arg24[%c0_282, %c0_283] : memref<1x128xf32, #tpu.memory_space<vmem>>, vector<1x128xf32>
    %569 = vector.broadcast %568 : vector<1x128xf32> to vector<2x128xf32>
    %570 = arith.addf %567, %569 : vector<2x128xf32>
    %c0_284 = arith.constant 0 : index
    %c0_285 = arith.constant 0 : index
    %571 = vector.load %arg25[%c0_284, %c0_285] : memref<2x128xf32, #tpu.memory_space<vmem>>, vector<2x128xf32>
    tpu.vector_store %arg25[%c0_284, %c0_285], %570 {strides = array<i32>} : memref<2x128xf32, #tpu.memory_space<vmem>>, vector<2x128xf32>,
    return
  }
}

</mosaic_0001>

<llo_original>
// kernel: text_transformer_forward.1
$region0: #{text_transformer_forward.1}
  #allocation0 [shape = 'u32[]', space=smem, size = 0x4, offset = 0x4, fixed_abs, tag = 'smem constant byte address 0x4 - core index']
  #allocation1 [shape = 'u32[144,128]{1,0:T(1,128)}', space=vmem, size = 0x12000, scoped, tag = 'internal scratch']
  #allocation2 [shape = 'f32[16,32]{1,0:T(8,128)}', space=vmem, size = 0x2000, scoped, tag = 'scratch operand']
  %s0 = inlined_call_operand.vmem [shape: s32[16], index: 0, kind: input, shape index: {}]
  %s1 = inlined_call_operand.vmem [shape: f32[100,32], index: 1, kind: input, shape index: {}]
  %s2 = inlined_call_operand.vmem [shape: f32[8,32], index: 2, kind: input, shape index: {}]
  %s3 = inlined_call_operand.vmem [shape: f32[1,32], index: 3, kind: input, shape index: {}]
  %s4 = inlined_call_operand.vmem [shape: f32[1,32], index: 4, kind: input, shape index: {}]
  %s5 = inlined_call_operand.vmem [shape: bf16[2,32,96], index: 5, kind: input, shape index: {}]
  %s6 = inlined_call_operand.vmem [shape: f32[2,1,96], index: 6, kind: input, shape index: {}]
  %s7 = inlined_call_operand.vmem [shape: bf16[2,4,8,32], index: 7, kind: input, shape index: {}]
  %s8 = inlined_call_operand.vmem [shape: f32[2,1,32], index: 8, kind: input, shape index: {}]
  %s9 = inlined_call_operand.vmem [shape: f32[2,1,32], index: 9, kind: input, shape index: {}]
  %s10 = inlined_call_operand.vmem [shape: f32[2,1,32], index: 10, kind: input, shape index: {}]
  %s11 = inlined_call_operand.vmem [shape: bf16[2,32,64], index: 11, kind: input, shape index: {}]
  %s12 = inlined_call_operand.vmem [shape: f32[2,1,64], index: 12, kind: input, shape index: {}]
  %s13 = inlined_call_operand.vmem [shape: bf16[2,64,32], index: 13, kind: input, shape index: {}]
  %s14 = inlined_call_operand.vmem [shape: f32[2,1,32], index: 14, kind: input, shape index: {}]
  %s15 = inlined_call_operand.vmem [shape: f32[2,1,32], index: 15, kind: input, shape index: {}]
  %s16 = inlined_call_operand.vmem [shape: f32[2,1,32], index: 16, kind: input, shape index: {}]
  %s17 = inlined_call_operand.vmem [shape: bf16[32,32], index: 17, kind: input, shape index: {}]
  %s18 = inlined_call_operand.vmem [shape: f32[1,32], index: 18, kind: input, shape index: {}]
  %s19 = inlined_call_operand.vmem [shape: bf16[32,256], index: 19, kind: input, shape index: {}]
  %s20 = inlined_call_operand.vmem [shape: f32[1,256], index: 20, kind: input, shape index: {}]
  %s21 = inlined_call_operand.vmem [shape: bf16[256,64], index: 21, kind: input, shape index: {}]
  %s22 = inlined_call_operand.vmem [shape: f32[1,64], index: 22, kind: input, shape index: {}]
  %s23 = inlined_call_operand.vmem [shape: bf16[64,128], index: 23, kind: input, shape index: {}]
  %s24 = inlined_call_operand.vmem [shape: f32[1,128], index: 24, kind: input, shape index: {}]
  %s25 = inlined_call_operand.hbm [shape: f32[2,128], index: 25, kind: output, shape index: {}]
  %s26 = sld [smem:[#allocation0]]
  $region114: #{text_transformer_forward.1} parent=0
    _
  %s28 = ssub.s32 1, %s26
  %s29 = scalar_select 0, %s28, %s26
  $region1: #{text_transformer_forward.1} parent=0
    #allocation3 [shape = 'u8[512]{0}', space=smem, size = 0x200, scoped, tag = 'input window, operand 0, single buffered']
    #allocation4 [shape = 's32[1]{0}', space=sflag, size = 0x4, scoped, tag = 'scoped memory for text_transformer_forward.1']
    #allocation5 [shape = 's32[1]{0}', space=sflag, size = 0x4, scoped, tag = 'scoped memory for text_transformer_forward.1']
    #allocation6 [shape = 'u8[1024]{0}', space=vmem, size = 0x400, scoped, tag = 'output window, operand 0, single buffered']
    %30 = vsyncpa [#allocation5], 0
    %31 = vsyncpa [#allocation4], 0
    // Predicated region
    $region2: #{text_transformer_forward.1} parent=1 // pred_check
      _
    $region3: #{text_transformer_forward.1} parent=1 // pred_check_branch
      %33 = sbr.rel (0) target = $region5
    $region4: #{text_transformer_forward.1} parent=1 // pred_region
      %s35 = ssub.s32 16, 16
      %36 = vsyncadd [#allocation5], %s35
      %s38 = sshll.u32 %s0, 4
      %s39 = int_to_ptr.vmem [resolvable:$true] %s38
      %41 = dma.vmem_to_smem %s39, 16, [#allocation3], [#allocation5]
    $region5: #{text_transformer_forward.1} parent=1 // pred_fallthru
      _
    // Predicated region
    $region6: #{text_transformer_forward.1} parent=1 // pred_check
      _
    $region7: #{text_transformer_forward.1} parent=1 // pred_check_branch
      %43 = sbr.rel (0) target = $region9
    $region8: #{text_transformer_forward.1} parent=1 // pred_region
      _
    $region9: #{text_transformer_forward.1} parent=1 // pred_fallthru
      _
    // Predicated region
    $region10: #{text_transformer_forward.1} parent=1 // pred_check
      _
    $region11: #{text_transformer_forward.1} parent=1 // pred_check_branch
      %45 = sbr.rel (0) target = $region13
    $region12: #{text_transformer_forward.1} parent=1 // pred_region
      _
    $region13: #{text_transformer_forward.1} parent=1 // pred_fallthru
      _
    // Predicated region
    $region14: #{text_transformer_forward.1} parent=1 // pred_check
      _
    $region15: #{text_transformer_forward.1} parent=1 // pred_check_branch
      %47 = sbr.rel (0) target = $region17
    $region16: #{text_transformer_forward.1} parent=1 // pred_region
      _
    $region17: #{text_transformer_forward.1} parent=1 // pred_fallthru
      _
    // Predicated region
    $region18: #{text_transformer_forward.1} parent=1 // pred_check
      _
    $region19: #{text_transformer_forward.1} parent=1 // pred_check_branch
      %49 = sbr.rel (0) target = $region21
    $region20: #{text_transformer_forward.1} parent=1 // pred_region
      _
    $region21: #{text_transformer_forward.1} parent=1 // pred_fallthru
      _
    // Predicated region
    $region22: #{text_transformer_forward.1} parent=1 // pred_check
      _
    $region23: #{text_transformer_forward.1} parent=1 // pred_check_branch
      %51 = sbr.rel (0) target = $region25
    $region24: #{text_transformer_forward.1} parent=1 // pred_region
      _
    $region25: #{text_transformer_forward.1} parent=1 // pred_fallthru
      _
    // Predicated region
    $region26: #{text_transformer_forward.1} parent=1 // pred_check
      _
    $region27: #{text_transformer_forward.1} parent=1 // pred_check_branch
      %53 = sbr.rel (0) target = $region29
    $region28: #{text_transformer_forward.1} parent=1 // pred_region
      _
    $region29: #{text_transformer_forward.1} parent=1 // pred_fallthru
      _
    // Predicated region
    $region30: #{text_transformer_forward.1} parent=1 // pred_check
      _
    $region31: #{text_transformer_forward.1} parent=1 // pred_check_branch
      %55 = sbr.rel (0) target = $region33
    $region32: #{text_transformer_forward.1} parent=1 // pred_region
      _
    $region33: #{text_transformer_forward.1} parent=1 // pred_fallthru
      _
    // Predicated region
    $region34: #{text_transformer_forward.1} parent=1 // pred_check
      _
    $region35: #{text_transformer_forward.1} parent=1 // pred_check_branch
      %57 = sbr.rel (0) target = $region37
    $region36: #{text_transformer_forward.1} parent=1 // pred_region
      _
    $region37: #{text_transformer_forward.1} parent=1 // pred_fallthru
      _
    // Predicated region
    $region38: #{text_transformer_forward.1} parent=1 // pred_check
      _
    $region39: #{text_transformer_forward.1} parent=1 // pred_check_branch
      %59 = sbr.rel (0) target = $region41
    $region40: #{text_transformer_forward.1} parent=1 // pred_region
      _
    $region41: #{text_transformer_forward.1} parent=1 // pred_fallthru
      _
    // Predicated region
    $region42: #{text_transformer_forward.1} parent=1 // pred_check
      _
    $region43: #{text_transformer_forward.1} parent=1 // pred_check_branch
      %61 = sbr.rel (0) target = $region45
    $region44: #{text_transformer_forward.1} parent=1 // pred_region
      _
    $region45: #{text_transformer_forward.1} parent=1 // pred_fallthru
      _
    // Predicated region
    $region46: #{text_transformer_forward.1} parent=1 // pred_check
      _
    $region47: #{text_transformer_forward.1} parent=1 // pred_check_branch
      %63 = sbr.rel (0) target = $region49
    $region48: #{text_transformer_forward.1} parent=1 // pred_region
      _
    $region49: #{text_transformer_forward.1} parent=1 // pred_fallthru
      _
    // Predicated region
    $region50: #{text_transformer_forward.1} parent=1 // pred_check
      _
    $region51: #{text_transformer_forward.1} parent=1 // pred_check_branch
      %65 = sbr.rel (0) target = $region53
    $region52: #{text_transformer_forward.1} parent=1 // pred_region
      _
    $region53: #{text_transformer_forward.1} parent=1 // pred_fallthru
      _
    // Predicated region
    $region54: #{text_transformer_forward.1} parent=1 // pred_check
      _
    $region55: #{text_transformer_forward.1} parent=1 // pred_check_branch
      %67 = sbr.rel (0) target = $region57
    $region56: #{text_transformer_forward.1} parent=1 // pred_region
      _
    $region57: #{text_transformer_forward.1} parent=1 // pred_fallthru
      _
    // Predicated region
    $region58: #{text_transformer_forward.1} parent=1 // pred_check
      _
    $region59: #{text_transformer_forward.1} parent=1 // pred_check_branch
      %69 = sbr.rel (0) target = $region61
    $region60: #{text_transformer_forward.1} parent=1 // pred_region
      _
    $region61: #{text_transformer_forward.1} parent=1 // pred_fallthru
      _
    // Predicated region
    $region62: #{text_transformer_forward.1} parent=1 // pred_check
      _
    $region63: #{text_transformer_forward.1} parent=1 // pred_check_branch
      %71 = sbr.rel (0) target = $region65
    $region64: #{text_transformer_forward.1} parent=1 // pred_region
      _
    $region65: #{text_transformer_forward.1} parent=1 // pred_fallthru
      _
    // Predicated region
    $region66: #{text_transformer_forward.1} parent=1 // pred_check
      _
    $region67: #{text_transformer_forward.1} parent=1 // pred_check_branch
      %73 = sbr.rel (0) target = $region69
    $region68: #{text_transformer_forward.1} parent=1 // pred_region
      _
    $region69: #{text_transformer_forward.1} parent=1 // pred_fallthru
      _
    // Predicated region
    $region70: #{text_transformer_forward.1} parent=1 // pred_check
      _
    $region71: #{text_transformer_forward.1} parent=1 // pred_check_branch
      %75 = sbr.rel (0) target = $region73
    $region72: #{text_transformer_forward.1} parent=1 // pred_region
      _
    $region73: #{text_transformer_forward.1} parent=1 // pred_fallthru
      _
    // Predicated region
    $region74: #{text_transformer_forward.1} parent=1 // pred_check
      _
    $region75: #{text_transformer_forward.1} parent=1 // pred_check_branch
      %77 = sbr.rel (0) target = $region77
    $region76: #{text_transformer_forward.1} parent=1 // pred_region
      _
    $region77: #{text_transformer_forward.1} parent=1 // pred_fallthru
      _
    // Predicated region
    $region78: #{text_transformer_forward.1} parent=1 // pred_check
      _
    $region79: #{text_transformer_forward.1} parent=1 // pred_check_branch
      %79 = sbr.rel (0) target = $region81
    $region80: #{text_transformer_forward.1} parent=1 // pred_region
      _
    $region81: #{text_transformer_forward.1} parent=1 // pred_fallthru
      _
    // Predicated region
    $region82: #{text_transformer_forward.1} parent=1 // pred_check
      _
    $region83: #{text_transformer_forward.1} parent=1 // pred_check_branch
      %81 = sbr.rel (0) target = $region85
    $region84: #{text_transformer_forward.1} parent=1 // pred_region
      _
    $region85: #{text_transformer_forward.1} parent=1 // pred_fallthru
      _
    // Predicated region
    $region86: #{text_transformer_forward.1} parent=1 // pred_check
      _
    $region87: #{text_transformer_forward.1} parent=1 // pred_check_branch
      %83 = sbr.rel (0) target = $region89
    $region88: #{text_transformer_forward.1} parent=1 // pred_region
      _
    $region89: #{text_transformer_forward.1} parent=1 // pred_fallthru
      _
    // Predicated region
    $region90: #{text_transformer_forward.1} parent=1 // pred_check
      _
    $region91: #{text_transformer_forward.1} parent=1 // pred_check_branch
      %85 = sbr.rel (0) target = $region93
    $region92: #{text_transformer_forward.1} parent=1 // pred_region
      _
    $region93: #{text_transformer_forward.1} parent=1 // pred_fallthru
      _
    // Predicated region
    $region94: #{text_transformer_forward.1} parent=1 // pred_check
      _
    $region95: #{text_transformer_forward.1} parent=1 // pred_check_branch
      %87 = sbr.rel (0) target = $region97
    $region96: #{text_transformer_forward.1} parent=1 // pred_region
      _
    $region97: #{text_transformer_forward.1} parent=1 // pred_fallthru
      _
    // Predicated region
    $region98: #{text_transformer_forward.1} parent=1 // pred_check
      _
    $region99: #{text_transformer_forward.1} parent=1 // pred_check_branch
      %89 = sbr.rel (0) target = $region101
    $region100: #{text_transformer_forward.1} parent=1 // pred_region
      _
    $region101: #{text_transformer_forward.1} parent=1 // pred_fallthru
      _
    // Predicated region
    $region102: #{text_transformer_forward.1} parent=1 // pred_check
      _
    $region103: #{text_transformer_forward.1} parent=1 // pred_check_branch
      %91 = sbr.rel (0) target = $region105
    $region104: #{text_transformer_forward.1} parent=1 // pred_region
      %92 = dma.done [#allocation5], 16
    $region105: #{text_transformer_forward.1} parent=1 // pred_fallthru
      _
    %93 = sfence
    %s95 = sld [smem:[#allocation3]]
    %s96 = scalar_lea.vmem %s1, %s95
    %v97 = vld [vmem:[%s96] sm:$0x1]
    %v98 = vld [vmem:[%s2] sm:$0x1]
    %v99 = vadd.f32 %v97, %v98
    %vm100 = vcmask 253952
    %101 = vst.msk [vmem:[#allocation2] sm:$0x1] %vm100, %v99
    %s102 = sld [smem:[#allocation3 + $0x1]]
    %s103 = scalar_lea.vmem %s1, %s102
    %v104 = vld [vmem:[%s103] sm:$0x1]
    %v105 = vld [vmem:[%s2 + $0x1] sm:$0x1]
    %v106 = vadd.f32 %v104, %v105
    %107 = vst.msk [vmem:[#allocation2 + $0x1] sm:$0x1] %vm100, %v106
    %s108 = sld [smem:[#allocation3 + $0x2]]
    %s109 = scalar_lea.vmem %s1, %s108
    %v110 = vld [vmem:[%s109] sm:$0x1]
    %v111 = vld [vmem:[%s2 + $0x2] sm:$0x1]
    %v112 = vadd.f32 %v110, %v111
    %113 = vst.msk [vmem:[#allocation2 + $0x2] sm:$0x1] %vm100, %v112
    %s114 = sld [smem:[#allocation3 + $0x3]]
    %s115 = scalar_lea.vmem %s1, %s114
    %v116 = vld [vmem:[%s115] sm:$0x1]
    %v117 = vld [vmem:[%s2 + $0x3] sm:$0x1]
    %v118 = vadd.f32 %v116, %v117
    %119 = vst.msk [vmem:[#allocation2 + $0x3] sm:$0x1] %vm100, %v118
    %s120 = sld [smem:[#allocation3 + $0x4]]
    %s121 = scalar_lea.vmem %s1, %s120
    %v122 = vld [vmem:[%s121] sm:$0x1]
    %v123 = vld [vmem:[%s2 + $0x4] sm:$0x1]
    %v124 = vadd.f32 %v122, %v123
    %125 = vst.msk [vmem:[#allocation2 + $0x4] sm:$0x1] %vm100, %v124
    %s126 = sld [smem:[#allocation3 + $0x5]]
    %s127 = scalar_lea.vmem %s1, %s126
    %v128 = vld [vmem:[%s127] sm:$0x1]
    %v129 = vld [vmem:[%s2 + $0x5] sm:$0x1]
    %v130 = vadd.f32 %v128, %v129
    %131 = vst.msk [vmem:[#allocation2 + $0x5] sm:$0x1] %vm100, %v130
    %s132 = sld [smem:[#allocation3 + $0x6]]
    %s133 = scalar_lea.vmem %s1, %s132
    %v134 = vld [vmem:[%s133] sm:$0x1]
    %v135 = vld [vmem:[%s2 + $0x6] sm:$0x1]
    %v136 = vadd.f32 %v134, %v135
    %137 = vst.msk [vmem:[#allocation2 + $0x6] sm:$0x1] %vm100, %v136
    %s138 = sld [smem:[#allocation3 + $0x7]]
    %s139 = scalar_lea.vmem %s1, %s138
    %v140 = vld [vmem:[%s139] sm:$0x1]
    %v141 = vld [vmem:[%s2 + $0x7] sm:$0x1]
    %v142 = vadd.f32 %v140, %v141
    %143 = vst.msk [vmem:[#allocation2 + $0x7] sm:$0x1] %vm100, %v142
    %s144 = sld [smem:[#allocation3 + $0x8]]
    %s145 = scalar_lea.vmem %s1, %s144
    %v146 = vld [vmem:[%s145] sm:$0x1]
    %v147 = vld [vmem:[%s2] sm:$0x1]
    %v148 = vadd.f32 %v146, %v147
    %149 = vst.msk [vmem:[#allocation2 + $0x8] sm:$0x1] %vm100, %v148
    %s150 = sld [smem:[#allocation3 + $0x9]]
    %s151 = scalar_lea.vmem %s1, %s150
    %v152 = vld [vmem:[%s151] sm:$0x1]
    %v153 = vld [vmem:[%s2 + $0x1] sm:$0x1]
    %v154 = vadd.f32 %v152, %v153
    %155 = vst.msk [vmem:[#allocation2 + $0x9] sm:$0x1] %vm100, %v154
    %s156 = sld [smem:[#allocation3 + $0xa]]
    %s157 = scalar_lea.vmem %s1, %s156
    %v158 = vld [vmem:[%s157] sm:$0x1]
    %v159 = vld [vmem:[%s2 + $0x2] sm:$0x1]
    %v160 = vadd.f32 %v158, %v159
    %161 = vst.msk [vmem:[#allocation2 + $0xa] sm:$0x1] %vm100, %v160
    %s162 = sld [smem:[#allocation3 + $0xb]]
    %s163 = scalar_lea.vmem %s1, %s162
    %v164 = vld [vmem:[%s163] sm:$0x1]
    %v165 = vld [vmem:[%s2 + $0x3] sm:$0x1]
    %v166 = vadd.f32 %v164, %v165
    %167 = vst.msk [vmem:[#allocation2 + $0xb] sm:$0x1] %vm100, %v166
    %s168 = sld [smem:[#allocation3 + $0xc]]
    %s169 = scalar_lea.vmem %s1, %s168
    %v170 = vld [vmem:[%s169] sm:$0x1]
    %v171 = vld [vmem:[%s2 + $0x4] sm:$0x1]
    %v172 = vadd.f32 %v170, %v171
    %173 = vst.msk [vmem:[#allocation2 + $0xc] sm:$0x1] %vm100, %v172
    %s174 = sld [smem:[#allocation3 + $0xd]]
    %s175 = scalar_lea.vmem %s1, %s174
    %v176 = vld [vmem:[%s175] sm:$0x1]
    %v177 = vld [vmem:[%s2 + $0x5] sm:$0x1]
    %v178 = vadd.f32 %v176, %v177
    %179 = vst.msk [vmem:[#allocation2 + $0xd] sm:$0x1] %vm100, %v178
    %s180 = sld [smem:[#allocation3 + $0xe]]
    %s181 = scalar_lea.vmem %s1, %s180
    %v182 = vld [vmem:[%s181] sm:$0x1]
    %v183 = vld [vmem:[%s2 + $0x6] sm:$0x1]
    %v184 = vadd.f32 %v182, %v183
    %185 = vst.msk [vmem:[#allocation2 + $0xe] sm:$0x1] %vm100, %v184
    %s186 = sld [smem:[#allocation3 + $0xf]]
    %s187 = scalar_lea.vmem %s1, %s186
    %v188 = vld [vmem:[%s187] sm:$0x1]
    %v189 = vld [vmem:[%s2 + $0x7] sm:$0x1]
    %v190 = vadd.f32 %v188, %v189
    %191 = vst.msk [vmem:[#allocation2 + $0xf] sm:$0x1] %vm100, %v190
    %v192 = vld [vmem:[#allocation2] sm:$0xff]
    %v193 = vld [vmem:[#allocation2 + $0x8] sm:$0xff]
    %v194 = vld [vmem:[%s3] sm:$0x1]
    %v195 = vld [vmem:[%s4] sm:$0x1]
    %vm196 = vcmask 261120
    %v197 = vsel %vm196, %v192, 0.0
    %198 = vadd.xlane.f32.xlu0 %v197
    %v199 = vpop.xlane.xlu0 %198
    %v200 = vsel %vm196, %v193, 0.0
    %201 = vadd.xlane.f32.xlu0 %v200
    %v202 = vpop.xlane.xlu0 %201
    %v203 = vrcp.pop 32.0
    %v204 = vmul.f32 %v199, %v203
    %v205 = vmul.f32 %v202, %v203
    %v206 = vsub.f32 %v192, %v204
    %v207 = vsub.f32 %v193, %v205
    %v208 = vmul.f32 %v206, %v206
    %v209 = vmul.f32 %v207, %v207
    %v210 = vsel %vm196, %v208, 0.0
    %211 = vadd.xlane.f32.xlu0 %v210
    %v212 = vpop.xlane.xlu0 %211
    %v213 = vsel %vm196, %v209, 0.0
    %214 = vadd.xlane.f32.xlu0 %v213
    %v215 = vpop.xlane.xlu0 %214
    %v216 = vmul.f32 %v212, %v203
    %v217 = vmul.f32 %v215, %v203
    %v218 = vadd.f32 %v216, 1e-12
    %v219 = vadd.f32 %v217, 1e-12
    %v220 = vrsqrt.pop %v218
    %v221 = vrsqrt.pop %v219
    %v222 = vmul.f32 %v206, %v220
    %v223 = vmul.f32 %v207, %v221
    %v225 = vlaneseq
    %v226 = vshrl.u32 %v225, 7
    %v227 = vsub.s32 0, %v226
    %v228 = vrot.slane %v194, %v227
    %v230 = vmul.f32 %v222, %v228
    %v231 = vmul.f32 %v223, %v228
    %v233 = vlaneseq
    %v234 = vshrl.u32 %v233, 7
    %v235 = vsub.s32 0, %v234
    %v236 = vrot.slane %v195, %v235
    %v238 = vadd.f32 %v230, %v236
    %v239 = vadd.f32 %v231, %v236
    %v240 = vpack.c.bf16 %v239, %v238
    %v241 = vld [vmem:[%s5] sm:$0xf]
    %v242 = vld [vmem:[%s5 + $0x4] sm:$0xf]
    %v243 = vld [vmem:[%s5 + $0x8] sm:$0xf]
    %v244 = vld [vmem:[%s5 + $0xc] sm:$0xf]
    %v245 = vld [vmem:[%s6] sm:$0x1]
    %v247 = vlaneseq
    %v248 = vshrl.u32 %v247, 7
    %v249 = vsub.s32 0, %v248
    %v250 = vrot.slane %v245, %v249
    %v256 = vunpack.c.l.b16 %v241
    %v257 = vunpack.c.l.b16 %v242
    %v258 = vunpack.c.l.b16 %v243
    %v259 = vunpack.c.l.b16 %v244
    %v260 = vpack.c.b16 %v257, %v256
    %v261 = vpack.c.b16 %v259, %v258
    %v265 = vsel %vm196, %v240, 0
    %267 = vmatprep.subr.bf16.mxu0 0
    %268 = vmatpush1.bf16.msra.mxu0 %v260
    %269 = vmatprep.subr.bf16.mxu0 0
    %270 = vmatpush1.bf16.msra.mxu0 %v261
    %271 = vmatprep.subr.bf16.mxu0 0
    %272 = vmatpush1.bf16.msra.mxu0 0
    %273 = vmatprep.subr.bf16.mxu0 0
    %274 = vmatpush1.bf16.msra.mxu0 0
    %275 = vmatprep.subr.bf16.mxu0 0
    %276 = vmatpush1.bf16.msra.mxu0 0
    %277 = vmatprep.subr.bf16.mxu0 0
    %278 = vmatpush1.bf16.msra.mxu0 0
    %279 = vmatprep.subr.bf16.mxu0 0
    %280 = vmatpush1.bf16.msra.mxu0 0
    %281 = vmatprep.subr.bf16.mxu0 0
    %282 = vmatpush1.bf16.msra.mxu0 0
    %283 = vmatprep.subr.bf16.mxu0 0
    %284 = vmatpush1.bf16.msra.mxu0 0
    %285 = vmatprep.subr.bf16.mxu0 0
    %286 = vmatpush1.bf16.msra.mxu0 0
    %287 = vmatprep.subr.bf16.mxu0 0
    %288 = vmatpush1.bf16.msra.mxu0 0
    %289 = vmatprep.subr.bf16.mxu0 0
    %290 = vmatpush1.bf16.msra.mxu0 0
    %291 = vmatprep.subr.bf16.mxu0 0
    %292 = vmatpush1.bf16.msra.mxu0 0
    %293 = vmatprep.subr.bf16.mxu0 0
    %294 = vmatpush1.bf16.msra.mxu0 0
    %295 = vmatprep.subr.bf16.mxu0 0
    %296 = vmatpush1.bf16.msra.mxu0 0
    %297 = vmatprep.subr.bf16.mxu0 0
    %298 = vmatpush1.bf16.msra.mxu0 0
    %299 = vmatprep.mubr.bf16.mxu0 0
    %300 = vmatmul.mubr.bf16.gmra.mrb[0].mxu0 %v265
    %v301 = vpop.f32.mrb[0].mxu0
    %v302 = vadd.f32 %v250, %v301
    %v303 = vpop.f32.mrb[0].mxu0
    %v304 = vpop.f32.mrb[0].mxu0
    %v305 = vadd.f32 %v250, %v304
    %v306 = vpop.f32.mrb[0].mxu0
    %307 = vdwg.mxu0
    %v308 = vpack.c.bf16 %v305, %v302
    %v310 = vunpack.c.l.b16 %v308
    %v311 = vunpack.c.h.b16 %v308
    %v312 = vpack.c.b16 %v310, %v310
    %v313 = vpack.c.b16 %v311, %v311
    %314 = vrot.lane.b32.xlu0 %v312, 96
    %v315 = vpop.permute.xlu0 %314
    %vm316 = vcmask 64512
    %v318 = vsel %vm316, %v312, 0
    %v321 = vsel %vm316, %v315, 0
    %323 = vmatprep.subr.bf16.mxu0 0
    %324 = vmatpush1.bf16.xpose.msra.mxu0 %v321
    %325 = vmatprep.subr.bf16.mxu0 0
    %326 = vmatpush1.bf16.xpose.msra.mxu0 0
    %327 = vmatprep.subr.bf16.mxu0 0
    %328 = vmatpush1.bf16.xpose.msra.mxu0 0
    %329 = vmatprep.subr.bf16.mxu0 0
    %330 = vmatpush1.bf16.xpose.msra.mxu0 0
    %331 = vmatprep.subr.bf16.mxu0 0
    %332 = vmatpush1.bf16.xpose.msra.mxu0 0
    %333 = vmatprep.subr.bf16.mxu0 0
    %334 = vmatpush1.bf16.xpose.msra.mxu0 0
    %335 = vmatprep.subr.bf16.mxu0 0
    %336 = vmatpush1.bf16.xpose.msra.mxu0 0
    %337 = vmatprep.subr.bf16.mxu0 0
    %338 = vmatpush1.bf16.xpose.msra.mxu0 0
    %339 = vmatprep.subr.bf16.mxu0 0
    %340 = vmatpush1.bf16.xpose.msra.mxu0 0
    %341 = vmatprep.subr.bf16.mxu0 0
    %342 = vmatpush1.bf16.xpose.msra.mxu0 0
    %343 = vmatprep.subr.bf16.mxu0 0
    %344 = vmatpush1.bf16.xpose.msra.mxu0 0
    %345 = vmatprep.subr.bf16.mxu0 0
    %346 = vmatpush1.bf16.xpose.msra.mxu0 0
    %347 = vmatprep.subr.bf16.mxu0 0
    %348 = vmatpush1.bf16.xpose.msra.mxu0 0
    %349 = vmatprep.subr.bf16.mxu0 0
    %350 = vmatpush1.bf16.xpose.msra.mxu0 0
    %351 = vmatprep.subr.bf16.mxu0 0
    %352 = vmatpush1.bf16.xpose.msra.mxu0 0
    %353 = vmatprep.subr.bf16.mxu0 0
    %354 = vmatpush1.bf16.xpose.msra.mxu0 0
    %355 = vmatprep.mubr.bf16.mxu0 0
    %356 = vmatmul.mubr.bf16.gmra.mrb[0].mxu0 %v318
    %v357 = vpop.f32.mrb[0].mxu0
    %v358 = vadd.f32 0.0, %v357
    %v359 = vpop.f32.mrb[0].mxu0
    %v360 = vpop.f32.mrb[0].mxu0
    %v361 = vpop.f32.mrb[0].mxu0
    %362 = vdwg.mxu0
    %363 = vrot.lane.b32.xlu0 %v313, 96
    %v364 = vpop.permute.xlu0 %363
    %v366 = vsel %vm316, %v313, 0
    %v369 = vsel %vm316, %v364, 0
    %371 = vmatprep.subr.bf16.mxu0 0
    %372 = vmatpush1.bf16.xpose.msra.mxu0 %v369
    %373 = vmatprep.subr.bf16.mxu0 0
    %374 = vmatpush1.bf16.xpose.msra.mxu0 0
    %375 = vmatprep.subr.bf16.mxu0 0
    %376 = vmatpush1.bf16.xpose.msra.mxu0 0
    %377 = vmatprep.subr.bf16.mxu0 0
    %378 = vmatpush1.bf16.xpose.msra.mxu0 0
    %379 = vmatprep.subr.bf16.mxu0 0
    %380 = vmatpush1.bf16.xpose.msra.mxu0 0
    %381 = vmatprep.subr.bf16.mxu0 0
    %382 = vmatpush1.bf16.xpose.msra.mxu0 0
    %383 = vmatprep.subr.bf16.mxu0 0
    %384 = vmatpush1.bf16.xpose.msra.mxu0 0
    %385 = vmatprep.subr.bf16.mxu0 0
    %386 = vmatpush1.bf16.xpose.msra.mxu0 0
    %387 = vmatprep.subr.bf16.mxu0 0
    %388 = vmatpush1.bf16.xpose.msra.mxu0 0
    %389 = vmatprep.subr.bf16.mxu0 0
    %390 = vmatpush1.bf16.xpose.msra.mxu0 0
    %391 = vmatprep.subr.bf16.mxu0 0
    %392 = vmatpush1.bf16.xpose.msra.mxu0 0
    %393 = vmatprep.subr.bf16.mxu0 0
    %394 = vmatpush1.bf16.xpose.msra.mxu0 0
    %395 = vmatprep.subr.bf16.mxu0 0
    %396 = vmatpush1.bf16.xpose.msra.mxu0 0
    %397 = vmatprep.subr.bf16.mxu0 0
    %398 = vmatpush1.bf16.xpose.msra.mxu0 0
    %399 = vmatprep.subr.bf16.mxu0 0
    %400 = vmatpush1.bf16.xpose.msra.mxu0 0
    %401 = vmatprep.subr.bf16.mxu0 0
    %402 = vmatpush1.bf16.xpose.msra.mxu0 0
    %403 = vmatprep.mubr.bf16.mxu0 0
    %404 = vmatmul.mubr.bf16.gmra.mrb[0].mxu0 %v366
    %v405 = vpop.f32.mrb[0].mxu0
    %v406 = vadd.f32 0.0, %v405
    %v407 = vpop.f32.mrb[0].mxu0
    %v408 = vpop.f32.mrb[0].mxu0
    %v409 = vpop.f32.mrb[0].mxu0
    %410 = vdwg.mxu0
    %v411 = vsel %vm316, %v358, -inf
    %412 = vmax.xlane.f32.xlu0 %v411
    %v413 = vpop.xlane.xlu0 %412
    %v414 = vsel %vm316, %v406, -inf
    %415 = vmax.xlane.f32.xlu0 %v414
    %v416 = vpop.xlane.xlu0 %415
    %v417 = vsub.f32 %v358, %v413
    %v418 = vsub.f32 %v406, %v416
    %v419 = vmul.f32 %v417, 1.442695
    %v420 = vpow.pop %v419
    %v421 = vmul.f32 %v418, 1.442695
    %v422 = vpow.pop %v421
    %v423 = vsel %vm316, %v420, 0.0
    %424 = vadd.xlane.f32.xlu0 %v423
    %v425 = vpop.xlane.xlu0 %424
    %v426 = vsel %vm316, %v422, 0.0
    %427 = vadd.xlane.f32.xlu0 %v426
    %v428 = vpop.xlane.xlu0 %427
    %v429 = vrcp.pop %v425
    %v430 = vrcp.pop %v428
    %v431 = vmul.f32 %v420, %v429
    %v432 = vmul.f32 %v422, %v430
    %v433 = vpack.c.bf16 %v431, %v431
    %v434 = vpack.c.bf16 %v432, %v432
    %435 = vrot.lane.b32.xlu0 %v312, 64
    %v436 = vpop.permute.xlu0 %435
    %v438 = vsel %vm316, %v433, 0
    %vm440 = vcmask 1043456
    %v442 = vsel %vm440, %v436, 0
    %444 = vmatprep.subr.bf16.mxu0 0
    %445 = vmatpush1.bf16.msra.mxu0 %v442
    %446 = vmatprep.subr.bf16.mxu0 0
    %447 = vmatpush1.bf16.msra.mxu0 0
    %448 = vmatprep.subr.bf16.mxu0 0
    %449 = vmatpush1.bf16.msra.mxu0 0
    %450 = vmatprep.subr.bf16.mxu0 0
    %451 = vmatpush1.bf16.msra.mxu0 0
    %452 = vmatprep.subr.bf16.mxu0 0
    %453 = vmatpush1.bf16.msra.mxu0 0
    %454 = vmatprep.subr.bf16.mxu0 0
    %455 = vmatpush1.bf16.msra.mxu0 0
    %456 = vmatprep.subr.bf16.mxu0 0
    %457 = vmatpush1.bf16.msra.mxu0 0
    %458 = vmatprep.subr.bf16.mxu0 0
    %459 = vmatpush1.bf16.msra.mxu0 0
    %460 = vmatprep.subr.bf16.mxu0 0
    %461 = vmatpush1.bf16.msra.mxu0 0
    %462 = vmatprep.subr.bf16.mxu0 0
    %463 = vmatpush1.bf16.msra.mxu0 0
    %464 = vmatprep.subr.bf16.mxu0 0
    %465 = vmatpush1.bf16.msra.mxu0 0
    %466 = vmatprep.subr.bf16.mxu0 0
    %467 = vmatpush1.bf16.msra.mxu0 0
    %468 = vmatprep.subr.bf16.mxu0 0
    %469 = vmatpush1.bf16.msra.mxu0 0
    %470 = vmatprep.subr.bf16.mxu0 0
    %471 = vmatpush1.bf16.msra.mxu0 0
    %472 = vmatprep.subr.bf16.mxu0 0
    %473 = vmatpush1.bf16.msra.mxu0 0
    %474 = vmatprep.subr.bf16.mxu0 0
    %475 = vmatpush1.bf16.msra.mxu0 0
    %476 = vmatprep.mubr.bf16.mxu0 0
    %477 = vmatmul.mubr.bf16.gmra.mrb[0].mxu0 %v438
    %v478 = vpop.f32.mrb[0].mxu0
    %v479 = vadd.f32 0.0, %v478
    %v480 = vpop.f32.mrb[0].mxu0
    %v481 = vpop.f32.mrb[0].mxu0
    %v482 = vpop.f32.mrb[0].mxu0
    %483 = vdwg.mxu0
    %484 = vrot.lane.b32.xlu0 %v313, 64
    %v485 = vpop.permute.xlu0 %484
    %v487 = vsel %vm316, %v434, 0
    %v490 = vsel %vm440, %v485, 0
    %492 = vmatprep.subr.bf16.mxu0 0
    %493 = vmatpush1.bf16.msra.mxu0 %v490
    %494 = vmatprep.subr.bf16.mxu0 0
    %495 = vmatpush1.bf16.msra.mxu0 0
    %496 = vmatprep.subr.bf16.mxu0 0
    %497 = vmatpush1.bf16.msra.mxu0 0
    %498 = vmatprep.subr.bf16.mxu0 0
    %499 = vmatpush1.bf16.msra.mxu0 0
    %500 = vmatprep.subr.bf16.mxu0 0
    %501 = vmatpush1.bf16.msra.mxu0 0
    %502 = vmatprep.subr.bf16.mxu0 0
    %503 = vmatpush1.bf16.msra.mxu0 0
    %504 = vmatprep.subr.bf16.mxu0 0
    %505 = vmatpush1.bf16.msra.mxu0 0
    %506 = vmatprep.subr.bf16.mxu0 0
    %507 = vmatpush1.bf16.msra.mxu0 0
    %508 = vmatprep.subr.bf16.mxu0 0
    %509 = vmatpush1.bf16.msra.mxu0 0
    %510 = vmatprep.subr.bf16.mxu0 0
    %511 = vmatpush1.bf16.msra.mxu0 0
    %512 = vmatprep.subr.bf16.mxu0 0
    %513 = vmatpush1.bf16.msra.mxu0 0
    %514 = vmatprep.subr.bf16.mxu0 0
    %515 = vmatpush1.bf16.msra.mxu0 0
    %516 = vmatprep.subr.bf16.mxu0 0
    %517 = vmatpush1.bf16.msra.mxu0 0
    %518 = vmatprep.subr.bf16.mxu0 0
    %519 = vmatpush1.bf16.msra.mxu0 0
    %520 = vmatprep.subr.bf16.mxu0 0
    %521 = vmatpush1.bf16.msra.mxu0 0
    %522 = vmatprep.subr.bf16.mxu0 0
    %523 = vmatpush1.bf16.msra.mxu0 0
    %524 = vmatprep.mubr.bf16.mxu0 0
    %525 = vmatmul.mubr.bf16.gmra.mrb[0].mxu0 %v487
    %v526 = vpop.f32.mrb[0].mxu0
    %v527 = vadd.f32 0.0, %v526
    %v528 = vpop.f32.mrb[0].mxu0
    %v529 = vpop.f32.mrb[0].mxu0
    %v530 = vpop.f32.mrb[0].mxu0
    %531 = vdwg.mxu0
    %v532 = vpack.c.bf16 %v527, %v479
    %v533 = vld [vmem:[%s7] sm:$0xf]
    %534 = vrot.lane.b32.xlu0 %v312, 120
    %v535 = vpop.permute.xlu0 %534
    %536 = vrot.lane.b32.xlu0 %v312, 88
    %v537 = vpop.permute.xlu0 %536
    %v539 = vsel %vm316, %v535, 0
    %v542 = vsel %vm316, %v537, 0
    %544 = vmatprep.subr.bf16.mxu0 0
    %545 = vmatpush1.bf16.xpose.msra.mxu0 %v542
    %546 = vmatprep.subr.bf16.mxu0 0
    %547 = vmatpush1.bf16.xpose.msra.mxu0 0
    %548 = vmatprep.subr.bf16.mxu0 0
    %549 = vmatpush1.bf16.xpose.msra.mxu0 0
    %550 = vmatprep.subr.bf16.mxu0 0
    %551 = vmatpush1.bf16.xpose.msra.mxu0 0
    %552 = vmatprep.subr.bf16.mxu0 0
    %553 = vmatpush1.bf16.xpose.msra.mxu0 0
    %554 = vmatprep.subr.bf16.mxu0 0
    %555 = vmatpush1.bf16.xpose.msra.mxu0 0
    %556 = vmatprep.subr.bf16.mxu0 0
    %557 = vmatpush1.bf16.xpose.msra.mxu0 0
    %558 = vmatprep.subr.bf16.mxu0 0
    %559 = vmatpush1.bf16.xpose.msra.mxu0 0
    %560 = vmatprep.subr.bf16.mxu0 0
    %561 = vmatpush1.bf16.xpose.msra.mxu0 0
    %562 = vmatprep.subr.bf16.mxu0 0
    %563 = vmatpush1.bf16.xpose.msra.mxu0 0
    %564 = vmatprep.subr.bf16.mxu0 0
    %565 = vmatpush1.bf16.xpose.msra.mxu0 0
    %566 = vmatprep.subr.bf16.mxu0 0
    %567 = vmatpush1.bf16.xpose.msra.mxu0 0
    %568 = vmatprep.subr.bf16.mxu0 0
    %569 = vmatpush1.bf16.xpose.msra.mxu0 0
    %570 = vmatprep.subr.bf16.mxu0 0
    %571 = vmatpush1.bf16.xpose.msra.mxu0 0
    %572 = vmatprep.subr.bf16.mxu0 0
    %573 = vmatpush1.bf16.xpose.msra.mxu0 0
    %574 = vmatprep.subr.bf16.mxu0 0
    %575 = vmatpush1.bf16.xpose.msra.mxu0 0
    %576 = vmatprep.mubr.bf16.mxu0 0
    %577 = vmatmul.mubr.bf16.gmra.mrb[0].mxu0 %v539
    %v578 = vpop.f32.mrb[0].mxu0
    %v579 = vadd.f32 0.0, %v578
    %v580 = vpop.f32.mrb[0].mxu0
    %v581 = vpop.f32.mrb[0].mxu0
    %v582 = vpop.f32.mrb[0].mxu0
    %583 = vdwg.mxu0
    %584 = vrot.lane.b32.xlu0 %v313, 120
    %v585 = vpop.permute.xlu0 %584
    %586 = vrot.lane.b32.xlu0 %v313, 88
    %v587 = vpop.permute.xlu0 %586
    %v589 = vsel %vm316, %v585, 0
    %v592 = vsel %vm316, %v587, 0
    %594 = vmatprep.subr.bf16.mxu0 0
    %595 = vmatpush1.bf16.xpose.msra.mxu0 %v592
    %596 = vmatprep.subr.bf16.mxu0 0
    %597 = vmatpush1.bf16.xpose.msra.mxu0 0
    %598 = vmatprep.subr.bf16.mxu0 0
    %599 = vmatpush1.bf16.xpose.msra.mxu0 0
    %600 = vmatprep.subr.bf16.mxu0 0
    %601 = vmatpush1.bf16.xpose.msra.mxu0 0
    %602 = vmatprep.subr.bf16.mxu0 0
    %603 = vmatpush1.bf16.xpose.msra.mxu0 0
    %604 = vmatprep.subr.bf16.mxu0 0
    %605 = vmatpush1.bf16.xpose.msra.mxu0 0
    %606 = vmatprep.subr.bf16.mxu0 0
    %607 = vmatpush1.bf16.xpose.msra.mxu0 0
    %608 = vmatprep.subr.bf16.mxu0 0
    %609 = vmatpush1.bf16.xpose.msra.mxu0 0
    %610 = vmatprep.subr.bf16.mxu0 0
    %611 = vmatpush1.bf16.xpose.msra.mxu0 0
    %612 = vmatprep.subr.bf16.mxu0 0
    %613 = vmatpush1.bf16.xpose.msra.mxu0 0
    %614 = vmatprep.subr.bf16.mxu0 0
    %615 = vmatpush1.bf16.xpose.msra.mxu0 0
    %616 = vmatprep.subr.bf16.mxu0 0
    %617 = vmatpush1.bf16.xpose.msra.mxu0 0
    %618 = vmatprep.subr.bf16.mxu0 0
    %619 = vmatpush1.bf16.xpose.msra.mxu0 0
    %620 = vmatprep.subr.bf16.mxu0 0
    %621 = vmatpush1.bf16.xpose.msra.mxu0 0
    %622 = vmatprep.subr.bf16.mxu0 0
    %623 = vmatpush1.bf16.xpose.msra.mxu0 0
    %624 = vmatprep.subr.bf16.mxu0 0
    %625 = vmatpush1.bf16.xpose.msra.mxu0 0
    %626 = vmatprep.mubr.bf16.mxu0 0
    %627 = vmatmul.mubr.bf16.gmra.mrb[0].mxu0 %v589
    %v628 = vpop.f32.mrb[0].mxu0
    %v629 = vadd.f32 0.0, %v628
    %v630 = vpop.f32.mrb[0].mxu0
    %v631 = vpop.f32.mrb[0].mxu0
    %v632 = vpop.f32.mrb[0].mxu0
    %633 = vdwg.mxu0
    %v634 = vsel %vm316, %v579, -inf
    %635 = vmax.xlane.f32.xlu0 %v634
    %v636 = vpop.xlane.xlu0 %635
    %v637 = vsel %vm316, %v629, -inf
    %638 = vmax.xlane.f32.xlu0 %v637
    %v639 = vpop.xlane.xlu0 %638
    %v640 = vsub.f32 %v579, %v636
    %v641 = vsub.f32 %v629, %v639
    %v642 = vmul.f32 %v640, 1.442695
    %v643 = vpow.pop %v642
    %v644 = vmul.f32 %v641, 1.442695
    %v645 = vpow.pop %v644
    %v646 = vsel %vm316, %v643, 0.0
    %647 = vadd.xlane.f32.xlu0 %v646
    %v648 = vpop.xlane.xlu0 %647
    %v649 = vsel %vm316, %v645, 0.0
    %650 = vadd.xlane.f32.xlu0 %v649
    %v651 = vpop.xlane.xlu0 %650
    %v652 = vrcp.pop %v648
    %v653 = vrcp.pop %v651
    %v654 = vmul.f32 %v643, %v652
    %v655 = vmul.f32 %v645, %v653
    %v656 = vpack.c.bf16 %v654, %v654
    %v657 = vpack.c.bf16 %v655, %v655
    %658 = vrot.lane.b32.xlu0 %v312, 56
    %v659 = vpop.permute.xlu0 %658
    %v661 = vsel %vm316, %v656, 0
    %v664 = vsel %vm440, %v659, 0
    %666 = vmatprep.subr.bf16.mxu0 0
    %667 = vmatpush1.bf16.msra.mxu0 %v664
    %668 = vmatprep.subr.bf16.mxu0 0
    %669 = vmatpush1.bf16.msra.mxu0 0
    %670 = vmatprep.subr.bf16.mxu0 0
    %671 = vmatpush1.bf16.msra.mxu0 0
    %672 = vmatprep.subr.bf16.mxu0 0
    %673 = vmatpush1.bf16.msra.mxu0 0
    %674 = vmatprep.subr.bf16.mxu0 0
    %675 = vmatpush1.bf16.msra.mxu0 0
    %676 = vmatprep.subr.bf16.mxu0 0
    %677 = vmatpush1.bf16.msra.mxu0 0
    %678 = vmatprep.subr.bf16.mxu0 0
    %679 = vmatpush1.bf16.msra.mxu0 0
    %680 = vmatprep.subr.bf16.mxu0 0
    %681 = vmatpush1.bf16.msra.mxu0 0
    %682 = vmatprep.subr.bf16.mxu0 0
    %683 = vmatpush1.bf16.msra.mxu0 0
    %684 = vmatprep.subr.bf16.mxu0 0
    %685 = vmatpush1.bf16.msra.mxu0 0
    %686 = vmatprep.subr.bf16.mxu0 0
    %687 = vmatpush1.bf16.msra.mxu0 0
    %688 = vmatprep.subr.bf16.mxu0 0
    %689 = vmatpush1.bf16.msra.mxu0 0
    %690 = vmatprep.subr.bf16.mxu0 0
    %691 = vmatpush1.bf16.msra.mxu0 0
    %692 = vmatprep.subr.bf16.mxu0 0
    %693 = vmatpush1.bf16.msra.mxu0 0
    %694 = vmatprep.subr.bf16.mxu0 0
    %695 = vmatpush1.bf16.msra.mxu0 0
    %696 = vmatprep.subr.bf16.mxu0 0
    %697 = vmatpush1.bf16.msra.mxu0 0
    %698 = vmatprep.mubr.bf16.mxu0 0
    %699 = vmatmul.mubr.bf16.gmra.mrb[0].mxu0 %v661
    %v700 = vpop.f32.mrb[0].mxu0
    %v701 = vadd.f32 0.0, %v700
    %v702 = vpop.f32.mrb[0].mxu0
    %v703 = vpop.f32.mrb[0].mxu0
    %v704 = vpop.f32.mrb[0].mxu0
    %705 = vdwg.mxu0
    %706 = vrot.lane.b32.xlu0 %v313, 56
    %v707 = vpop.permute.xlu0 %706
    %v709 = vsel %vm316, %v657, 0
    %v712 = vsel %vm440, %v707, 0
    %714 = vmatprep.subr.bf16.mxu0 0
    %715 = vmatpush1.bf16.msra.mxu0 %v712
    %716 = vmatprep.subr.bf16.mxu0 0
    %717 = vmatpush1.bf16.msra.mxu0 0
    %718 = vmatprep.subr.bf16.mxu0 0
    %719 = vmatpush1.bf16.msra.mxu0 0
    %720 = vmatprep.subr.bf16.mxu0 0
    %721 = vmatpush1.bf16.msra.mxu0 0
    %722 = vmatprep.subr.bf16.mxu0 0
    %723 = vmatpush1.bf16.msra.mxu0 0
    %724 = vmatprep.subr.bf16.mxu0 0
    %725 = vmatpush1.bf16.msra.mxu0 0
    %726 = vmatprep.subr.bf16.mxu0 0
    %727 = vmatpush1.bf16.msra.mxu0 0
    %728 = vmatprep.subr.bf16.mxu0 0
    %729 = vmatpush1.bf16.msra.mxu0 0
    %730 = vmatprep.subr.bf16.mxu0 0
    %731 = vmatpush1.bf16.msra.mxu0 0
    %732 = vmatprep.subr.bf16.mxu0 0
    %733 = vmatpush1.bf16.msra.mxu0 0
    %734 = vmatprep.subr.bf16.mxu0 0
    %735 = vmatpush1.bf16.msra.mxu0 0
    %736 = vmatprep.subr.bf16.mxu0 0
    %737 = vmatpush1.bf16.msra.mxu0 0
    %738 = vmatprep.subr.bf16.mxu0 0
    %739 = vmatpush1.bf16.msra.mxu0 0
    %740 = vmatprep.subr.bf16.mxu0 0
    %741 = vmatpush1.bf16.msra.mxu0 0
    %742 = vmatprep.subr.bf16.mxu0 0
    %743 = vmatpush1.bf16.msra.mxu0 0
    %744 = vmatprep.subr.bf16.mxu0 0
    %745 = vmatpush1.bf16.msra.mxu0 0
    %746 = vmatprep.mubr.bf16.mxu0 0
    %747 = vmatmul.mubr.bf16.gmra.mrb[0].mxu0 %v709
    %v748 = vpop.f32.mrb[0].mxu0
    %v749 = vadd.f32 0.0, %v748
    %v750 = vpop.f32.mrb[0].mxu0
    %v751 = vpop.f32.mrb[0].mxu0
    %v752 = vpop.f32.mrb[0].mxu0
    %753 = vdwg.mxu0
    %v754 = vpack.c.bf16 %v749, %v701
    %s755 = scalar_lea.vmem %s7, 4
    %v756 = vld [vmem:[%s755] sm:$0xf]
    %v758 = vsel %vm316, %v754, 0
    %v761 = vsel %vm440, %v756, 0
    %763 = vmatprep.subr.bf16.mxu0 0
    %764 = vmatpush1.bf16.msra.mxu0 %v761
    %765 = vmatprep.subr.bf16.mxu0 0
    %766 = vmatpush1.bf16.msra.mxu0 0
    %767 = vmatprep.subr.bf16.mxu0 0
    %768 = vmatpush1.bf16.msra.mxu0 0
    %769 = vmatprep.subr.bf16.mxu0 0
    %770 = vmatpush1.bf16.msra.mxu0 0
    %771 = vmatprep.subr.bf16.mxu0 0
    %772 = vmatpush1.bf16.msra.mxu0 0
    %773 = vmatprep.subr.bf16.mxu0 0
    %774 = vmatpush1.bf16.msra.mxu0 0
    %775 = vmatprep.subr.bf16.mxu0 0
    %776 = vmatpush1.bf16.msra.mxu0 0
    %777 = vmatprep.subr.bf16.mxu0 0
    %778 = vmatpush1.bf16.msra.mxu0 0
    %779 = vmatprep.subr.bf16.mxu0 0
    %780 = vmatpush1.bf16.msra.mxu0 0
    %781 = vmatprep.subr.bf16.mxu0 0
    %782 = vmatpush1.bf16.msra.mxu0 0
    %783 = vmatprep.subr.bf16.mxu0 0
    %784 = vmatpush1.bf16.msra.mxu0 0
    %785 = vmatprep.subr.bf16.mxu0 0
    %786 = vmatpush1.bf16.msra.mxu0 0
    %787 = vmatprep.subr.bf16.mxu0 0
    %788 = vmatpush1.bf16.msra.mxu0 0
    %789 = vmatprep.subr.bf16.mxu0 0
    %790 = vmatpush1.bf16.msra.mxu0 0
    %791 = vmatprep.subr.bf16.mxu0 0
    %792 = vmatpush1.bf16.msra.mxu0 0
    %793 = vmatprep.subr.bf16.mxu0 0
    %794 = vmatpush1.bf16.msra.mxu0 0
    %795 = vmatprep.mubr.bf16.mxu0 0
    %796 = vmatmul.mubr.bf16.gmra.mrb[0].mxu0 %v758
    %v797 = vpop.f32.mrb[0].mxu0
    %v798 = vadd.f32 0.0, %v797
    %v799 = vpop.f32.mrb[0].mxu0
    %v800 = vpop.f32.mrb[0].mxu0
    %v801 = vadd.f32 0.0, %v800
    %v802 = vpop.f32.mrb[0].mxu0
    %803 = vdwg.mxu0
    %v805 = vsel %vm316, %v532, 0
    %v808 = vsel %vm440, %v533, 0
    %810 = vmatprep.subr.bf16.mxu0 0
    %811 = vmatpush1.bf16.msra.mxu0 %v808
    %812 = vmatprep.subr.bf16.mxu0 0
    %813 = vmatpush1.bf16.msra.mxu0 0
    %814 = vmatprep.subr.bf16.mxu0 0
    %815 = vmatpush1.bf16.msra.mxu0 0
    %816 = vmatprep.subr.bf16.mxu0 0
    %817 = vmatpush1.bf16.msra.mxu0 0
    %818 = vmatprep.subr.bf16.mxu0 0
    %819 = vmatpush1.bf16.msra.mxu0 0
    %820 = vmatprep.subr.bf16.mxu0 0
    %821 = vmatpush1.bf16.msra.mxu0 0
    %822 = vmatprep.subr.bf16.mxu0 0
    %823 = vmatpush1.bf16.msra.mxu0 0
    %824 = vmatprep.subr.bf16.mxu0 0
    %825 = vmatpush1.bf16.msra.mxu0 0
    %826 = vmatprep.subr.bf16.mxu0 0
    %827 = vmatpush1.bf16.msra.mxu0 0
    %828 = vmatprep.subr.bf16.mxu0 0
    %829 = vmatpush1.bf16.msra.mxu0 0
    %830 = vmatprep.subr.bf16.mxu0 0
    %831 = vmatpush1.bf16.msra.mxu0 0
    %832 = vmatprep.subr.bf16.mxu0 0
    %833 = vmatpush1.bf16.msra.mxu0 0
    %834 = vmatprep.subr.bf16.mxu0 0
    %835 = vmatpush1.bf16.msra.mxu0 0
    %836 = vmatprep.subr.bf16.mxu0 0
    %837 = vmatpush1.bf16.msra.mxu0 0
    %838 = vmatprep.subr.bf16.mxu0 0
    %839 = vmatpush1.bf16.msra.mxu0 0
    %840 = vmatprep.subr.bf16.mxu0 0
    %841 = vmatpush1.bf16.msra.mxu0 0
    %842 = vmatprep.mubr.bf16.mxu0 0
    %843 = vmatmul.mubr.bf16.gmra.mrb[0].mxu0 %v805
    %v844 = vpop.f32.mrb[0].mxu0
    %v845 = vadd.f32 %v798, %v844
    %v846 = vpop.f32.mrb[0].mxu0
    %v847 = vpop.f32.mrb[0].mxu0
    %v848 = vadd.f32 %v801, %v847
    %v849 = vpop.f32.mrb[0].mxu0
    %850 = vdwg.mxu0
    %851 = vrot.lane.b32.xlu0 %v312, 112
    %v852 = vpop.permute.xlu0 %851
    %853 = vrot.lane.b32.xlu0 %v312, 80
    %v854 = vpop.permute.xlu0 %853
    %v856 = vsel %vm316, %v852, 0
    %v859 = vsel %vm316, %v854, 0
    %861 = vmatprep.subr.bf16.mxu0 0
    %862 = vmatpush1.bf16.xpose.msra.mxu0 %v859
    %863 = vmatprep.subr.bf16.mxu0 0
    %864 = vmatpush1.bf16.xpose.msra.mxu0 0
    %865 = vmatprep.subr.bf16.mxu0 0
    %866 = vmatpush1.bf16.xpose.msra.mxu0 0
    %867 = vmatprep.subr.bf16.mxu0 0
    %868 = vmatpush1.bf16.xpose.msra.mxu0 0
    %869 = vmatprep.subr.bf16.mxu0 0
    %870 = vmatpush1.bf16.xpose.msra.mxu0 0
    %871 = vmatprep.subr.bf16.mxu0 0
    %872 = vmatpush1.bf16.xpose.msra.mxu0 0
    %873 = vmatprep.subr.bf16.mxu0 0
    %874 = vmatpush1.bf16.xpose.msra.mxu0 0
    %875 = vmatprep.subr.bf16.mxu0 0
    %876 = vmatpush1.bf16.xpose.msra.mxu0 0
    %877 = vmatprep.subr.bf16.mxu0 0
    %878 = vmatpush1.bf16.xpose.msra.mxu0 0
    %879 = vmatprep.subr.bf16.mxu0 0
    %880 = vmatpush1.bf16.xpose.msra.mxu0 0
    %881 = vmatprep.subr.bf16.mxu0 0
    %882 = vmatpush1.bf16.xpose.msra.mxu0 0
    %883 = vmatprep.subr.bf16.mxu0 0
    %884 = vmatpush1.bf16.xpose.msra.mxu0 0
    %885 = vmatprep.subr.bf16.mxu0 0
    %886 = vmatpush1.bf16.xpose.msra.mxu0 0
    %887 = vmatprep.subr.bf16.mxu0 0
    %888 = vmatpush1.bf16.xpose.msra.mxu0 0
    %889 = vmatprep.subr.bf16.mxu0 0
    %890 = vmatpush1.bf16.xpose.msra.mxu0 0
    %891 = vmatprep.subr.bf16.mxu0 0
    %892 = vmatpush1.bf16.xpose.msra.mxu0 0
    %893 = vmatprep.mubr.bf16.mxu0 0
    %894 = vmatmul.mubr.bf16.gmra.mrb[0].mxu0 %v856
    %v895 = vpop.f32.mrb[0].mxu0
    %v896 = vadd.f32 0.0, %v895
    %v897 = vpop.f32.mrb[0].mxu0
    %v898 = vpop.f32.mrb[0].mxu0
    %v899 = vpop.f32.mrb[0].mxu0
    %900 = vdwg.mxu0
    %901 = vrot.lane.b32.xlu0 %v313, 112
    %v902 = vpop.permute.xlu0 %901
    %903 = vrot.lane.b32.xlu0 %v313, 80
    %v904 = vpop.permute.xlu0 %903
    %v906 = vsel %vm316, %v902, 0
    %v909 = vsel %vm316, %v904, 0
    %911 = vmatprep.subr.bf16.mxu0 0
    %912 = vmatpush1.bf16.xpose.msra.mxu0 %v909
    %913 = vmatprep.subr.bf16.mxu0 0
    %914 = vmatpush1.bf16.xpose.msra.mxu0 0
    %915 = vmatprep.subr.bf16.mxu0 0
    %916 = vmatpush1.bf16.xpose.msra.mxu0 0
    %917 = vmatprep.subr.bf16.mxu0 0
    %918 = vmatpush1.bf16.xpose.msra.mxu0 0
    %919 = vmatprep.subr.bf16.mxu0 0
    %920 = vmatpush1.bf16.xpose.msra.mxu0 0
    %921 = vmatprep.subr.bf16.mxu0 0
    %922 = vmatpush1.bf16.xpose.msra.mxu0 0
    %923 = vmatprep.subr.bf16.mxu0 0
    %924 = vmatpush1.bf16.xpose.msra.mxu0 0
    %925 = vmatprep.subr.bf16.mxu0 0
    %926 = vmatpush1.bf16.xpose.msra.mxu0 0
    %927 = vmatprep.subr.bf16.mxu0 0
    %928 = vmatpush1.bf16.xpose.msra.mxu0 0
    %929 = vmatprep.subr.bf16.mxu0 0
    %930 = vmatpush1.bf16.xpose.msra.mxu0 0
    %931 = vmatprep.subr.bf16.mxu0 0
    %932 = vmatpush1.bf16.xpose.msra.mxu0 0
    %933 = vmatprep.subr.bf16.mxu0 0
    %934 = vmatpush1.bf16.xpose.msra.mxu0 0
    %935 = vmatprep.subr.bf16.mxu0 0
    %936 = vmatpush1.bf16.xpose.msra.mxu0 0
    %937 = vmatprep.subr.bf16.mxu0 0
    %938 = vmatpush1.bf16.xpose.msra.mxu0 0
    %939 = vmatprep.subr.bf16.mxu0 0
    %940 = vmatpush1.bf16.xpose.msra.mxu0 0
    %941 = vmatprep.subr.bf16.mxu0 0
    %942 = vmatpush1.bf16.xpose.msra.mxu0 0
    %943 = vmatprep.mubr.bf16.mxu0 0
    %944 = vmatmul.mubr.bf16.gmra.mrb[0].mxu0 %v906
    %v945 = vpop.f32.mrb[0].mxu0
    %v946 = vadd.f32 0.0, %v945
    %v947 = vpop.f32.mrb[0].mxu0
    %v948 = vpop.f32.mrb[0].mxu0
    %v949 = vpop.f32.mrb[0].mxu0
    %950 = vdwg.mxu0
    %v951 = vsel %vm316, %v896, -inf
    %952 = vmax.xlane.f32.xlu0 %v951
    %v953 = vpop.xlane.xlu0 %952
    %v954 = vsel %vm316, %v946, -inf
    %955 = vmax.xlane.f32.xlu0 %v954
    %v956 = vpop.xlane.xlu0 %955
    %v957 = vsub.f32 %v896, %v953
    %v958 = vsub.f32 %v946, %v956
    %v959 = vmul.f32 %v957, 1.442695
    %v960 = vpow.pop %v959
    %v961 = vmul.f32 %v958, 1.442695
    %v962 = vpow.pop %v961
    %v963 = vsel %vm316, %v960, 0.0
    %964 = vadd.xlane.f32.xlu0 %v963
    %v965 = vpop.xlane.xlu0 %964
    %v966 = vsel %vm316, %v962, 0.0
    %967 = vadd.xlane.f32.xlu0 %v966
    %v968 = vpop.xlane.xlu0 %967
    %v969 = vrcp.pop %v965
    %v970 = vrcp.pop %v968
    %v971 = vmul.f32 %v960, %v969
    %v972 = vmul.f32 %v962, %v970
    %v973 = vpack.c.bf16 %v971, %v971
    %v974 = vpack.c.bf16 %v972, %v972
    %975 = vrot.lane.b32.xlu0 %v312, 48
    %v976 = vpop.permute.xlu0 %975
    %v978 = vsel %vm316, %v973, 0
    %v981 = vsel %vm440, %v976, 0
    %983 = vmatprep.subr.bf16.mxu0 0
    %984 = vmatpush1.bf16.msra.mxu0 %v981
    %985 = vmatprep.subr.bf16.mxu0 0
    %986 = vmatpush1.bf16.msra.mxu0 0
    %987 = vmatprep.subr.bf16.mxu0 0
    %988 = vmatpush1.bf16.msra.mxu0 0
    %989 = vmatprep.subr.bf16.mxu0 0
    %990 = vmatpush1.bf16.msra.mxu0 0
    %991 = vmatprep.subr.bf16.mxu0 0
    %992 = vmatpush1.bf16.msra.mxu0 0
    %993 = vmatprep.subr.bf16.mxu0 0
    %994 = vmatpush1.bf16.msra.mxu0 0
    %995 = vmatprep.subr.bf16.mxu0 0
    %996 = vmatpush1.bf16.msra.mxu0 0
    %997 = vmatprep.subr.bf16.mxu0 0
    %998 = vmatpush1.bf16.msra.mxu0 0
    %999 = vmatprep.subr.bf16.mxu0 0
    %1000 = vmatpush1.bf16.msra.mxu0 0
    %1001 = vmatprep.subr.bf16.mxu0 0
    %1002 = vmatpush1.bf16.msra.mxu0 0
    %1003 = vmatprep.subr.bf16.mxu0 0
    %1004 = vmatpush1.bf16.msra.mxu0 0
    %1005 = vmatprep.subr.bf16.mxu0 0
    %1006 = vmatpush1.bf16.msra.mxu0 0
    %1007 = vmatprep.subr.bf16.mxu0 0
    %1008 = vmatpush1.bf16.msra.mxu0 0
    %1009 = vmatprep.subr.bf16.mxu0 0
    %1010 = vmatpush1.bf16.msra.mxu0 0
    %1011 = vmatprep.subr.bf16.mxu0 0
    %1012 = vmatpush1.bf16.msra.mxu0 0
    %1013 = vmatprep.subr.bf16.mxu0 0
    %1014 = vmatpush1.bf16.msra.mxu0 0
    %1015 = vmatprep.mubr.bf16.mxu0 0
    %1016 = vmatmul.mubr.bf16.gmra.mrb[0].mxu0 %v978
    %v1017 = vpop.f32.mrb[0].mxu0
    %v1018 = vadd.f32 0.0, %v1017
    %v1019 = vpop.f32.mrb[0].mxu0
    %v1020 = vpop.f32.mrb[0].mxu0
    %v1021 = vpop.f32.mrb[0].mxu0
    %1022 = vdwg.mxu0
    %1023 = vrot.lane.b32.xlu0 %v313, 48
    %v1024 = vpop.permute.xlu0 %1023
    %v1026 = vsel %vm316, %v974, 0
    %v1029 = vsel %vm440, %v1024, 0
    %1031 = vmatprep.subr.bf16.mxu0 0
    %1032 = vmatpush1.bf16.msra.mxu0 %v1029
    %1033 = vmatprep.subr.bf16.mxu0 0
    %1034 = vmatpush1.bf16.msra.mxu0 0
    %1035 = vmatprep.subr.bf16.mxu0 0
    %1036 = vmatpush1.bf16.msra.mxu0 0
    %1037 = vmatprep.subr.bf16.mxu0 0
    %1038 = vmatpush1.bf16.msra.mxu0 0
    %1039 = vmatprep.subr.bf16.mxu0 0
    %1040 = vmatpush1.bf16.msra.mxu0 0
    %1041 = vmatprep.subr.bf16.mxu0 0
    %1042 = vmatpush1.bf16.msra.mxu0 0
    %1043 = vmatprep.subr.bf16.mxu0 0
    %1044 = vmatpush1.bf16.msra.mxu0 0
    %1045 = vmatprep.subr.bf16.mxu0 0
    %1046 = vmatpush1.bf16.msra.mxu0 0
    %1047 = vmatprep.subr.bf16.mxu0 0
    %1048 = vmatpush1.bf16.msra.mxu0 0
    %1049 = vmatprep.subr.bf16.mxu0 0
    %1050 = vmatpush1.bf16.msra.mxu0 0
    %1051 = vmatprep.subr.bf16.mxu0 0
    %1052 = vmatpush1.bf16.msra.mxu0 0
    %1053 = vmatprep.subr.bf16.mxu0 0
    %1054 = vmatpush1.bf16.msra.mxu0 0
    %1055 = vmatprep.subr.bf16.mxu0 0
    %1056 = vmatpush1.bf16.msra.mxu0 0
    %1057 = vmatprep.subr.bf16.mxu0 0
    %1058 = vmatpush1.bf16.msra.mxu0 0
    %1059 = vmatprep.subr.bf16.mxu0 0
    %1060 = vmatpush1.bf16.msra.mxu0 0
    %1061 = vmatprep.subr.bf16.mxu0 0
    %1062 = vmatpush1.bf16.msra.mxu0 0
    %1063 = vmatprep.mubr.bf16.mxu0 0
    %1064 = vmatmul.mubr.bf16.gmra.mrb[0].mxu0 %v1026
    %v1065 = vpop.f32.mrb[0].mxu0
    %v1066 = vadd.f32 0.0, %v1065
    %v1067 = vpop.f32.mrb[0].mxu0
    %v1068 = vpop.f32.mrb[0].mxu0
    %v1069 = vpop.f32.mrb[0].mxu0
    %1070 = vdwg.mxu0
    %v1071 = vpack.c.bf16 %v1066, %v1018
    %s1072 = scalar_lea.vmem %s7, 8
    %v1073 = vld [vmem:[%s1072] sm:$0xf]
    %v1075 = vsel %vm316, %v1071, 0
    %v1078 = vsel %vm440, %v1073, 0
    %1080 = vmatprep.subr.bf16.mxu0 0
    %1081 = vmatpush1.bf16.msra.mxu0 %v1078
    %1082 = vmatprep.subr.bf16.mxu0 0
    %1083 = vmatpush1.bf16.msra.mxu0 0
    %1084 = vmatprep.subr.bf16.mxu0 0
    %1085 = vmatpush1.bf16.msra.mxu0 0
    %1086 = vmatprep.subr.bf16.mxu0 0
    %1087 = vmatpush1.bf16.msra.mxu0 0
    %1088 = vmatprep.subr.bf16.mxu0 0
    %1089 = vmatpush1.bf16.msra.mxu0 0
    %1090 = vmatprep.subr.bf16.mxu0 0
    %1091 = vmatpush1.bf16.msra.mxu0 0
    %1092 = vmatprep.subr.bf16.mxu0 0
    %1093 = vmatpush1.bf16.msra.mxu0 0
    %1094 = vmatprep.subr.bf16.mxu0 0
    %1095 = vmatpush1.bf16.msra.mxu0 0
    %1096 = vmatprep.subr.bf16.mxu0 0
    %1097 = vmatpush1.bf16.msra.mxu0 0
    %1098 = vmatprep.subr.bf16.mxu0 0
    %1099 = vmatpush1.bf16.msra.mxu0 0
    %1100 = vmatprep.subr.bf16.mxu0 0
    %1101 = vmatpush1.bf16.msra.mxu0 0
    %1102 = vmatprep.subr.bf16.mxu0 0
    %1103 = vmatpush1.bf16.msra.mxu0 0
    %1104 = vmatprep.subr.bf16.mxu0 0
    %1105 = vmatpush1.bf16.msra.mxu0 0
    %1106 = vmatprep.subr.bf16.mxu0 0
    %1107 = vmatpush1.bf16.msra.mxu0 0
    %1108 = vmatprep.subr.bf16.mxu0 0
    %1109 = vmatpush1.bf16.msra.mxu0 0
    %1110 = vmatprep.subr.bf16.mxu0 0
    %1111 = vmatpush1.bf16.msra.mxu0 0
    %1112 = vmatprep.mubr.bf16.mxu0 0
    %1113 = vmatmul.mubr.bf16.gmra.mrb[0].mxu0 %v1075
    %v1114 = vpop.f32.mrb[0].mxu0
    %v1115 = vadd.f32 0.0, %v1114
    %v1116 = vpop.f32.mrb[0].mxu0
    %v1117 = vpop.f32.mrb[0].mxu0
    %v1118 = vadd.f32 0.0, %v1117
    %v1119 = vpop.f32.mrb[0].mxu0
    %1120 = vdwg.mxu0
    %v1121 = vadd.f32 %v845, %v1115
    %v1122 = vadd.f32 %v848, %v1118
    %1123 = vrot.lane.b32.xlu0 %v312, 104
    %v1124 = vpop.permute.xlu0 %1123
    %1125 = vrot.lane.b32.xlu0 %v312, 72
    %v1126 = vpop.permute.xlu0 %1125
    %v1128 = vsel %vm316, %v1124, 0
    %v1131 = vsel %vm316, %v1126, 0
    %1133 = vmatprep.subr.bf16.mxu0 0
    %1134 = vmatpush1.bf16.xpose.msra.mxu0 %v1131
    %1135 = vmatprep.subr.bf16.mxu0 0
    %1136 = vmatpush1.bf16.xpose.msra.mxu0 0
    %1137 = vmatprep.subr.bf16.mxu0 0
    %1138 = vmatpush1.bf16.xpose.msra.mxu0 0
    %1139 = vmatprep.subr.bf16.mxu0 0
    %1140 = vmatpush1.bf16.xpose.msra.mxu0 0
    %1141 = vmatprep.subr.bf16.mxu0 0
    %1142 = vmatpush1.bf16.xpose.msra.mxu0 0
    %1143 = vmatprep.subr.bf16.mxu0 0
    %1144 = vmatpush1.bf16.xpose.msra.mxu0 0
    %1145 = vmatprep.subr.bf16.mxu0 0
    %1146 = vmatpush1.bf16.xpose.msra.mxu0 0
    %1147 = vmatprep.subr.bf16.mxu0 0
    %1148 = vmatpush1.bf16.xpose.msra.mxu0 0
    %1149 = vmatprep.subr.bf16.mxu0 0
    %1150 = vmatpush1.bf16.xpose.msra.mxu0 0
    %1151 = vmatprep.subr.bf16.mxu0 0
    %1152 = vmatpush1.bf16.xpose.msra.mxu0 0
    %1153 = vmatprep.subr.bf16.mxu0 0
    %1154 = vmatpush1.bf16.xpose.msra.mxu0 0
    %1155 = vmatprep.subr.bf16.mxu0 0
    %1156 = vmatpush1.bf16.xpose.msra.mxu0 0
    %1157 = vmatprep.subr.bf16.mxu0 0
    %1158 = vmatpush1.bf16.xpose.msra.mxu0 0
    %1159 = vmatprep.subr.bf16.mxu0 0
    %1160 = vmatpush1.bf16.xpose.msra.mxu0 0
    %1161 = vmatprep.subr.bf16.mxu0 0
    %1162 = vmatpush1.bf16.xpose.msra.mxu0 0
    %1163 = vmatprep.subr.bf16.mxu0 0
    %1164 = vmatpush1.bf16.xpose.msra.mxu0 0
    %1165 = vmatprep.mubr.bf16.mxu0 0
    %1166 = vmatmul.mubr.bf16.gmra.mrb[0].mxu0 %v1128
    %v1167 = vpop.f32.mrb[0].mxu0
    %v1168 = vadd.f32 0.0, %v1167
    %v1169 = vpop.f32.mrb[0].mxu0
    %v1170 = vpop.f32.mrb[0].mxu0
    %v1171 = vpop.f32.mrb[0].mxu0
    %1172 = vdwg.mxu0
    %1173 = vrot.lane.b32.xlu0 %v313, 104
    %v1174 = vpop.permute.xlu0 %1173
    %1175 = vrot.lane.b32.xlu0 %v313, 72
    %v1176 = vpop.permute.xlu0 %1175
    %v1178 = vsel %vm316, %v1174, 0
    %v1181 = vsel %vm316, %v1176, 0
    %1183 = vmatprep.subr.bf16.mxu0 0
    %1184 = vmatpush1.bf16.xpose.msra.mxu0 %v1181
    %1185 = vmatprep.subr.bf16.mxu0 0
    %1186 = vmatpush1.bf16.xpose.msra.mxu0 0
    %1187 = vmatprep.subr.bf16.mxu0 0
    %1188 = vmatpush1.bf16.xpose.msra.mxu0 0
    %1189 = vmatprep.subr.bf16.mxu0 0
    %1190 = vmatpush1.bf16.xpose.msra.mxu0 0
    %1191 = vmatprep.subr.bf16.mxu0 0
    %1192 = vmatpush1.bf16.xpose.msra.mxu0 0
    %1193 = vmatprep.subr.bf16.mxu0 0
    %1194 = vmatpush1.bf16.xpose.msra.mxu0 0
    %1195 = vmatprep.subr.bf16.mxu0 0
    %1196 = vmatpush1.bf16.xpose.msra.mxu0 0
    %1197 = vmatprep.subr.bf16.mxu0 0
    %1198 = vmatpush1.bf16.xpose.msra.mxu0 0
    %1199 = vmatprep.subr.bf16.mxu0 0
    %1200 = vmatpush1.bf16.xpose.msra.mxu0 0
    %1201 = vmatprep.subr.bf16.mxu0 0
    %1202 = vmatpush1.bf16.xpose.msra.mxu0 0
    %1203 = vmatprep.subr.bf16.mxu0 0
    %1204 = vmatpush1.bf16.xpose.msra.mxu0 0
    %1205 = vmatprep.subr.bf16.mxu0 0
    %1206 = vmatpush1.bf16.xpose.msra.mxu0 0
    %1207 = vmatprep.subr.bf16.mxu0 0
    %1208 = vmatpush1.bf16.xpose.msra.mxu0 0
    %1209 = vmatprep.subr.bf16.mxu0 0
    %1210 = vmatpush1.bf16.xpose.msra.mxu0 0
    %1211 = vmatprep.subr.bf16.mxu0 0
    %1212 = vmatpush1.bf16.xpose.msra.mxu0 0
    %1213 = vmatprep.subr.bf16.mxu0 0
    %1214 = vmatpush1.bf16.xpose.msra.mxu0 0
    %1215 = vmatprep.mubr.bf16.mxu0 0
    %1216 = vmatmul.mubr.bf16.gmra.mrb[0].mxu0 %v1178
    %v1217 = vpop.f32.mrb[0].mxu0
    %v1218 = vadd.f32 0.0, %v1217
    %v1219 = vpop.f32.mrb[0].mxu0
    %v1220 = vpop.f32.mrb[0].mxu0
    %v1221 = vpop.f32.mrb[0].mxu0
    %1222 = vdwg.mxu0
    %v1223 = vsel %vm316, %v1168, -inf
    %1224 = vmax.xlane.f32.xlu0 %v1223
    %v1225 = vpop.xlane.xlu0 %1224
    %v1226 = vsel %vm316, %v1218, -inf
    %1227 = vmax.xlane.f32.xlu0 %v1226
    %v1228 = vpop.xlane.xlu0 %1227
    %v1229 = vsub.f32 %v1168, %v1225
    %v1230 = vsub.f32 %v1218, %v1228
    %v1231 = vmul.f32 %v1229, 1.442695
    %v1232 = vpow.pop %v1231
    %v1233 = vmul.f32 %v1230, 1.442695
    %v1234 = vpow.pop %v1233
    %v1235 = vsel %vm316, %v1232, 0.0
    %1236 = vadd.xlane.f32.xlu0 %v1235
    %v1237 = vpop.xlane.xlu0 %1236
    %v1238 = vsel %vm316, %v1234, 0.0
    %1239 = vadd.xlane.f32.xlu0 %v1238
    %v1240 = vpop.xlane.xlu0 %1239
    %v1241 = vrcp.pop %v1237
    %v1242 = vrcp.pop %v1240
    %v1243 = vmul.f32 %v1232, %v1241
    %v1244 = vmul.f32 %v1234, %v1242
    %v1245 = vpack.c.bf16 %v1243, %v1243
    %v1246 = vpack.c.bf16 %v1244, %v1244
    %1247 = vrot.lane.b32.xlu0 %v312, 40
    %v1248 = vpop.permute.xlu0 %1247
    %v1250 = vsel %vm316, %v1245, 0
    %v1253 = vsel %vm440, %v1248, 0
    %1255 = vmatprep.subr.bf16.mxu0 0
    %1256 = vmatpush1.bf16.msra.mxu0 %v1253
    %1257 = vmatprep.subr.bf16.mxu0 0
    %1258 = vmatpush1.bf16.msra.mxu0 0
    %1259 = vmatprep.subr.bf16.mxu0 0
    %1260 = vmatpush1.bf16.msra.mxu0 0
    %1261 = vmatprep.subr.bf16.mxu0 0
    %1262 = vmatpush1.bf16.msra.mxu0 0
    %1263 = vmatprep.subr.bf16.mxu0 0
    %1264 = vmatpush1.bf16.msra.mxu0 0
    %1265 = vmatprep.subr.bf16.mxu0 0
    %1266 = vmatpush1.bf16.msra.mxu0 0
    %1267 = vmatprep.subr.bf16.mxu0 0
    %1268 = vmatpush1.bf16.msra.mxu0 0
    %1269 = vmatprep.subr.bf16.mxu0 0
    %1270 = vmatpush1.bf16.msra.mxu0 0
    %1271 = vmatprep.subr.bf16.mxu0 0
    %1272 = vmatpush1.bf16.msra.mxu0 0
    %1273 = vmatprep.subr.bf16.mxu0 0
    %1274 = vmatpush1.bf16.msra.mxu0 0
    %1275 = vmatprep.subr.bf16.mxu0 0
    %1276 = vmatpush1.bf16.msra.mxu0 0
    %1277 = vmatprep.subr.bf16.mxu0 0
    %1278 = vmatpush1.bf16.msra.mxu0 0
    %1279 = vmatprep.subr.bf16.mxu0 0
    %1280 = vmatpush1.bf16.msra.mxu0 0
    %1281 = vmatprep.subr.bf16.mxu0 0
    %1282 = vmatpush1.bf16.msra.mxu0 0
    %1283 = vmatprep.subr.bf16.mxu0 0
    %1284 = vmatpush1.bf16.msra.mxu0 0
    %1285 = vmatprep.subr.bf16.mxu0 0
    %1286 = vmatpush1.bf16.msra.mxu0 0
    %1287 = vmatprep.mubr.bf16.mxu0 0
    %1288 = vmatmul.mubr.bf16.gmra.mrb[0].mxu0 %v1250
    %v1289 = vpop.f32.mrb[0].mxu0
    %v1290 = vadd.f32 0.0, %v1289
    %v1291 = vpop.f32.mrb[0].mxu0
    %v1292 = vpop.f32.mrb[0].mxu0
    %v1293 = vpop.f32.mrb[0].mxu0
    %1294 = vdwg.mxu0
    %1295 = vrot.lane.b32.xlu0 %v313, 40
    %v1296 = vpop.permute.xlu0 %1295
    %v1298 = vsel %vm316, %v1246, 0
    %v1301 = vsel %vm440, %v1296, 0
    %1303 = vmatprep.subr.bf16.mxu0 0
    %1304 = vmatpush1.bf16.msra.mxu0 %v1301
    %1305 = vmatprep.subr.bf16.mxu0 0
    %1306 = vmatpush1.bf16.msra.mxu0 0
    %1307 = vmatprep.subr.bf16.mxu0 0
    %1308 = vmatpush1.bf16.msra.mxu0 0
    %1309 = vmatprep.subr.bf16.mxu0 0
    %1310 = vmatpush1.bf16.msra.mxu0 0
    %1311 = vmatprep.subr.bf16.mxu0 0
    %1312 = vmatpush1.bf16.msra.mxu0 0
    %1313 = vmatprep.subr.bf16.mxu0 0
    %1314 = vmatpush1.bf16.msra.mxu0 0
    %1315 = vmatprep.subr.bf16.mxu0 0
    %1316 = vmatpush1.bf16.msra.mxu0 0
    %1317 = vmatprep.subr.bf16.mxu0 0
    %1318 = vmatpush1.bf16.msra.mxu0 0
    %1319 = vmatprep.subr.bf16.mxu0 0
    %1320 = vmatpush1.bf16.msra.mxu0 0
    %1321 = vmatprep.subr.bf16.mxu0 0
    %1322 = vmatpush1.bf16.msra.mxu0 0
    %1323 = vmatprep.subr.bf16.mxu0 0
    %1324 = vmatpush1.bf16.msra.mxu0 0
    %1325 = vmatprep.subr.bf16.mxu0 0
    %1326 = vmatpush1.bf16.msra.mxu0 0
    %1327 = vmatprep.subr.bf16.mxu0 0
    %1328 = vmatpush1.bf16.msra.mxu0 0
    %1329 = vmatprep.subr.bf16.mxu0 0
    %1330 = vmatpush1.bf16.msra.mxu0 0
    %1331 = vmatprep.subr.bf16.mxu0 0
    %1332 = vmatpush1.bf16.msra.mxu0 0
    %1333 = vmatprep.subr.bf16.mxu0 0
    %1334 = vmatpush1.bf16.msra.mxu0 0
    %1335 = vmatprep.mubr.bf16.mxu0 0
    %1336 = vmatmul.mubr.bf16.gmra.mrb[0].mxu0 %v1298
    %v1337 = vpop.f32.mrb[0].mxu0
    %v1338 = vadd.f32 0.0, %v1337
    %v1339 = vpop.f32.mrb[0].mxu0
    %v1340 = vpop.f32.mrb[0].mxu0
    %v1341 = vpop.f32.mrb[0].mxu0
    %1342 = vdwg.mxu0
    %v1343 = vpack.c.bf16 %v1338, %v1290
    %s1344 = scalar_lea.vmem %s7, 12
    %v1345 = vld [vmem:[%s1344] sm:$0xf]
    %v1347 = vsel %vm316, %v1343, 0
    %v1350 = vsel %vm440, %v1345, 0
    %1352 = vmatprep.subr.bf16.mxu0 0
    %1353 = vmatpush1.bf16.msra.mxu0 %v1350
    %1354 = vmatprep.subr.bf16.mxu0 0
    %1355 = vmatpush1.bf16.msra.mxu0 0
    %1356 = vmatprep.subr.bf16.mxu0 0
    %1357 = vmatpush1.bf16.msra.mxu0 0
    %1358 = vmatprep.subr.bf16.mxu0 0
    %1359 = vmatpush1.bf16.msra.mxu0 0
    %1360 = vmatprep.subr.bf16.mxu0 0
    %1361 = vmatpush1.bf16.msra.mxu0 0
    %1362 = vmatprep.subr.bf16.mxu0 0
    %1363 = vmatpush1.bf16.msra.mxu0 0
    %1364 = vmatprep.subr.bf16.mxu0 0
    %1365 = vmatpush1.bf16.msra.mxu0 0
    %1366 = vmatprep.subr.bf16.mxu0 0
    %1367 = vmatpush1.bf16.msra.mxu0 0
    %1368 = vmatprep.subr.bf16.mxu0 0
    %1369 = vmatpush1.bf16.msra.mxu0 0
    %1370 = vmatprep.subr.bf16.mxu0 0
    %1371 = vmatpush1.bf16.msra.mxu0 0
    %1372 = vmatprep.subr.bf16.mxu0 0
    %1373 = vmatpush1.bf16.msra.mxu0 0
    %1374 = vmatprep.subr.bf16.mxu0 0
    %1375 = vmatpush1.bf16.msra.mxu0 0
    %1376 = vmatprep.subr.bf16.mxu0 0
    %1377 = vmatpush1.bf16.msra.mxu0 0
    %1378 = vmatprep.subr.bf16.mxu0 0
    %1379 = vmatpush1.bf16.msra.mxu0 0
    %1380 = vmatprep.subr.bf16.mxu0 0
    %1381 = vmatpush1.bf16.msra.mxu0 0
    %1382 = vmatprep.subr.bf16.mxu0 0
    %1383 = vmatpush1.bf16.msra.mxu0 0
    %1384 = vmatprep.mubr.bf16.mxu0 0
    %1385 = vmatmul.mubr.bf16.gmra.mrb[0].mxu0 %v1347
    %v1386 = vpop.f32.mrb[0].mxu0
    %v1387 = vadd.f32 0.0, %v1386
    %v1388 = vpop.f32.mrb[0].mxu0
    %v1389 = vpop.f32.mrb[0].mxu0
    %v1390 = vadd.f32 0.0, %v1389
    %v1391 = vpop.f32.mrb[0].mxu0
    %1392 = vdwg.mxu0
    %v1393 = vadd.f32 %v1121, %v1387
    %v1394 = vadd.f32 %v1122, %v1390
    %v1395 = vld [vmem:[%s8] sm:$0x1]
    %v1397 = vlaneseq
    %v1398 = vshrl.u32 %v1397, 7
    %v1399 = vsub.s32 0, %v1398
    %v1400 = vrot.slane %v1395, %v1399
    %v1402 = vadd.f32 %v1393, %v1400
    %v1403 = vadd.f32 %v1394, %v1400
    %v1404 = vadd.f32 %v238, %v1402
    %v1405 = vadd.f32 %v239, %v1403
    %v1406 = vld [vmem:[%s9] sm:$0x1]
    %v1407 = vld [vmem:[%s10] sm:$0x1]
    %v1408 = vsel %vm196, %v1404, 0.0
    %1409 = vadd.xlane.f32.xlu0 %v1408
    %v1410 = vpop.xlane.xlu0 %1409
    %v1411 = vsel %vm196, %v1405, 0.0
    %1412 = vadd.xlane.f32.xlu0 %v1411
    %v1413 = vpop.xlane.xlu0 %1412
    %v1414 = vmul.f32 %v1410, %v203
    %v1415 = vmul.f32 %v1413, %v203
    %v1416 = vsub.f32 %v1404, %v1414
    %v1417 = vsub.f32 %v1405, %v1415
    %v1418 = vmul.f32 %v1416, %v1416
    %v1419 = vmul.f32 %v1417, %v1417
    %v1420 = vsel %vm196, %v1418, 0.0
    %1421 = vadd.xlane.f32.xlu0 %v1420
    %v1422 = vpop.xlane.xlu0 %1421
    %v1423 = vsel %vm196, %v1419, 0.0
    %1424 = vadd.xlane.f32.xlu0 %v1423
    %v1425 = vpop.xlane.xlu0 %1424
    %v1426 = vmul.f32 %v1422, %v203
    %v1427 = vmul.f32 %v1425, %v203
    %v1428 = vadd.f32 %v1426, 1e-12
    %v1429 = vadd.f32 %v1427, 1e-12
    %v1430 = vrsqrt.pop %v1428
    %v1431 = vrsqrt.pop %v1429
    %v1432 = vmul.f32 %v1416, %v1430
    %v1433 = vmul.f32 %v1417, %v1431
    %v1435 = vlaneseq
    %v1436 = vshrl.u32 %v1435, 7
    %v1437 = vsub.s32 0, %v1436
    %v1438 = vrot.slane %v1406, %v1437
    %v1440 = vmul.f32 %v1432, %v1438
    %v1441 = vmul.f32 %v1433, %v1438
    %v1443 = vlaneseq
    %v1444 = vshrl.u32 %v1443, 7
    %v1445 = vsub.s32 0, %v1444
    %v1446 = vrot.slane %v1407, %v1445
    %v1448 = vadd.f32 %v1440, %v1446
    %v1449 = vadd.f32 %v1441, %v1446
    %v1450 = vpack.c.bf16 %v1449, %v1448
    %v1451 = vld [vmem:[%s11] sm:$0xf]
    %v1452 = vld [vmem:[%s11 + $0x4] sm:$0xf]
    %v1453 = vld [vmem:[%s11 + $0x8] sm:$0xf]
    %v1454 = vld [vmem:[%s11 + $0xc] sm:$0xf]
    %v1455 = vld [vmem:[%s12] sm:$0x1]
    %v1457 = vlaneseq
    %v1458 = vshrl.u32 %v1457, 7
    %v1459 = vsub.s32 0, %v1458
    %v1460 = vrot.slane %v1455, %v1459
    %v1466 = vunpack.c.l.b16 %v1451
    %v1467 = vunpack.c.l.b16 %v1452
    %v1468 = vunpack.c.l.b16 %v1453
    %v1469 = vunpack.c.l.b16 %v1454
    %v1470 = vpack.c.b16 %v1467, %v1466
    %v1471 = vpack.c.b16 %v1469, %v1468
    %v1475 = vsel %vm196, %v1450, 0
    %1477 = vmatprep.subr.bf16.mxu0 0
    %1478 = vmatpush1.bf16.msra.mxu0 %v1470
    %1479 = vmatprep.subr.bf16.mxu0 0
    %1480 = vmatpush1.bf16.msra.mxu0 %v1471
    %1481 = vmatprep.subr.bf16.mxu0 0
    %1482 = vmatpush1.bf16.msra.mxu0 0
    %1483 = vmatprep.subr.bf16.mxu0 0
    %1484 = vmatpush1.bf16.msra.mxu0 0
    %1485 = vmatprep.subr.bf16.mxu0 0
    %1486 = vmatpush1.bf16.msra.mxu0 0
    %1487 = vmatprep.subr.bf16.mxu0 0
    %1488 = vmatpush1.bf16.msra.mxu0 0
    %1489 = vmatprep.subr.bf16.mxu0 0
    %1490 = vmatpush1.bf16.msra.mxu0 0
    %1491 = vmatprep.subr.bf16.mxu0 0
    %1492 = vmatpush1.bf16.msra.mxu0 0
    %1493 = vmatprep.subr.bf16.mxu0 0
    %1494 = vmatpush1.bf16.msra.mxu0 0
    %1495 = vmatprep.subr.bf16.mxu0 0
    %1496 = vmatpush1.bf16.msra.mxu0 0
    %1497 = vmatprep.subr.bf16.mxu0 0
    %1498 = vmatpush1.bf16.msra.mxu0 0
    %1499 = vmatprep.subr.bf16.mxu0 0
    %1500 = vmatpush1.bf16.msra.mxu0 0
    %1501 = vmatprep.subr.bf16.mxu0 0
    %1502 = vmatpush1.bf16.msra.mxu0 0
    %1503 = vmatprep.subr.bf16.mxu0 0
    %1504 = vmatpush1.bf16.msra.mxu0 0
    %1505 = vmatprep.subr.bf16.mxu0 0
    %1506 = vmatpush1.bf16.msra.mxu0 0
    %1507 = vmatprep.subr.bf16.mxu0 0
    %1508 = vmatpush1.bf16.msra.mxu0 0
    %1509 = vmatprep.mubr.bf16.mxu0 0
    %1510 = vmatmul.mubr.bf16.gmra.mrb[0].mxu0 %v1475
    %v1511 = vpop.f32.mrb[0].mxu0
    %v1512 = vadd.f32 %v1460, %v1511
    %v1513 = vpop.f32.mrb[0].mxu0
    %v1514 = vpop.f32.mrb[0].mxu0
    %v1515 = vadd.f32 %v1460, %v1514
    %v1516 = vpop.f32.mrb[0].mxu0
    %1517 = vdwg.mxu0
    %v1518 = vmul.f32 %v1512, %v1512
    %v1519 = vmul.f32 %v1515, %v1515
    %v1520 = vmul.f32 %v1512, %v1518
    %v1521 = vmul.f32 %v1515, %v1519
    %v1522 = vmul.f32 %v1520, 0.044715
    %v1523 = vmul.f32 %v1521, 0.044715
    %v1524 = vadd.f32 %v1512, %v1522
    %v1525 = vadd.f32 %v1515, %v1523
    %v1526 = vmul.f32 %v1524, 0.7978846
    %v1527 = vmul.f32 %v1525, 0.7978846
    %v1528 = vtanh.pop %v1526
    %v1529 = vtanh.pop %v1527
    %v1530 = vadd.f32 %v1528, 1.0
    %v1531 = vadd.f32 %v1529, 1.0
    %v1532 = vmul.f32 %v1530, 0.5
    %v1533 = vmul.f32 %v1531, 0.5
    %v1534 = vmul.f32 %v1512, %v1532
    %v1535 = vmul.f32 %v1515, %v1533
    %v1536 = vpack.c.bf16 %v1535, %v1534
    %v1537 = vld [vmem:[%s13] sm:$0xf]
    %v1538 = vld [vmem:[%s13 + $0x4] sm:$0xf]
    %v1539 = vld [vmem:[%s13 + $0x8] sm:$0xf]
    %v1540 = vld [vmem:[%s13 + $0xc] sm:$0xf]
    %v1541 = vld [vmem:[%s13 + $0x10] sm:$0xf]
    %v1542 = vld [vmem:[%s13 + $0x14] sm:$0xf]
    %v1543 = vld [vmem:[%s13 + $0x18] sm:$0xf]
    %v1544 = vld [vmem:[%s13 + $0x1c] sm:$0xf]
    %v1545 = vld [vmem:[%s14] sm:$0x1]
    %v1547 = vlaneseq
    %v1548 = vshrl.u32 %v1547, 7
    %v1549 = vsub.s32 0, %v1548
    %v1550 = vrot.slane %v1545, %v1549
    %v1560 = vunpack.c.l.b16 %v1537
    %v1561 = vunpack.c.l.b16 %v1538
    %v1562 = vunpack.c.l.b16 %v1539
    %v1563 = vunpack.c.l.b16 %v1540
    %v1564 = vunpack.c.l.b16 %v1541
    %v1565 = vunpack.c.l.b16 %v1542
    %v1566 = vunpack.c.l.b16 %v1543
    %v1567 = vunpack.c.l.b16 %v1544
    %v1568 = vpack.c.b16 %v1561, %v1560
    %v1569 = vpack.c.b16 %v1563, %v1562
    %v1570 = vpack.c.b16 %v1565, %v1564
    %v1571 = vpack.c.b16 %v1567, %v1566
    %vm1576 = vcmask 523264
    %v1578 = vsel %vm1576, %v1536, 0
    %1580 = vmatprep.subr.bf16.mxu0 0
    %1581 = vmatpush1.bf16.msra.mxu0 %v1568
    %1582 = vmatprep.subr.bf16.mxu0 0
    %1583 = vmatpush1.bf16.msra.mxu0 %v1569
    %1584 = vmatprep.subr.bf16.mxu0 0
    %1585 = vmatpush1.bf16.msra.mxu0 %v1570
    %1586 = vmatprep.subr.bf16.mxu0 0
    %1587 = vmatpush1.bf16.msra.mxu0 %v1571
    %1588 = vmatprep.subr.bf16.mxu0 0
    %1589 = vmatpush1.bf16.msra.mxu0 0
    %1590 = vmatprep.subr.bf16.mxu0 0
    %1591 = vmatpush1.bf16.msra.mxu0 0
    %1592 = vmatprep.subr.bf16.mxu0 0
    %1593 = vmatpush1.bf16.msra.mxu0 0
    %1594 = vmatprep.subr.bf16.mxu0 0
    %1595 = vmatpush1.bf16.msra.mxu0 0
    %1596 = vmatprep.subr.bf16.mxu0 0
    %1597 = vmatpush1.bf16.msra.mxu0 0
    %1598 = vmatprep.subr.bf16.mxu0 0
    %1599 = vmatpush1.bf16.msra.mxu0 0
    %1600 = vmatprep.subr.bf16.mxu0 0
    %1601 = vmatpush1.bf16.msra.mxu0 0
    %1602 = vmatprep.subr.bf16.mxu0 0
    %1603 = vmatpush1.bf16.msra.mxu0 0
    %1604 = vmatprep.subr.bf16.mxu0 0
    %1605 = vmatpush1.bf16.msra.mxu0 0
    %1606 = vmatprep.subr.bf16.mxu0 0
    %1607 = vmatpush1.bf16.msra.mxu0 0
    %1608 = vmatprep.subr.bf16.mxu0 0
    %1609 = vmatpush1.bf16.msra.mxu0 0
    %1610 = vmatprep.subr.bf16.mxu0 0
    %1611 = vmatpush1.bf16.msra.mxu0 0
    %1612 = vmatprep.mubr.bf16.mxu0 0
    %1613 = vmatmul.mubr.bf16.gmra.mrb[0].mxu0 %v1578
    %v1614 = vpop.f32.mrb[0].mxu0
    %v1615 = vadd.f32 %v1550, %v1614
    %v1616 = vpop.f32.mrb[0].mxu0
    %v1617 = vpop.f32.mrb[0].mxu0
    %v1618 = vadd.f32 %v1550, %v1617
    %v1619 = vpop.f32.mrb[0].mxu0
    %1620 = vdwg.mxu0
    %v1621 = vadd.f32 %v1448, %v1615
    %v1622 = vadd.f32 %v1449, %v1618
    %v1623 = vld [vmem:[%s15] sm:$0x1]
    %v1624 = vld [vmem:[%s16] sm:$0x1]
    %v1625 = vsel %vm196, %v1621, 0.0
    %1626 = vadd.xlane.f32.xlu0 %v1625
    %v1627 = vpop.xlane.xlu0 %1626
    %v1628 = vsel %vm196, %v1622, 0.0
    %1629 = vadd.xlane.f32.xlu0 %v1628
    %v1630 = vpop.xlane.xlu0 %1629
    %v1631 = vmul.f32 %v1627, %v203
    %v1632 = vmul.f32 %v1630, %v203
    %v1633 = vsub.f32 %v1621, %v1631
    %v1634 = vsub.f32 %v1622, %v1632
    %v1635 = vmul.f32 %v1633, %v1633
    %v1636 = vmul.f32 %v1634, %v1634
    %v1637 = vsel %vm196, %v1635, 0.0
    %1638 = vadd.xlane.f32.xlu0 %v1637
    %v1639 = vpop.xlane.xlu0 %1638
    %v1640 = vsel %vm196, %v1636, 0.0
    %1641 = vadd.xlane.f32.xlu0 %v1640
    %v1642 = vpop.xlane.xlu0 %1641
    %v1643 = vmul.f32 %v1639, %v203
    %v1644 = vmul.f32 %v1642, %v203
    %v1645 = vadd.f32 %v1643, 1e-12
    %v1646 = vadd.f32 %v1644, 1e-12
    %v1647 = vrsqrt.pop %v1645
    %v1648 = vrsqrt.pop %v1646
    %v1649 = vmul.f32 %v1633, %v1647
    %v1650 = vmul.f32 %v1634, %v1648
    %v1652 = vlaneseq
    %v1653 = vshrl.u32 %v1652, 7
    %v1654 = vsub.s32 0, %v1653
    %v1655 = vrot.slane %v1623, %v1654
    %v1657 = vmul.f32 %v1649, %v1655
    %v1658 = vmul.f32 %v1650, %v1655
    %v1660 = vlaneseq
    %v1661 = vshrl.u32 %v1660, 7
    %v1662 = vsub.s32 0, %v1661
    %v1663 = vrot.slane %v1624, %v1662
    %v1665 = vadd.f32 %v1657, %v1663
    %v1666 = vadd.f32 %v1658, %v1663
    %v1667 = vpack.c.bf16 %v1666, %v1665
    %s1668 = scalar_lea.vmem %s5, 16
    %v1669 = vld [vmem:[%s1668] sm:$0xf]
    %v1670 = vld [vmem:[%s1668 + $0x4] sm:$0xf]
    %v1671 = vld [vmem:[%s1668 + $0x8] sm:$0xf]
    %v1672 = vld [vmem:[%s1668 + $0xc] sm:$0xf]
    %s1673 = scalar_lea.vmem %s6, 1
    %v1674 = vld [vmem:[%s1673] sm:$0x1]
    %v1676 = vlaneseq
    %v1677 = vshrl.u32 %v1676, 7
    %v1678 = vsub.s32 0, %v1677
    %v1679 = vrot.slane %v1674, %v1678
    %v1685 = vunpack.c.l.b16 %v1669
    %v1686 = vunpack.c.l.b16 %v1670
    %v1687 = vunpack.c.l.b16 %v1671
    %v1688 = vunpack.c.l.b16 %v1672
    %v1689 = vpack.c.b16 %v1686, %v1685
    %v1690 = vpack.c.b16 %v1688, %v1687
    %v1694 = vsel %vm196, %v1667, 0
    %1696 = vmatprep.subr.bf16.mxu0 0
    %1697 = vmatpush1.bf16.msra.mxu0 %v1689
    %1698 = vmatprep.subr.bf16.mxu0 0
    %1699 = vmatpush1.bf16.msra.mxu0 %v1690
    %1700 = vmatprep.subr.bf16.mxu0 0
    %1701 = vmatpush1.bf16.msra.mxu0 0
    %1702 = vmatprep.subr.bf16.mxu0 0
    %1703 = vmatpush1.bf16.msra.mxu0 0
    %1704 = vmatprep.subr.bf16.mxu0 0
    %1705 = vmatpush1.bf16.msra.mxu0 0
    %1706 = vmatprep.subr.bf16.mxu0 0
    %1707 = vmatpush1.bf16.msra.mxu0 0
    %1708 = vmatprep.subr.bf16.mxu0 0
    %1709 = vmatpush1.bf16.msra.mxu0 0
    %1710 = vmatprep.subr.bf16.mxu0 0
    %1711 = vmatpush1.bf16.msra.mxu0 0
    %1712 = vmatprep.subr.bf16.mxu0 0
    %1713 = vmatpush1.bf16.msra.mxu0 0
    %1714 = vmatprep.subr.bf16.mxu0 0
    %1715 = vmatpush1.bf16.msra.mxu0 0
    %1716 = vmatprep.subr.bf16.mxu0 0
    %1717 = vmatpush1.bf16.msra.mxu0 0
    %1718 = vmatprep.subr.bf16.mxu0 0
    %1719 = vmatpush1.bf16.msra.mxu0 0
    %1720 = vmatprep.subr.bf16.mxu0 0
    %1721 = vmatpush1.bf16.msra.mxu0 0
    %1722 = vmatprep.subr.bf16.mxu0 0
    %1723 = vmatpush1.bf16.msra.mxu0 0
    %1724 = vmatprep.subr.bf16.mxu0 0
    %1725 = vmatpush1.bf16.msra.mxu0 0
    %1726 = vmatprep.subr.bf16.mxu0 0
    %1727 = vmatpush1.bf16.msra.mxu0 0
    %1728 = vmatprep.mubr.bf16.mxu0 0
    %1729 = vmatmul.mubr.bf16.gmra.mrb[0].mxu0 %v1694
    %v1730 = vpop.f32.mrb[0].mxu0
    %v1731 = vadd.f32 %v1679, %v1730
    %v1732 = vpop.f32.mrb[0].mxu0
    %v1733 = vpop.f32.mrb[0].mxu0
    %v1734 = vadd.f32 %v1679, %v1733
    %v1735 = vpop.f32.mrb[0].mxu0
    %1736 = vdwg.mxu0
    %v1737 = vpack.c.bf16 %v1734, %v1731
    %v1739 = vunpack.c.l.b16 %v1737
    %v1740 = vunpack.c.h.b16 %v1737
    %v1741 = vpack.c.b16 %v1739, %v1739
    %v1742 = vpack.c.b16 %v1740, %v1740
    %1743 = vrot.lane.b32.xlu0 %v1741, 96
    %v1744 = vpop.permute.xlu0 %1743
    %v1746 = vsel %vm316, %v1741, 0
    %v1749 = vsel %vm316, %v1744, 0
    %1751 = vmatprep.subr.bf16.mxu0 0
    %1752 = vmatpush1.bf16.xpose.msra.mxu0 %v1749
    %1753 = vmatprep.subr.bf16.mxu0 0
    %1754 = vmatpush1.bf16.xpose.msra.mxu0 0
    %1755 = vmatprep.subr.bf16.mxu0 0
    %1756 = vmatpush1.bf16.xpose.msra.mxu0 0
    %1757 = vmatprep.subr.bf16.mxu0 0
    %1758 = vmatpush1.bf16.xpose.msra.mxu0 0
    %1759 = vmatprep.subr.bf16.mxu0 0
    %1760 = vmatpush1.bf16.xpose.msra.mxu0 0
    %1761 = vmatprep.subr.bf16.mxu0 0
    %1762 = vmatpush1.bf16.xpose.msra.mxu0 0
    %1763 = vmatprep.subr.bf16.mxu0 0
    %1764 = vmatpush1.bf16.xpose.msra.mxu0 0
    %1765 = vmatprep.subr.bf16.mxu0 0
    %1766 = vmatpush1.bf16.xpose.msra.mxu0 0
    %1767 = vmatprep.subr.bf16.mxu0 0
    %1768 = vmatpush1.bf16.xpose.msra.mxu0 0
    %1769 = vmatprep.subr.bf16.mxu0 0
    %1770 = vmatpush1.bf16.xpose.msra.mxu0 0
    %1771 = vmatprep.subr.bf16.mxu0 0
    %1772 = vmatpush1.bf16.xpose.msra.mxu0 0
    %1773 = vmatprep.subr.bf16.mxu0 0
    %1774 = vmatpush1.bf16.xpose.msra.mxu0 0
    %1775 = vmatprep.subr.bf16.mxu0 0
    %1776 = vmatpush1.bf16.xpose.msra.mxu0 0
    %1777 = vmatprep.subr.bf16.mxu0 0
    %1778 = vmatpush1.bf16.xpose.msra.mxu0 0
    %1779 = vmatprep.subr.bf16.mxu0 0
    %1780 = vmatpush1.bf16.xpose.msra.mxu0 0
    %1781 = vmatprep.subr.bf16.mxu0 0
    %1782 = vmatpush1.bf16.xpose.msra.mxu0 0
    %1783 = vmatprep.mubr.bf16.mxu0 0
    %1784 = vmatmul.mubr.bf16.gmra.mrb[0].mxu0 %v1746
    %v1785 = vpop.f32.mrb[0].mxu0
    %v1786 = vadd.f32 0.0, %v1785
    %v1787 = vpop.f32.mrb[0].mxu0
    %v1788 = vpop.f32.mrb[0].mxu0
    %v1789 = vpop.f32.mrb[0].mxu0
    %1790 = vdwg.mxu0
    %1791 = vrot.lane.b32.xlu0 %v1742, 96
    %v1792 = vpop.permute.xlu0 %1791
    %v1794 = vsel %vm316, %v1742, 0
    %v1797 = vsel %vm316, %v1792, 0
    %1799 = vmatprep.subr.bf16.mxu0 0
    %1800 = vmatpush1.bf16.xpose.msra.mxu0 %v1797
    %1801 = vmatprep.subr.bf16.mxu0 0
    %1802 = vmatpush1.bf16.xpose.msra.mxu0 0
    %1803 = vmatprep.subr.bf16.mxu0 0
    %1804 = vmatpush1.bf16.xpose.msra.mxu0 0
    %1805 = vmatprep.subr.bf16.mxu0 0
    %1806 = vmatpush1.bf16.xpose.msra.mxu0 0
    %1807 = vmatprep.subr.bf16.mxu0 0
    %1808 = vmatpush1.bf16.xpose.msra.mxu0 0
    %1809 = vmatprep.subr.bf16.mxu0 0
    %1810 = vmatpush1.bf16.xpose.msra.mxu0 0
    %1811 = vmatprep.subr.bf16.mxu0 0
    %1812 = vmatpush1.bf16.xpose.msra.mxu0 0
    %1813 = vmatprep.subr.bf16.mxu0 0
    %1814 = vmatpush1.bf16.xpose.msra.mxu0 0
    %1815 = vmatprep.subr.bf16.mxu0 0
    %1816 = vmatpush1.bf16.xpose.msra.mxu0 0
    %1817 = vmatprep.subr.bf16.mxu0 0
    %1818 = vmatpush1.bf16.xpose.msra.mxu0 0
    %1819 = vmatprep.subr.bf16.mxu0 0
    %1820 = vmatpush1.bf16.xpose.msra.mxu0 0
    %1821 = vmatprep.subr.bf16.mxu0 0
    %1822 = vmatpush1.bf16.xpose.msra.mxu0 0
    %1823 = vmatprep.subr.bf16.mxu0 0
    %1824 = vmatpush1.bf16.xpose.msra.mxu0 0
    %1825 = vmatprep.subr.bf16.mxu0 0
    %1826 = vmatpush1.bf16.xpose.msra.mxu0 0
    %1827 = vmatprep.subr.bf16.mxu0 0
    %1828 = vmatpush1.bf16.xpose.msra.mxu0 0
    %1829 = vmatprep.subr.bf16.mxu0 0
    %1830 = vmatpush1.bf16.xpose.msra.mxu0 0
    %1831 = vmatprep.mubr.bf16.mxu0 0
    %1832 = vmatmul.mubr.bf16.gmra.mrb[0].mxu0 %v1794
    %v1833 = vpop.f32.mrb[0].mxu0
    %v1834 = vadd.f32 0.0, %v1833
    %v1835 = vpop.f32.mrb[0].mxu0
    %v1836 = vpop.f32.mrb[0].mxu0
    %v1837 = vpop.f32.mrb[0].mxu0
    %1838 = vdwg.mxu0
    %v1839 = vsel %vm316, %v1786, -inf
    %1840 = vmax.xlane.f32.xlu0 %v1839
    %v1841 = vpop.xlane.xlu0 %1840
    %v1842 = vsel %vm316, %v1834, -inf
    %1843 = vmax.xlane.f32.xlu0 %v1842
    %v1844 = vpop.xlane.xlu0 %1843
    %v1845 = vsub.f32 %v1786, %v1841
    %v1846 = vsub.f32 %v1834, %v1844
    %v1847 = vmul.f32 %v1845, 1.442695
    %v1848 = vpow.pop %v1847
    %v1849 = vmul.f32 %v1846, 1.442695
    %v1850 = vpow.pop %v1849
    %v1851 = vsel %vm316, %v1848, 0.0
    %1852 = vadd.xlane.f32.xlu0 %v1851
    %v1853 = vpop.xlane.xlu0 %1852
    %v1854 = vsel %vm316, %v1850, 0.0
    %1855 = vadd.xlane.f32.xlu0 %v1854
    %v1856 = vpop.xlane.xlu0 %1855
    %v1857 = vrcp.pop %v1853
    %v1858 = vrcp.pop %v1856
    %v1859 = vmul.f32 %v1848, %v1857
    %v1860 = vmul.f32 %v1850, %v1858
    %v1861 = vpack.c.bf16 %v1859, %v1859
    %v1862 = vpack.c.bf16 %v1860, %v1860
    %1863 = vrot.lane.b32.xlu0 %v1741, 64
    %v1864 = vpop.permute.xlu0 %1863
    %v1866 = vsel %vm316, %v1861, 0
    %v1869 = vsel %vm440, %v1864, 0
    %1871 = vmatprep.subr.bf16.mxu0 0
    %1872 = vmatpush1.bf16.msra.mxu0 %v1869
    %1873 = vmatprep.subr.bf16.mxu0 0
    %1874 = vmatpush1.bf16.msra.mxu0 0
    %1875 = vmatprep.subr.bf16.mxu0 0
    %1876 = vmatpush1.bf16.msra.mxu0 0
    %1877 = vmatprep.subr.bf16.mxu0 0
    %1878 = vmatpush1.bf16.msra.mxu0 0
    %1879 = vmatprep.subr.bf16.mxu0 0
    %1880 = vmatpush1.bf16.msra.mxu0 0
    %1881 = vmatprep.subr.bf16.mxu0 0
    %1882 = vmatpush1.bf16.msra.mxu0 0
    %1883 = vmatprep.subr.bf16.mxu0 0
    %1884 = vmatpush1.bf16.msra.mxu0 0
    %1885 = vmatprep.subr.bf16.mxu0 0
    %1886 = vmatpush1.bf16.msra.mxu0 0
    %1887 = vmatprep.subr.bf16.mxu0 0
    %1888 = vmatpush1.bf16.msra.mxu0 0
    %1889 = vmatprep.subr.bf16.mxu0 0
    %1890 = vmatpush1.bf16.msra.mxu0 0
    %1891 = vmatprep.subr.bf16.mxu0 0
    %1892 = vmatpush1.bf16.msra.mxu0 0
    %1893 = vmatprep.subr.bf16.mxu0 0
    %1894 = vmatpush1.bf16.msra.mxu0 0
    %1895 = vmatprep.subr.bf16.mxu0 0
    %1896 = vmatpush1.bf16.msra.mxu0 0
    %1897 = vmatprep.subr.bf16.mxu0 0
    %1898 = vmatpush1.bf16.msra.mxu0 0
    %1899 = vmatprep.subr.bf16.mxu0 0
    %1900 = vmatpush1.bf16.msra.mxu0 0
    %1901 = vmatprep.subr.bf16.mxu0 0
    %1902 = vmatpush1.bf16.msra.mxu0 0
    %1903 = vmatprep.mubr.bf16.mxu0 0
    %1904 = vmatmul.mubr.bf16.gmra.mrb[0].mxu0 %v1866
    %v1905 = vpop.f32.mrb[0].mxu0
    %v1906 = vadd.f32 0.0, %v1905
    %v1907 = vpop.f32.mrb[0].mxu0
    %v1908 = vpop.f32.mrb[0].mxu0
    %v1909 = vpop.f32.mrb[0].mxu0
    %1910 = vdwg.mxu0
    %1911 = vrot.lane.b32.xlu0 %v1742, 64
    %v1912 = vpop.permute.xlu0 %1911
    %v1914 = vsel %vm316, %v1862, 0
    %v1917 = vsel %vm440, %v1912, 0
    %1919 = vmatprep.subr.bf16.mxu0 0
    %1920 = vmatpush1.bf16.msra.mxu0 %v1917
    %1921 = vmatprep.subr.bf16.mxu0 0
    %1922 = vmatpush1.bf16.msra.mxu0 0
    %1923 = vmatprep.subr.bf16.mxu0 0
    %1924 = vmatpush1.bf16.msra.mxu0 0
    %1925 = vmatprep.subr.bf16.mxu0 0
    %1926 = vmatpush1.bf16.msra.mxu0 0
    %1927 = vmatprep.subr.bf16.mxu0 0
    %1928 = vmatpush1.bf16.msra.mxu0 0
    %1929 = vmatprep.subr.bf16.mxu0 0
    %1930 = vmatpush1.bf16.msra.mxu0 0
    %1931 = vmatprep.subr.bf16.mxu0 0
    %1932 = vmatpush1.bf16.msra.mxu0 0
    %1933 = vmatprep.subr.bf16.mxu0 0
    %1934 = vmatpush1.bf16.msra.mxu0 0
    %1935 = vmatprep.subr.bf16.mxu0 0
    %1936 = vmatpush1.bf16.msra.mxu0 0
    %1937 = vmatprep.subr.bf16.mxu0 0
    %1938 = vmatpush1.bf16.msra.mxu0 0
    %1939 = vmatprep.subr.bf16.mxu0 0
    %1940 = vmatpush1.bf16.msra.mxu0 0
    %1941 = vmatprep.subr.bf16.mxu0 0
    %1942 = vmatpush1.bf16.msra.mxu0 0
    %1943 = vmatprep.subr.bf16.mxu0 0
    %1944 = vmatpush1.bf16.msra.mxu0 0
    %1945 = vmatprep.subr.bf16.mxu0 0
    %1946 = vmatpush1.bf16.msra.mxu0 0
    %1947 = vmatprep.subr.bf16.mxu0 0
    %1948 = vmatpush1.bf16.msra.mxu0 0
    %1949 = vmatprep.subr.bf16.mxu0 0
    %1950 = vmatpush1.bf16.msra.mxu0 0
    %1951 = vmatprep.mubr.bf16.mxu0 0
    %1952 = vmatmul.mubr.bf16.gmra.mrb[0].mxu0 %v1914
    %v1953 = vpop.f32.mrb[0].mxu0
    %v1954 = vadd.f32 0.0, %v1953
    %v1955 = vpop.f32.mrb[0].mxu0
    %v1956 = vpop.f32.mrb[0].mxu0
    %v1957 = vpop.f32.mrb[0].mxu0
    %1958 = vdwg.mxu0
    %v1959 = vpack.c.bf16 %v1954, %v1906
    %s1960 = scalar_lea.vmem %s7, 16
    %v1961 = vld [vmem:[%s1960] sm:$0xf]
    %1962 = vrot.lane.b32.xlu0 %v1741, 120
    %v1963 = vpop.permute.xlu0 %1962
    %1964 = vrot.lane.b32.xlu0 %v1741, 88
    %v1965 = vpop.permute.xlu0 %1964
    %v1967 = vsel %vm316, %v1963, 0
    %v1970 = vsel %vm316, %v1965, 0
    %1972 = vmatprep.subr.bf16.mxu0 0
    %1973 = vmatpush1.bf16.xpose.msra.mxu0 %v1970
    %1974 = vmatprep.subr.bf16.mxu0 0
    %1975 = vmatpush1.bf16.xpose.msra.mxu0 0
    %1976 = vmatprep.subr.bf16.mxu0 0
    %1977 = vmatpush1.bf16.xpose.msra.mxu0 0
    %1978 = vmatprep.subr.bf16.mxu0 0
    %1979 = vmatpush1.bf16.xpose.msra.mxu0 0
    %1980 = vmatprep.subr.bf16.mxu0 0
    %1981 = vmatpush1.bf16.xpose.msra.mxu0 0
    %1982 = vmatprep.subr.bf16.mxu0 0
    %1983 = vmatpush1.bf16.xpose.msra.mxu0 0
    %1984 = vmatprep.subr.bf16.mxu0 0
    %1985 = vmatpush1.bf16.xpose.msra.mxu0 0
    %1986 = vmatprep.subr.bf16.mxu0 0
    %1987 = vmatpush1.bf16.xpose.msra.mxu0 0
    %1988 = vmatprep.subr.bf16.mxu0 0
    %1989 = vmatpush1.bf16.xpose.msra.mxu0 0
    %1990 = vmatprep.subr.bf16.mxu0 0
    %1991 = vmatpush1.bf16.xpose.msra.mxu0 0
    %1992 = vmatprep.subr.bf16.mxu0 0
    %1993 = vmatpush1.bf16.xpose.msra.mxu0 0
    %1994 = vmatprep.subr.bf16.mxu0 0
    %1995 = vmatpush1.bf16.xpose.msra.mxu0 0
    %1996 = vmatprep.subr.bf16.mxu0 0
    %1997 = vmatpush1.bf16.xpose.msra.mxu0 0
    %1998 = vmatprep.subr.bf16.mxu0 0
    %1999 = vmatpush1.bf16.xpose.msra.mxu0 0
    %2000 = vmatprep.subr.bf16.mxu0 0
    %2001 = vmatpush1.bf16.xpose.msra.mxu0 0
    %2002 = vmatprep.subr.bf16.mxu0 0
    %2003 = vmatpush1.bf16.xpose.msra.mxu0 0
    %2004 = vmatprep.mubr.bf16.mxu0 0
    %2005 = vmatmul.mubr.bf16.gmra.mrb[0].mxu0 %v1967
    %v2006 = vpop.f32.mrb[0].mxu0
    %v2007 = vadd.f32 0.0, %v2006
    %v2008 = vpop.f32.mrb[0].mxu0
    %v2009 = vpop.f32.mrb[0].mxu0
    %v2010 = vpop.f32.mrb[0].mxu0
    %2011 = vdwg.mxu0
    %2012 = vrot.lane.b32.xlu0 %v1742, 120
    %v2013 = vpop.permute.xlu0 %2012
    %2014 = vrot.lane.b32.xlu0 %v1742, 88
    %v2015 = vpop.permute.xlu0 %2014
    %v2017 = vsel %vm316, %v2013, 0
    %v2020 = vsel %vm316, %v2015, 0
    %2022 = vmatprep.subr.bf16.mxu0 0
    %2023 = vmatpush1.bf16.xpose.msra.mxu0 %v2020
    %2024 = vmatprep.subr.bf16.mxu0 0
    %2025 = vmatpush1.bf16.xpose.msra.mxu0 0
    %2026 = vmatprep.subr.bf16.mxu0 0
    %2027 = vmatpush1.bf16.xpose.msra.mxu0 0
    %2028 = vmatprep.subr.bf16.mxu0 0
    %2029 = vmatpush1.bf16.xpose.msra.mxu0 0
    %2030 = vmatprep.subr.bf16.mxu0 0
    %2031 = vmatpush1.bf16.xpose.msra.mxu0 0
    %2032 = vmatprep.subr.bf16.mxu0 0
    %2033 = vmatpush1.bf16.xpose.msra.mxu0 0
    %2034 = vmatprep.subr.bf16.mxu0 0
    %2035 = vmatpush1.bf16.xpose.msra.mxu0 0
    %2036 = vmatprep.subr.bf16.mxu0 0
    %2037 = vmatpush1.bf16.xpose.msra.mxu0 0
    %2038 = vmatprep.subr.bf16.mxu0 0
    %2039 = vmatpush1.bf16.xpose.msra.mxu0 0
    %2040 = vmatprep.subr.bf16.mxu0 0
    %2041 = vmatpush1.bf16.xpose.msra.mxu0 0
    %2042 = vmatprep.subr.bf16.mxu0 0
    %2043 = vmatpush1.bf16.xpose.msra.mxu0 0
    %2044 = vmatprep.subr.bf16.mxu0 0
    %2045 = vmatpush1.bf16.xpose.msra.mxu0 0
    %2046 = vmatprep.subr.bf16.mxu0 0
    %2047 = vmatpush1.bf16.xpose.msra.mxu0 0
    %2048 = vmatprep.subr.bf16.mxu0 0
    %2049 = vmatpush1.bf16.xpose.msra.mxu0 0
    %2050 = vmatprep.subr.bf16.mxu0 0
    %2051 = vmatpush1.bf16.xpose.msra.mxu0 0
    %2052 = vmatprep.subr.bf16.mxu0 0
    %2053 = vmatpush1.bf16.xpose.msra.mxu0 0
    %2054 = vmatprep.mubr.bf16.mxu0 0
    %2055 = vmatmul.mubr.bf16.gmra.mrb[0].mxu0 %v2017
    %v2056 = vpop.f32.mrb[0].mxu0
    %v2057 = vadd.f32 0.0, %v2056
    %v2058 = vpop.f32.mrb[0].mxu0
    %v2059 = vpop.f32.mrb[0].mxu0
    %v2060 = vpop.f32.mrb[0].mxu0
    %2061 = vdwg.mxu0
    %v2062 = vsel %vm316, %v2007, -inf
    %2063 = vmax.xlane.f32.xlu0 %v2062
    %v2064 = vpop.xlane.xlu0 %2063
    %v2065 = vsel %vm316, %v2057, -inf
    %2066 = vmax.xlane.f32.xlu0 %v2065
    %v2067 = vpop.xlane.xlu0 %2066
    %v2068 = vsub.f32 %v2007, %v2064
    %v2069 = vsub.f32 %v2057, %v2067
    %v2070 = vmul.f32 %v2068, 1.442695
    %v2071 = vpow.pop %v2070
    %v2072 = vmul.f32 %v2069, 1.442695
    %v2073 = vpow.pop %v2072
    %v2074 = vsel %vm316, %v2071, 0.0
    %2075 = vadd.xlane.f32.xlu0 %v2074
    %v2076 = vpop.xlane.xlu0 %2075
    %v2077 = vsel %vm316, %v2073, 0.0
    %2078 = vadd.xlane.f32.xlu0 %v2077
    %v2079 = vpop.xlane.xlu0 %2078
    %v2080 = vrcp.pop %v2076
    %v2081 = vrcp.pop %v2079
    %v2082 = vmul.f32 %v2071, %v2080
    %v2083 = vmul.f32 %v2073, %v2081
    %v2084 = vpack.c.bf16 %v2082, %v2082
    %v2085 = vpack.c.bf16 %v2083, %v2083
    %2086 = vrot.lane.b32.xlu0 %v1741, 56
    %v2087 = vpop.permute.xlu0 %2086
    %v2089 = vsel %vm316, %v2084, 0
    %v2092 = vsel %vm440, %v2087, 0
    %2094 = vmatprep.subr.bf16.mxu0 0
    %2095 = vmatpush1.bf16.msra.mxu0 %v2092
    %2096 = vmatprep.subr.bf16.mxu0 0
    %2097 = vmatpush1.bf16.msra.mxu0 0
    %2098 = vmatprep.subr.bf16.mxu0 0
    %2099 = vmatpush1.bf16.msra.mxu0 0
    %2100 = vmatprep.subr.bf16.mxu0 0
    %2101 = vmatpush1.bf16.msra.mxu0 0
    %2102 = vmatprep.subr.bf16.mxu0 0
    %2103 = vmatpush1.bf16.msra.mxu0 0
    %2104 = vmatprep.subr.bf16.mxu0 0
    %2105 = vmatpush1.bf16.msra.mxu0 0
    %2106 = vmatprep.subr.bf16.mxu0 0
    %2107 = vmatpush1.bf16.msra.mxu0 0
    %2108 = vmatprep.subr.bf16.mxu0 0
    %2109 = vmatpush1.bf16.msra.mxu0 0
    %2110 = vmatprep.subr.bf16.mxu0 0
    %2111 = vmatpush1.bf16.msra.mxu0 0
    %2112 = vmatprep.subr.bf16.mxu0 0
    %2113 = vmatpush1.bf16.msra.mxu0 0
    %2114 = vmatprep.subr.bf16.mxu0 0
    %2115 = vmatpush1.bf16.msra.mxu0 0
    %2116 = vmatprep.subr.bf16.mxu0 0
    %2117 = vmatpush1.bf16.msra.mxu0 0
    %2118 = vmatprep.subr.bf16.mxu0 0
    %2119 = vmatpush1.bf16.msra.mxu0 0
    %2120 = vmatprep.subr.bf16.mxu0 0
    %2121 = vmatpush1.bf16.msra.mxu0 0
    %2122 = vmatprep.subr.bf16.mxu0 0
    %2123 = vmatpush1.bf16.msra.mxu0 0
    %2124 = vmatprep.subr.bf16.mxu0 0
    %2125 = vmatpush1.bf16.msra.mxu0 0
    %2126 = vmatprep.mubr.bf16.mxu0 0
    %2127 = vmatmul.mubr.bf16.gmra.mrb[0].mxu0 %v2089
    %v2128 = vpop.f32.mrb[0].mxu0
    %v2129 = vadd.f32 0.0, %v2128
    %v2130 = vpop.f32.mrb[0].mxu0
    %v2131 = vpop.f32.mrb[0].mxu0
    %v2132 = vpop.f32.mrb[0].mxu0
    %2133 = vdwg.mxu0
    %2134 = vrot.lane.b32.xlu0 %v1742, 56
    %v2135 = vpop.permute.xlu0 %2134
    %v2137 = vsel %vm316, %v2085, 0
    %v2140 = vsel %vm440, %v2135, 0
    %2142 = vmatprep.subr.bf16.mxu0 0
    %2143 = vmatpush1.bf16.msra.mxu0 %v2140
    %2144 = vmatprep.subr.bf16.mxu0 0
    %2145 = vmatpush1.bf16.msra.mxu0 0
    %2146 = vmatprep.subr.bf16.mxu0 0
    %2147 = vmatpush1.bf16.msra.mxu0 0
    %2148 = vmatprep.subr.bf16.mxu0 0
    %2149 = vmatpush1.bf16.msra.mxu0 0
    %2150 = vmatprep.subr.bf16.mxu0 0
    %2151 = vmatpush1.bf16.msra.mxu0 0
    %2152 = vmatprep.subr.bf16.mxu0 0
    %2153 = vmatpush1.bf16.msra.mxu0 0
    %2154 = vmatprep.subr.bf16.mxu0 0
    %2155 = vmatpush1.bf16.msra.mxu0 0
    %2156 = vmatprep.subr.bf16.mxu0 0
    %2157 = vmatpush1.bf16.msra.mxu0 0
    %2158 = vmatprep.subr.bf16.mxu0 0
    %2159 = vmatpush1.bf16.msra.mxu0 0
    %2160 = vmatprep.subr.bf16.mxu0 0
    %2161 = vmatpush1.bf16.msra.mxu0 0
    %2162 = vmatprep.subr.bf16.mxu0 0
    %2163 = vmatpush1.bf16.msra.mxu0 0
    %2164 = vmatprep.subr.bf16.mxu0 0
    %2165 = vmatpush1.bf16.msra.mxu0 0
    %2166 = vmatprep.subr.bf16.mxu0 0
    %2167 = vmatpush1.bf16.msra.mxu0 0
    %2168 = vmatprep.subr.bf16.mxu0 0
    %2169 = vmatpush1.bf16.msra.mxu0 0
    %2170 = vmatprep.subr.bf16.mxu0 0
    %2171 = vmatpush1.bf16.msra.mxu0 0
    %2172 = vmatprep.subr.bf16.mxu0 0
    %2173 = vmatpush1.bf16.msra.mxu0 0
    %2174 = vmatprep.mubr.bf16.mxu0 0
    %2175 = vmatmul.mubr.bf16.gmra.mrb[0].mxu0 %v2137
    %v2176 = vpop.f32.mrb[0].mxu0
    %v2177 = vadd.f32 0.0, %v2176
    %v2178 = vpop.f32.mrb[0].mxu0
    %v2179 = vpop.f32.mrb[0].mxu0
    %v2180 = vpop.f32.mrb[0].mxu0
    %2181 = vdwg.mxu0
    %v2182 = vpack.c.bf16 %v2177, %v2129
    %s2183 = scalar_lea.vmem %s7, 20
    %v2184 = vld [vmem:[%s2183] sm:$0xf]
    %v2186 = vsel %vm316, %v2182, 0
    %v2189 = vsel %vm440, %v2184, 0
    %2191 = vmatprep.subr.bf16.mxu0 0
    %2192 = vmatpush1.bf16.msra.mxu0 %v2189
    %2193 = vmatprep.subr.bf16.mxu0 0
    %2194 = vmatpush1.bf16.msra.mxu0 0
    %2195 = vmatprep.subr.bf16.mxu0 0
    %2196 = vmatpush1.bf16.msra.mxu0 0
    %2197 = vmatprep.subr.bf16.mxu0 0
    %2198 = vmatpush1.bf16.msra.mxu0 0
    %2199 = vmatprep.subr.bf16.mxu0 0
    %2200 = vmatpush1.bf16.msra.mxu0 0
    %2201 = vmatprep.subr.bf16.mxu0 0
    %2202 = vmatpush1.bf16.msra.mxu0 0
    %2203 = vmatprep.subr.bf16.mxu0 0
    %2204 = vmatpush1.bf16.msra.mxu0 0
    %2205 = vmatprep.subr.bf16.mxu0 0
    %2206 = vmatpush1.bf16.msra.mxu0 0
    %2207 = vmatprep.subr.bf16.mxu0 0
    %2208 = vmatpush1.bf16.msra.mxu0 0
    %2209 = vmatprep.subr.bf16.mxu0 0
    %2210 = vmatpush1.bf16.msra.mxu0 0
    %2211 = vmatprep.subr.bf16.mxu0 0
    %2212 = vmatpush1.bf16.msra.mxu0 0
    %2213 = vmatprep.subr.bf16.mxu0 0
    %2214 = vmatpush1.bf16.msra.mxu0 0
    %2215 = vmatprep.subr.bf16.mxu0 0
    %2216 = vmatpush1.bf16.msra.mxu0 0
    %2217 = vmatprep.subr.bf16.mxu0 0
    %2218 = vmatpush1.bf16.msra.mxu0 0
    %2219 = vmatprep.subr.bf16.mxu0 0
    %2220 = vmatpush1.bf16.msra.mxu0 0
    %2221 = vmatprep.subr.bf16.mxu0 0
    %2222 = vmatpush1.bf16.msra.mxu0 0
    %2223 = vmatprep.mubr.bf16.mxu0 0
    %2224 = vmatmul.mubr.bf16.gmra.mrb[0].mxu0 %v2186
    %v2225 = vpop.f32.mrb[0].mxu0
    %v2226 = vadd.f32 0.0, %v2225
    %v2227 = vpop.f32.mrb[0].mxu0
    %v2228 = vpop.f32.mrb[0].mxu0
    %v2229 = vadd.f32 0.0, %v2228
    %v2230 = vpop.f32.mrb[0].mxu0
    %2231 = vdwg.mxu0
    %v2233 = vsel %vm316, %v1959, 0
    %v2236 = vsel %vm440, %v1961, 0
    %2238 = vmatprep.subr.bf16.mxu0 0
    %2239 = vmatpush1.bf16.msra.mxu0 %v2236
    %2240 = vmatprep.subr.bf16.mxu0 0
    %2241 = vmatpush1.bf16.msra.mxu0 0
    %2242 = vmatprep.subr.bf16.mxu0 0
    %2243 = vmatpush1.bf16.msra.mxu0 0
    %2244 = vmatprep.subr.bf16.mxu0 0
    %2245 = vmatpush1.bf16.msra.mxu0 0
    %2246 = vmatprep.subr.bf16.mxu0 0
    %2247 = vmatpush1.bf16.msra.mxu0 0
    %2248 = vmatprep.subr.bf16.mxu0 0
    %2249 = vmatpush1.bf16.msra.mxu0 0
    %2250 = vmatprep.subr.bf16.mxu0 0
    %2251 = vmatpush1.bf16.msra.mxu0 0
    %2252 = vmatprep.subr.bf16.mxu0 0
    %2253 = vmatpush1.bf16.msra.mxu0 0
    %2254 = vmatprep.subr.bf16.mxu0 0
    %2255 = vmatpush1.bf16.msra.mxu0 0
    %2256 = vmatprep.subr.bf16.mxu0 0
    %2257 = vmatpush1.bf16.msra.mxu0 0
    %2258 = vmatprep.subr.bf16.mxu0 0
    %2259 = vmatpush1.bf16.msra.mxu0 0
    %2260 = vmatprep.subr.bf16.mxu0 0
    %2261 = vmatpush1.bf16.msra.mxu0 0
    %2262 = vmatprep.subr.bf16.mxu0 0
    %2263 = vmatpush1.bf16.msra.mxu0 0
    %2264 = vmatprep.subr.bf16.mxu0 0
    %2265 = vmatpush1.bf16.msra.mxu0 0
    %2266 = vmatprep.subr.bf16.mxu0 0
    %2267 = vmatpush1.bf16.msra.mxu0 0
    %2268 = vmatprep.subr.bf16.mxu0 0
    %2269 = vmatpush1.bf16.msra.mxu0 0
    %2270 = vmatprep.mubr.bf16.mxu0 0
    %2271 = vmatmul.mubr.bf16.gmra.mrb[0].mxu0 %v2233
    %v2272 = vpop.f32.mrb[0].mxu0
    %v2273 = vadd.f32 %v2226, %v2272
    %v2274 = vpop.f32.mrb[0].mxu0
    %v2275 = vpop.f32.mrb[0].mxu0
    %v2276 = vadd.f32 %v2229, %v2275
    %v2277 = vpop.f32.mrb[0].mxu0
    %2278 = vdwg.mxu0
    %2279 = vrot.lane.b32.xlu0 %v1741, 112
    %v2280 = vpop.permute.xlu0 %2279
    %2281 = vrot.lane.b32.xlu0 %v1741, 80
    %v2282 = vpop.permute.xlu0 %2281
    %v2284 = vsel %vm316, %v2280, 0
    %v2287 = vsel %vm316, %v2282, 0
    %2289 = vmatprep.subr.bf16.mxu0 0
    %2290 = vmatpush1.bf16.xpose.msra.mxu0 %v2287
    %2291 = vmatprep.subr.bf16.mxu0 0
    %2292 = vmatpush1.bf16.xpose.msra.mxu0 0
    %2293 = vmatprep.subr.bf16.mxu0 0
    %2294 = vmatpush1.bf16.xpose.msra.mxu0 0
    %2295 = vmatprep.subr.bf16.mxu0 0
    %2296 = vmatpush1.bf16.xpose.msra.mxu0 0
    %2297 = vmatprep.subr.bf16.mxu0 0
    %2298 = vmatpush1.bf16.xpose.msra.mxu0 0
    %2299 = vmatprep.subr.bf16.mxu0 0
    %2300 = vmatpush1.bf16.xpose.msra.mxu0 0
    %2301 = vmatprep.subr.bf16.mxu0 0
    %2302 = vmatpush1.bf16.xpose.msra.mxu0 0
    %2303 = vmatprep.subr.bf16.mxu0 0
    %2304 = vmatpush1.bf16.xpose.msra.mxu0 0
    %2305 = vmatprep.subr.bf16.mxu0 0
    %2306 = vmatpush1.bf16.xpose.msra.mxu0 0
    %2307 = vmatprep.subr.bf16.mxu0 0
    %2308 = vmatpush1.bf16.xpose.msra.mxu0 0
    %2309 = vmatprep.subr.bf16.mxu0 0
    %2310 = vmatpush1.bf16.xpose.msra.mxu0 0
    %2311 = vmatprep.subr.bf16.mxu0 0
    %2312 = vmatpush1.bf16.xpose.msra.mxu0 0
    %2313 = vmatprep.subr.bf16.mxu0 0
    %2314 = vmatpush1.bf16.xpose.msra.mxu0 0
    %2315 = vmatprep.subr.bf16.mxu0 0
    %2316 = vmatpush1.bf16.xpose.msra.mxu0 0
    %2317 = vmatprep.subr.bf16.mxu0 0
    %2318 = vmatpush1.bf16.xpose.msra.mxu0 0
    %2319 = vmatprep.subr.bf16.mxu0 0
    %2320 = vmatpush1.bf16.xpose.msra.mxu0 0
    %2321 = vmatprep.mubr.bf16.mxu0 0
    %2322 = vmatmul.mubr.bf16.gmra.mrb[0].mxu0 %v2284
    %v2323 = vpop.f32.mrb[0].mxu0
    %v2324 = vadd.f32 0.0, %v2323
    %v2325 = vpop.f32.mrb[0].mxu0
    %v2326 = vpop.f32.mrb[0].mxu0
    %v2327 = vpop.f32.mrb[0].mxu0
    %2328 = vdwg.mxu0
    %2329 = vrot.lane.b32.xlu0 %v1742, 112
    %v2330 = vpop.permute.xlu0 %2329
    %2331 = vrot.lane.b32.xlu0 %v1742, 80
    %v2332 = vpop.permute.xlu0 %2331
    %v2334 = vsel %vm316, %v2330, 0
    %v2337 = vsel %vm316, %v2332, 0
    %2339 = vmatprep.subr.bf16.mxu0 0
    %2340 = vmatpush1.bf16.xpose.msra.mxu0 %v2337
    %2341 = vmatprep.subr.bf16.mxu0 0
    %2342 = vmatpush1.bf16.xpose.msra.mxu0 0
    %2343 = vmatprep.subr.bf16.mxu0 0
    %2344 = vmatpush1.bf16.xpose.msra.mxu0 0
    %2345 = vmatprep.subr.bf16.mxu0 0
    %2346 = vmatpush1.bf16.xpose.msra.mxu0 0
    %2347 = vmatprep.subr.bf16.mxu0 0
    %2348 = vmatpush1.bf16.xpose.msra.mxu0 0
    %2349 = vmatprep.subr.bf16.mxu0 0
    %2350 = vmatpush1.bf16.xpose.msra.mxu0 0
    %2351 = vmatprep.subr.bf16.mxu0 0
    %2352 = vmatpush1.bf16.xpose.msra.mxu0 0
    %2353 = vmatprep.subr.bf16.mxu0 0
    %2354 = vmatpush1.bf16.xpose.msra.mxu0 0
    %2355 = vmatprep.subr.bf16.mxu0 0
    %2356 = vmatpush1.bf16.xpose.msra.mxu0 0
    %2357 = vmatprep.subr.bf16.mxu0 0
    %2358 = vmatpush1.bf16.xpose.msra.mxu0 0
    %2359 = vmatprep.subr.bf16.mxu0 0
    %2360 = vmatpush1.bf16.xpose.msra.mxu0 0
    %2361 = vmatprep.subr.bf16.mxu0 0
    %2362 = vmatpush1.bf16.xpose.msra.mxu0 0
    %2363 = vmatprep.subr.bf16.mxu0 0
    %2364 = vmatpush1.bf16.xpose.msra.mxu0 0
    %2365 = vmatprep.subr.bf16.mxu0 0
    %2366 = vmatpush1.bf16.xpose.msra.mxu0 0
    %2367 = vmatprep.subr.bf16.mxu0 0
    %2368 = vmatpush1.bf16.xpose.msra.mxu0 0
    %2369 = vmatprep.subr.bf16.mxu0 0
    %2370 = vmatpush1.bf16.xpose.msra.mxu0 0
    %2371 = vmatprep.mubr.bf16.mxu0 0
    %2372 = vmatmul.mubr.bf16.gmra.mrb[0].mxu0 %v2334
    %v2373 = vpop.f32.mrb[0].mxu0
    %v2374 = vadd.f32 0.0, %v2373
    %v2375 = vpop.f32.mrb[0].mxu0
    %v2376 = vpop.f32.mrb[0].mxu0
    %v2377 = vpop.f32.mrb[0].mxu0
    %2378 = vdwg.mxu0
    %v2379 = vsel %vm316, %v2324, -inf
    %2380 = vmax.xlane.f32.xlu0 %v2379
    %v2381 = vpop.xlane.xlu0 %2380
    %v2382 = vsel %vm316, %v2374, -inf
    %2383 = vmax.xlane.f32.xlu0 %v2382
    %v2384 = vpop.xlane.xlu0 %2383
    %v2385 = vsub.f32 %v2324, %v2381
    %v2386 = vsub.f32 %v2374, %v2384
    %v2387 = vmul.f32 %v2385, 1.442695
    %v2388 = vpow.pop %v2387
    %v2389 = vmul.f32 %v2386, 1.442695
    %v2390 = vpow.pop %v2389
    %v2391 = vsel %vm316, %v2388, 0.0
    %2392 = vadd.xlane.f32.xlu0 %v2391
    %v2393 = vpop.xlane.xlu0 %2392
    %v2394 = vsel %vm316, %v2390, 0.0
    %2395 = vadd.xlane.f32.xlu0 %v2394
    %v2396 = vpop.xlane.xlu0 %2395
    %v2397 = vrcp.pop %v2393
    %v2398 = vrcp.pop %v2396
    %v2399 = vmul.f32 %v2388, %v2397
    %v2400 = vmul.f32 %v2390, %v2398
    %v2401 = vpack.c.bf16 %v2399, %v2399
    %v2402 = vpack.c.bf16 %v2400, %v2400
    %2403 = vrot.lane.b32.xlu0 %v1741, 48
    %v2404 = vpop.permute.xlu0 %2403
    %v2406 = vsel %vm316, %v2401, 0
    %v2409 = vsel %vm440, %v2404, 0
    %2411 = vmatprep.subr.bf16.mxu0 0
    %2412 = vmatpush1.bf16.msra.mxu0 %v2409
    %2413 = vmatprep.subr.bf16.mxu0 0
    %2414 = vmatpush1.bf16.msra.mxu0 0
    %2415 = vmatprep.subr.bf16.mxu0 0
    %2416 = vmatpush1.bf16.msra.mxu0 0
    %2417 = vmatprep.subr.bf16.mxu0 0
    %2418 = vmatpush1.bf16.msra.mxu0 0
    %2419 = vmatprep.subr.bf16.mxu0 0
    %2420 = vmatpush1.bf16.msra.mxu0 0
    %2421 = vmatprep.subr.bf16.mxu0 0
    %2422 = vmatpush1.bf16.msra.mxu0 0
    %2423 = vmatprep.subr.bf16.mxu0 0
    %2424 = vmatpush1.bf16.msra.mxu0 0
    %2425 = vmatprep.subr.bf16.mxu0 0
    %2426 = vmatpush1.bf16.msra.mxu0 0
    %2427 = vmatprep.subr.bf16.mxu0 0
    %2428 = vmatpush1.bf16.msra.mxu0 0
    %2429 = vmatprep.subr.bf16.mxu0 0
    %2430 = vmatpush1.bf16.msra.mxu0 0
    %2431 = vmatprep.subr.bf16.mxu0 0
    %2432 = vmatpush1.bf16.msra.mxu0 0
    %2433 = vmatprep.subr.bf16.mxu0 0
    %2434 = vmatpush1.bf16.msra.mxu0 0
    %2435 = vmatprep.subr.bf16.mxu0 0
    %2436 = vmatpush1.bf16.msra.mxu0 0
    %2437 = vmatprep.subr.bf16.mxu0 0
    %2438 = vmatpush1.bf16.msra.mxu0 0
    %2439 = vmatprep.subr.bf16.mxu0 0
    %2440 = vmatpush1.bf16.msra.mxu0 0
    %2441 = vmatprep.subr.bf16.mxu0 0
    %2442 = vmatpush1.bf16.msra.mxu0 0
    %2443 = vmatprep.mubr.bf16.mxu0 0
    %2444 = vmatmul.mubr.bf16.gmra.mrb[0].mxu0 %v2406
    %v2445 = vpop.f32.mrb[0].mxu0
    %v2446 = vadd.f32 0.0, %v2445
    %v2447 = vpop.f32.mrb[0].mxu0
    %v2448 = vpop.f32.mrb[0].mxu0
    %v2449 = vpop.f32.mrb[0].mxu0
    %2450 = vdwg.mxu0
    %2451 = vrot.lane.b32.xlu0 %v1742, 48
    %v2452 = vpop.permute.xlu0 %2451
    %v2454 = vsel %vm316, %v2402, 0
    %v2457 = vsel %vm440, %v2452, 0
    %2459 = vmatprep.subr.bf16.mxu0 0
    %2460 = vmatpush1.bf16.msra.mxu0 %v2457
    %2461 = vmatprep.subr.bf16.mxu0 0
    %2462 = vmatpush1.bf16.msra.mxu0 0
    %2463 = vmatprep.subr.bf16.mxu0 0
    %2464 = vmatpush1.bf16.msra.mxu0 0
    %2465 = vmatprep.subr.bf16.mxu0 0
    %2466 = vmatpush1.bf16.msra.mxu0 0
    %2467 = vmatprep.subr.bf16.mxu0 0
    %2468 = vmatpush1.bf16.msra.mxu0 0
    %2469 = vmatprep.subr.bf16.mxu0 0
    %2470 = vmatpush1.bf16.msra.mxu0 0
    %2471 = vmatprep.subr.bf16.mxu0 0
    %2472 = vmatpush1.bf16.msra.mxu0 0
    %2473 = vmatprep.subr.bf16.mxu0 0
    %2474 = vmatpush1.bf16.msra.mxu0 0
    %2475 = vmatprep.subr.bf16.mxu0 0
    %2476 = vmatpush1.bf16.msra.mxu0 0
    %2477 = vmatprep.subr.bf16.mxu0 0
    %2478 = vmatpush1.bf16.msra.mxu0 0
    %2479 = vmatprep.subr.bf16.mxu0 0
    %2480 = vmatpush1.bf16.msra.mxu0 0
    %2481 = vmatprep.subr.bf16.mxu0 0
    %2482 = vmatpush1.bf16.msra.mxu0 0
    %2483 = vmatprep.subr.bf16.mxu0 0
    %2484 = vmatpush1.bf16.msra.mxu0 0
    %2485 = vmatprep.subr.bf16.mxu0 0
    %2486 = vmatpush1.bf16.msra.mxu0 0
    %2487 = vmatprep.subr.bf16.mxu0 0
    %2488 = vmatpush1.bf16.msra.mxu0 0
    %2489 = vmatprep.subr.bf16.mxu0 0
    %2490 = vmatpush1.bf16.msra.mxu0 0
    %2491 = vmatprep.mubr.bf16.mxu0 0
    %2492 = vmatmul.mubr.bf16.gmra.mrb[0].mxu0 %v2454
    %v2493 = vpop.f32.mrb[0].mxu0
    %v2494 = vadd.f32 0.0, %v2493
    %v2495 = vpop.f32.mrb[0].mxu0
    %v2496 = vpop.f32.mrb[0].mxu0
    %v2497 = vpop.f32.mrb[0].mxu0
    %2498 = vdwg.mxu0
    %v2499 = vpack.c.bf16 %v2494, %v2446
    %s2500 = scalar_lea.vmem %s7, 24
    %v2501 = vld [vmem:[%s2500] sm:$0xf]
    %v2503 = vsel %vm316, %v2499, 0
    %v2506 = vsel %vm440, %v2501, 0
    %2508 = vmatprep.subr.bf16.mxu0 0
    %2509 = vmatpush1.bf16.msra.mxu0 %v2506
    %2510 = vmatprep.subr.bf16.mxu0 0
    %2511 = vmatpush1.bf16.msra.mxu0 0
    %2512 = vmatprep.subr.bf16.mxu0 0
    %2513 = vmatpush1.bf16.msra.mxu0 0
    %2514 = vmatprep.subr.bf16.mxu0 0
    %2515 = vmatpush1.bf16.msra.mxu0 0
    %2516 = vmatprep.subr.bf16.mxu0 0
    %2517 = vmatpush1.bf16.msra.mxu0 0
    %2518 = vmatprep.subr.bf16.mxu0 0
    %2519 = vmatpush1.bf16.msra.mxu0 0
    %2520 = vmatprep.subr.bf16.mxu0 0
    %2521 = vmatpush1.bf16.msra.mxu0 0
    %2522 = vmatprep.subr.bf16.mxu0 0
    %2523 = vmatpush1.bf16.msra.mxu0 0
    %2524 = vmatprep.subr.bf16.mxu0 0
    %2525 = vmatpush1.bf16.msra.mxu0 0
    %2526 = vmatprep.subr.bf16.mxu0 0
    %2527 = vmatpush1.bf16.msra.mxu0 0
    %2528 = vmatprep.subr.bf16.mxu0 0
    %2529 = vmatpush1.bf16.msra.mxu0 0
    %2530 = vmatprep.subr.bf16.mxu0 0
    %2531 = vmatpush1.bf16.msra.mxu0 0
    %2532 = vmatprep.subr.bf16.mxu0 0
    %2533 = vmatpush1.bf16.msra.mxu0 0
    %2534 = vmatprep.subr.bf16.mxu0 0
    %2535 = vmatpush1.bf16.msra.mxu0 0
    %2536 = vmatprep.subr.bf16.mxu0 0
    %2537 = vmatpush1.bf16.msra.mxu0 0
    %2538 = vmatprep.subr.bf16.mxu0 0
    %2539 = vmatpush1.bf16.msra.mxu0 0
    %2540 = vmatprep.mubr.bf16.mxu0 0
    %2541 = vmatmul.mubr.bf16.gmra.mrb[0].mxu0 %v2503
    %v2542 = vpop.f32.mrb[0].mxu0
    %v2543 = vadd.f32 0.0, %v2542
    %v2544 = vpop.f32.mrb[0].mxu0
    %v2545 = vpop.f32.mrb[0].mxu0
    %v2546 = vadd.f32 0.0, %v2545
    %v2547 = vpop.f32.mrb[0].mxu0
    %2548 = vdwg.mxu0
    %v2549 = vadd.f32 %v2273, %v2543
    %v2550 = vadd.f32 %v2276, %v2546
    %2551 = vrot.lane.b32.xlu0 %v1741, 104
    %v2552 = vpop.permute.xlu0 %2551
    %2553 = vrot.lane.b32.xlu0 %v1741, 72
    %v2554 = vpop.permute.xlu0 %2553
    %v2556 = vsel %vm316, %v2552, 0
    %v2559 = vsel %vm316, %v2554, 0
    %2561 = vmatprep.subr.bf16.mxu0 0
    %2562 = vmatpush1.bf16.xpose.msra.mxu0 %v2559
    %2563 = vmatprep.subr.bf16.mxu0 0
    %2564 = vmatpush1.bf16.xpose.msra.mxu0 0
    %2565 = vmatprep.subr.bf16.mxu0 0
    %2566 = vmatpush1.bf16.xpose.msra.mxu0 0
    %2567 = vmatprep.subr.bf16.mxu0 0
    %2568 = vmatpush1.bf16.xpose.msra.mxu0 0
    %2569 = vmatprep.subr.bf16.mxu0 0
    %2570 = vmatpush1.bf16.xpose.msra.mxu0 0
    %2571 = vmatprep.subr.bf16.mxu0 0
    %2572 = vmatpush1.bf16.xpose.msra.mxu0 0
    %2573 = vmatprep.subr.bf16.mxu0 0
    %2574 = vmatpush1.bf16.xpose.msra.mxu0 0
    %2575 = vmatprep.subr.bf16.mxu0 0
    %2576 = vmatpush1.bf16.xpose.msra.mxu0 0
    %2577 = vmatprep.subr.bf16.mxu0 0
    %2578 = vmatpush1.bf16.xpose.msra.mxu0 0
    %2579 = vmatprep.subr.bf16.mxu0 0
    %2580 = vmatpush1.bf16.xpose.msra.mxu0 0
    %2581 = vmatprep.subr.bf16.mxu0 0
    %2582 = vmatpush1.bf16.xpose.msra.mxu0 0
    %2583 = vmatprep.subr.bf16.mxu0 0
    %2584 = vmatpush1.bf16.xpose.msra.mxu0 0
    %2585 = vmatprep.subr.bf16.mxu0 0
    %2586 = vmatpush1.bf16.xpose.msra.mxu0 0
    %2587 = vmatprep.subr.bf16.mxu0 0
    %2588 = vmatpush1.bf16.xpose.msra.mxu0 0
    %2589 = vmatprep.subr.bf16.mxu0 0
    %2590 = vmatpush1.bf16.xpose.msra.mxu0 0
    %2591 = vmatprep.subr.bf16.mxu0 0
    %2592 = vmatpush1.bf16.xpose.msra.mxu0 0
    %2593 = vmatprep.mubr.bf16.mxu0 0
    %2594 = vmatmul.mubr.bf16.gmra.mrb[0].mxu0 %v2556
    %v2595 = vpop.f32.mrb[0].mxu0
    %v2596 = vadd.f32 0.0, %v2595
    %v2597 = vpop.f32.mrb[0].mxu0
    %v2598 = vpop.f32.mrb[0].mxu0
    %v2599 = vpop.f32.mrb[0].mxu0
    %2600 = vdwg.mxu0
    %2601 = vrot.lane.b32.xlu0 %v1742, 104
    %v2602 = vpop.permute.xlu0 %2601
    %2603 = vrot.lane.b32.xlu0 %v1742, 72
    %v2604 = vpop.permute.xlu0 %2603
    %v2606 = vsel %vm316, %v2602, 0
    %v2609 = vsel %vm316, %v2604, 0
    %2611 = vmatprep.subr.bf16.mxu0 0
    %2612 = vmatpush1.bf16.xpose.msra.mxu0 %v2609
    %2613 = vmatprep.subr.bf16.mxu0 0
    %2614 = vmatpush1.bf16.xpose.msra.mxu0 0
    %2615 = vmatprep.subr.bf16.mxu0 0
    %2616 = vmatpush1.bf16.xpose.msra.mxu0 0
    %2617 = vmatprep.subr.bf16.mxu0 0
    %2618 = vmatpush1.bf16.xpose.msra.mxu0 0
    %2619 = vmatprep.subr.bf16.mxu0 0
    %2620 = vmatpush1.bf16.xpose.msra.mxu0 0
    %2621 = vmatprep.subr.bf16.mxu0 0
    %2622 = vmatpush1.bf16.xpose.msra.mxu0 0
    %2623 = vmatprep.subr.bf16.mxu0 0
    %2624 = vmatpush1.bf16.xpose.msra.mxu0 0
    %2625 = vmatprep.subr.bf16.mxu0 0
    %2626 = vmatpush1.bf16.xpose.msra.mxu0 0
    %2627 = vmatprep.subr.bf16.mxu0 0
    %2628 = vmatpush1.bf16.xpose.msra.mxu0 0
    %2629 = vmatprep.subr.bf16.mxu0 0
    %2630 = vmatpush1.bf16.xpose.msra.mxu0 0
    %2631 = vmatprep.subr.bf16.mxu0 0
    %2632 = vmatpush1.bf16.xpose.msra.mxu0 0
    %2633 = vmatprep.subr.bf16.mxu0 0
    %2634 = vmatpush1.bf16.xpose.msra.mxu0 0
    %2635 = vmatprep.subr.bf16.mxu0 0
    %2636 = vmatpush1.bf16.xpose.msra.mxu0 0
    %2637 = vmatprep.subr.bf16.mxu0 0
    %2638 = vmatpush1.bf16.xpose.msra.mxu0 0
    %2639 = vmatprep.subr.bf16.mxu0 0
    %2640 = vmatpush1.bf16.xpose.msra.mxu0 0
    %2641 = vmatprep.subr.bf16.mxu0 0
    %2642 = vmatpush1.bf16.xpose.msra.mxu0 0
    %2643 = vmatprep.mubr.bf16.mxu0 0
    %2644 = vmatmul.mubr.bf16.gmra.mrb[0].mxu0 %v2606
    %v2645 = vpop.f32.mrb[0].mxu0
    %v2646 = vadd.f32 0.0, %v2645
    %v2647 = vpop.f32.mrb[0].mxu0
    %v2648 = vpop.f32.mrb[0].mxu0
    %v2649 = vpop.f32.mrb[0].mxu0
    %2650 = vdwg.mxu0
    %v2651 = vsel %vm316, %v2596, -inf
    %2652 = vmax.xlane.f32.xlu0 %v2651
    %v2653 = vpop.xlane.xlu0 %2652
    %v2654 = vsel %vm316, %v2646, -inf
    %2655 = vmax.xlane.f32.xlu0 %v2654
    %v2656 = vpop.xlane.xlu0 %2655
    %v2657 = vsub.f32 %v2596, %v2653
    %v2658 = vsub.f32 %v2646, %v2656
    %v2659 = vmul.f32 %v2657, 1.442695
    %v2660 = vpow.pop %v2659
    %v2661 = vmul.f32 %v2658, 1.442695
    %v2662 = vpow.pop %v2661
    %v2663 = vsel %vm316, %v2660, 0.0
    %2664 = vadd.xlane.f32.xlu0 %v2663
    %v2665 = vpop.xlane.xlu0 %2664
    %v2666 = vsel %vm316, %v2662, 0.0
    %2667 = vadd.xlane.f32.xlu0 %v2666
    %v2668 = vpop.xlane.xlu0 %2667
    %v2669 = vrcp.pop %v2665
    %v2670 = vrcp.pop %v2668
    %v2671 = vmul.f32 %v2660, %v2669
    %v2672 = vmul.f32 %v2662, %v2670
    %v2673 = vpack.c.bf16 %v2671, %v2671
    %v2674 = vpack.c.bf16 %v2672, %v2672
    %2675 = vrot.lane.b32.xlu0 %v1741, 40
    %v2676 = vpop.permute.xlu0 %2675
    %v2678 = vsel %vm316, %v2673, 0
    %v2681 = vsel %vm440, %v2676, 0
    %2683 = vmatprep.subr.bf16.mxu0 0
    %2684 = vmatpush1.bf16.msra.mxu0 %v2681
    %2685 = vmatprep.subr.bf16.mxu0 0
    %2686 = vmatpush1.bf16.msra.mxu0 0
    %2687 = vmatprep.subr.bf16.mxu0 0
    %2688 = vmatpush1.bf16.msra.mxu0 0
    %2689 = vmatprep.subr.bf16.mxu0 0
    %2690 = vmatpush1.bf16.msra.mxu0 0
    %2691 = vmatprep.subr.bf16.mxu0 0
    %2692 = vmatpush1.bf16.msra.mxu0 0
    %2693 = vmatprep.subr.bf16.mxu0 0
    %2694 = vmatpush1.bf16.msra.mxu0 0
    %2695 = vmatprep.subr.bf16.mxu0 0
    %2696 = vmatpush1.bf16.msra.mxu0 0
    %2697 = vmatprep.subr.bf16.mxu0 0
    %2698 = vmatpush1.bf16.msra.mxu0 0
    %2699 = vmatprep.subr.bf16.mxu0 0
    %2700 = vmatpush1.bf16.msra.mxu0 0
    %2701 = vmatprep.subr.bf16.mxu0 0
    %2702 = vmatpush1.bf16.msra.mxu0 0
    %2703 = vmatprep.subr.bf16.mxu0 0
    %2704 = vmatpush1.bf16.msra.mxu0 0
    %2705 = vmatprep.subr.bf16.mxu0 0
    %2706 = vmatpush1.bf16.msra.mxu0 0
    %2707 = vmatprep.subr.bf16.mxu0 0
    %2708 = vmatpush1.bf16.msra.mxu0 0
    %2709 = vmatprep.subr.bf16.mxu0 0
    %2710 = vmatpush1.bf16.msra.mxu0 0
    %2711 = vmatprep.subr.bf16.mxu0 0
    %2712 = vmatpush1.bf16.msra.mxu0 0
    %2713 = vmatprep.subr.bf16.mxu0 0
    %2714 = vmatpush1.bf16.msra.mxu0 0
    %2715 = vmatprep.mubr.bf16.mxu0 0
    %2716 = vmatmul.mubr.bf16.gmra.mrb[0].mxu0 %v2678
    %v2717 = vpop.f32.mrb[0].mxu0
    %v2718 = vadd.f32 0.0, %v2717
    %v2719 = vpop.f32.mrb[0].mxu0
    %v2720 = vpop.f32.mrb[0].mxu0
    %v2721 = vpop.f32.mrb[0].mxu0
    %2722 = vdwg.mxu0
    %2723 = vrot.lane.b32.xlu0 %v1742, 40
    %v2724 = vpop.permute.xlu0 %2723
    %v2726 = vsel %vm316, %v2674, 0
    %v2729 = vsel %vm440, %v2724, 0
    %2731 = vmatprep.subr.bf16.mxu0 0
    %2732 = vmatpush1.bf16.msra.mxu0 %v2729
    %2733 = vmatprep.subr.bf16.mxu0 0
    %2734 = vmatpush1.bf16.msra.mxu0 0
    %2735 = vmatprep.subr.bf16.mxu0 0
    %2736 = vmatpush1.bf16.msra.mxu0 0
    %2737 = vmatprep.subr.bf16.mxu0 0
    %2738 = vmatpush1.bf16.msra.mxu0 0
    %2739 = vmatprep.subr.bf16.mxu0 0
    %2740 = vmatpush1.bf16.msra.mxu0 0
    %2741 = vmatprep.subr.bf16.mxu0 0
    %2742 = vmatpush1.bf16.msra.mxu0 0
    %2743 = vmatprep.subr.bf16.mxu0 0
    %2744 = vmatpush1.bf16.msra.mxu0 0
    %2745 = vmatprep.subr.bf16.mxu0 0
    %2746 = vmatpush1.bf16.msra.mxu0 0
    %2747 = vmatprep.subr.bf16.mxu0 0
    %2748 = vmatpush1.bf16.msra.mxu0 0
    %2749 = vmatprep.subr.bf16.mxu0 0
    %2750 = vmatpush1.bf16.msra.mxu0 0
    %2751 = vmatprep.subr.bf16.mxu0 0
    %2752 = vmatpush1.bf16.msra.mxu0 0
    %2753 = vmatprep.subr.bf16.mxu0 0
    %2754 = vmatpush1.bf16.msra.mxu0 0
    %2755 = vmatprep.subr.bf16.mxu0 0
    %2756 = vmatpush1.bf16.msra.mxu0 0
    %2757 = vmatprep.subr.bf16.mxu0 0
    %2758 = vmatpush1.bf16.msra.mxu0 0
    %2759 = vmatprep.subr.bf16.mxu0 0
    %2760 = vmatpush1.bf16.msra.mxu0 0
    %2761 = vmatprep.subr.bf16.mxu0 0
    %2762 = vmatpush1.bf16.msra.mxu0 0
    %2763 = vmatprep.mubr.bf16.mxu0 0
    %2764 = vmatmul.mubr.bf16.gmra.mrb[0].mxu0 %v2726
    %v2765 = vpop.f32.mrb[0].mxu0
    %v2766 = vadd.f32 0.0, %v2765
    %v2767 = vpop.f32.mrb[0].mxu0
    %v2768 = vpop.f32.mrb[0].mxu0
    %v2769 = vpop.f32.mrb[0].mxu0
    %2770 = vdwg.mxu0
    %v2771 = vpack.c.bf16 %v2766, %v2718
    %s2772 = scalar_lea.vmem %s7, 28
    %v2773 = vld [vmem:[%s2772] sm:$0xf]
    %v2775 = vsel %vm316, %v2771, 0
    %v2778 = vsel %vm440, %v2773, 0
    %2780 = vmatprep.subr.bf16.mxu0 0
    %2781 = vmatpush1.bf16.msra.mxu0 %v2778
    %2782 = vmatprep.subr.bf16.mxu0 0
    %2783 = vmatpush1.bf16.msra.mxu0 0
    %2784 = vmatprep.subr.bf16.mxu0 0
    %2785 = vmatpush1.bf16.msra.mxu0 0
    %2786 = vmatprep.subr.bf16.mxu0 0
    %2787 = vmatpush1.bf16.msra.mxu0 0
    %2788 = vmatprep.subr.bf16.mxu0 0
    %2789 = vmatpush1.bf16.msra.mxu0 0
    %2790 = vmatprep.subr.bf16.mxu0 0
    %2791 = vmatpush1.bf16.msra.mxu0 0
    %2792 = vmatprep.subr.bf16.mxu0 0
    %2793 = vmatpush1.bf16.msra.mxu0 0
    %2794 = vmatprep.subr.bf16.mxu0 0
    %2795 = vmatpush1.bf16.msra.mxu0 0
    %2796 = vmatprep.subr.bf16.mxu0 0
    %2797 = vmatpush1.bf16.msra.mxu0 0
    %2798 = vmatprep.subr.bf16.mxu0 0
    %2799 = vmatpush1.bf16.msra.mxu0 0
    %2800 = vmatprep.subr.bf16.mxu0 0
    %2801 = vmatpush1.bf16.msra.mxu0 0
    %2802 = vmatprep.subr.bf16.mxu0 0
    %2803 = vmatpush1.bf16.msra.mxu0 0
    %2804 = vmatprep.subr.bf16.mxu0 0
    %2805 = vmatpush1.bf16.msra.mxu0 0
    %2806 = vmatprep.subr.bf16.mxu0 0
    %2807 = vmatpush1.bf16.msra.mxu0 0
    %2808 = vmatprep.subr.bf16.mxu0 0
    %2809 = vmatpush1.bf16.msra.mxu0 0
    %2810 = vmatprep.subr.bf16.mxu0 0
    %2811 = vmatpush1.bf16.msra.mxu0 0
    %2812 = vmatprep.mubr.bf16.mxu0 0
    %2813 = vmatmul.mubr.bf16.gmra.mrb[0].mxu0 %v2775
    %v2814 = vpop.f32.mrb[0].mxu0
    %v2815 = vadd.f32 0.0, %v2814
    %v2816 = vpop.f32.mrb[0].mxu0
    %v2817 = vpop.f32.mrb[0].mxu0
    %v2818 = vadd.f32 0.0, %v2817
    %v2819 = vpop.f32.mrb[0].mxu0
    %2820 = vdwg.mxu0
    %v2821 = vadd.f32 %v2549, %v2815
    %v2822 = vadd.f32 %v2550, %v2818
    %s2823 = scalar_lea.vmem %s8, 1
    %v2824 = vld [vmem:[%s2823] sm:$0x1]
    %v2826 = vlaneseq
    %v2827 = vshrl.u32 %v2826, 7
    %v2828 = vsub.s32 0, %v2827
    %v2829 = vrot.slane %v2824, %v2828
    %v2831 = vadd.f32 %v2821, %v2829
    %v2832 = vadd.f32 %v2822, %v2829
    %v2833 = vadd.f32 %v1665, %v2831
    %v2834 = vadd.f32 %v1666, %v2832
    %s2835 = scalar_lea.vmem %s9, 1
    %v2836 = vld [vmem:[%s2835] sm:$0x1]
    %s2837 = scalar_lea.vmem %s10, 1
    %v2838 = vld [vmem:[%s2837] sm:$0x1]
    %v2839 = vsel %vm196, %v2833, 0.0
    %2840 = vadd.xlane.f32.xlu0 %v2839
    %v2841 = vpop.xlane.xlu0 %2840
    %v2842 = vsel %vm196, %v2834, 0.0
    %2843 = vadd.xlane.f32.xlu0 %v2842
    %v2844 = vpop.xlane.xlu0 %2843
    %v2845 = vmul.f32 %v2841, %v203
    %v2846 = vmul.f32 %v2844, %v203
    %v2847 = vsub.f32 %v2833, %v2845
    %v2848 = vsub.f32 %v2834, %v2846
    %v2849 = vmul.f32 %v2847, %v2847
    %v2850 = vmul.f32 %v2848, %v2848
    %v2851 = vsel %vm196, %v2849, 0.0
    %2852 = vadd.xlane.f32.xlu0 %v2851
    %v2853 = vpop.xlane.xlu0 %2852
    %v2854 = vsel %vm196, %v2850, 0.0
    %2855 = vadd.xlane.f32.xlu0 %v2854
    %v2856 = vpop.xlane.xlu0 %2855
    %v2857 = vmul.f32 %v2853, %v203
    %v2858 = vmul.f32 %v2856, %v203
    %v2859 = vadd.f32 %v2857, 1e-12
    %v2860 = vadd.f32 %v2858, 1e-12
    %v2861 = vrsqrt.pop %v2859
    %v2862 = vrsqrt.pop %v2860
    %v2863 = vmul.f32 %v2847, %v2861
    %v2864 = vmul.f32 %v2848, %v2862
    %v2866 = vlaneseq
    %v2867 = vshrl.u32 %v2866, 7
    %v2868 = vsub.s32 0, %v2867
    %v2869 = vrot.slane %v2836, %v2868
    %v2871 = vmul.f32 %v2863, %v2869
    %v2872 = vmul.f32 %v2864, %v2869
    %v2874 = vlaneseq
    %v2875 = vshrl.u32 %v2874, 7
    %v2876 = vsub.s32 0, %v2875
    %v2877 = vrot.slane %v2838, %v2876
    %v2879 = vadd.f32 %v2871, %v2877
    %v2880 = vadd.f32 %v2872, %v2877
    %v2881 = vpack.c.bf16 %v2880, %v2879
    %s2882 = scalar_lea.vmem %s11, 16
    %v2883 = vld [vmem:[%s2882] sm:$0xf]
    %v2884 = vld [vmem:[%s2882 + $0x4] sm:$0xf]
    %v2885 = vld [vmem:[%s2882 + $0x8] sm:$0xf]
    %v2886 = vld [vmem:[%s2882 + $0xc] sm:$0xf]
    %s2887 = scalar_lea.vmem %s12, 1
    %v2888 = vld [vmem:[%s2887] sm:$0x1]
    %v2890 = vlaneseq
    %v2891 = vshrl.u32 %v2890, 7
    %v2892 = vsub.s32 0, %v2891
    %v2893 = vrot.slane %v2888, %v2892
    %v2899 = vunpack.c.l.b16 %v2883
    %v2900 = vunpack.c.l.b16 %v2884
    %v2901 = vunpack.c.l.b16 %v2885
    %v2902 = vunpack.c.l.b16 %v2886
    %v2903 = vpack.c.b16 %v2900, %v2899
    %v2904 = vpack.c.b16 %v2902, %v2901
    %v2908 = vsel %vm196, %v2881, 0
    %2910 = vmatprep.subr.bf16.mxu0 0
    %2911 = vmatpush1.bf16.msra.mxu0 %v2903
    %2912 = vmatprep.subr.bf16.mxu0 0
    %2913 = vmatpush1.bf16.msra.mxu0 %v2904
    %2914 = vmatprep.subr.bf16.mxu0 0
    %2915 = vmatpush1.bf16.msra.mxu0 0
    %2916 = vmatprep.subr.bf16.mxu0 0
    %2917 = vmatpush1.bf16.msra.mxu0 0
    %2918 = vmatprep.subr.bf16.mxu0 0
    %2919 = vmatpush1.bf16.msra.mxu0 0
    %2920 = vmatprep.subr.bf16.mxu0 0
    %2921 = vmatpush1.bf16.msra.mxu0 0
    %2922 = vmatprep.subr.bf16.mxu0 0
    %2923 = vmatpush1.bf16.msra.mxu0 0
    %2924 = vmatprep.subr.bf16.mxu0 0
    %2925 = vmatpush1.bf16.msra.mxu0 0
    %2926 = vmatprep.subr.bf16.mxu0 0
    %2927 = vmatpush1.bf16.msra.mxu0 0
    %2928 = vmatprep.subr.bf16.mxu0 0
    %2929 = vmatpush1.bf16.msra.mxu0 0
    %2930 = vmatprep.subr.bf16.mxu0 0
    %2931 = vmatpush1.bf16.msra.mxu0 0
    %2932 = vmatprep.subr.bf16.mxu0 0
    %2933 = vmatpush1.bf16.msra.mxu0 0
    %2934 = vmatprep.subr.bf16.mxu0 0
    %2935 = vmatpush1.bf16.msra.mxu0 0
    %2936 = vmatprep.subr.bf16.mxu0 0
    %2937 = vmatpush1.bf16.msra.mxu0 0
    %2938 = vmatprep.subr.bf16.mxu0 0
    %2939 = vmatpush1.bf16.msra.mxu0 0
    %2940 = vmatprep.subr.bf16.mxu0 0
    %2941 = vmatpush1.bf16.msra.mxu0 0
    %2942 = vmatprep.mubr.bf16.mxu0 0
    %2943 = vmatmul.mubr.bf16.gmra.mrb[0].mxu0 %v2908
    %v2944 = vpop.f32.mrb[0].mxu0
    %v2945 = vadd.f32 %v2893, %v2944
    %v2946 = vpop.f32.mrb[0].mxu0
    %v2947 = vpop.f32.mrb[0].mxu0
    %v2948 = vadd.f32 %v2893, %v2947
    %v2949 = vpop.f32.mrb[0].mxu0
    %2950 = vdwg.mxu0
    %v2951 = vmul.f32 %v2945, %v2945
    %v2952 = vmul.f32 %v2948, %v2948
    %v2953 = vmul.f32 %v2945, %v2951
    %v2954 = vmul.f32 %v2948, %v2952
    %v2955 = vmul.f32 %v2953, 0.044715
    %v2956 = vmul.f32 %v2954, 0.044715
    %v2957 = vadd.f32 %v2945, %v2955
    %v2958 = vadd.f32 %v2948, %v2956
    %v2959 = vmul.f32 %v2957, 0.7978846
    %v2960 = vmul.f32 %v2958, 0.7978846
    %v2961 = vtanh.pop %v2959
    %v2962 = vtanh.pop %v2960
    %v2963 = vadd.f32 %v2961, 1.0
    %v2964 = vadd.f32 %v2962, 1.0
    %v2965 = vmul.f32 %v2963, 0.5
    %v2966 = vmul.f32 %v2964, 0.5
    %v2967 = vmul.f32 %v2945, %v2965
    %v2968 = vmul.f32 %v2948, %v2966
    %v2969 = vpack.c.bf16 %v2968, %v2967
    %s2970 = scalar_lea.vmem %s13, 32
    %v2971 = vld [vmem:[%s2970] sm:$0xf]
    %v2972 = vld [vmem:[%s2970 + $0x4] sm:$0xf]
    %v2973 = vld [vmem:[%s2970 + $0x8] sm:$0xf]
    %v2974 = vld [vmem:[%s2970 + $0xc] sm:$0xf]
    %v2975 = vld [vmem:[%s2970 + $0x10] sm:$0xf]
    %v2976 = vld [vmem:[%s2970 + $0x14] sm:$0xf]
    %v2977 = vld [vmem:[%s2970 + $0x18] sm:$0xf]
    %v2978 = vld [vmem:[%s2970 + $0x1c] sm:$0xf]
    %s2979 = scalar_lea.vmem %s14, 1
    %v2980 = vld [vmem:[%s2979] sm:$0x1]
    %v2982 = vlaneseq
    %v2983 = vshrl.u32 %v2982, 7
    %v2984 = vsub.s32 0, %v2983
    %v2985 = vrot.slane %v2980, %v2984
    %v2995 = vunpack.c.l.b16 %v2971
    %v2996 = vunpack.c.l.b16 %v2972
    %v2997 = vunpack.c.l.b16 %v2973
    %v2998 = vunpack.c.l.b16 %v2974
    %v2999 = vunpack.c.l.b16 %v2975
    %v3000 = vunpack.c.l.b16 %v2976
    %v3001 = vunpack.c.l.b16 %v2977
    %v3002 = vunpack.c.l.b16 %v2978
    %v3003 = vpack.c.b16 %v2996, %v2995
    %v3004 = vpack.c.b16 %v2998, %v2997
    %v3005 = vpack.c.b16 %v3000, %v2999
    %v3006 = vpack.c.b16 %v3002, %v3001
    %v3012 = vsel %vm1576, %v2969, 0
    %3014 = vmatprep.subr.bf16.mxu0 0
    %3015 = vmatpush1.bf16.msra.mxu0 %v3003
    %3016 = vmatprep.subr.bf16.mxu0 0
    %3017 = vmatpush1.bf16.msra.mxu0 %v3004
    %3018 = vmatprep.subr.bf16.mxu0 0
    %3019 = vmatpush1.bf16.msra.mxu0 %v3005
    %3020 = vmatprep.subr.bf16.mxu0 0
    %3021 = vmatpush1.bf16.msra.mxu0 %v3006
    %3022 = vmatprep.subr.bf16.mxu0 0
    %3023 = vmatpush1.bf16.msra.mxu0 0
    %3024 = vmatprep.subr.bf16.mxu0 0
    %3025 = vmatpush1.bf16.msra.mxu0 0
    %3026 = vmatprep.subr.bf16.mxu0 0
    %3027 = vmatpush1.bf16.msra.mxu0 0
    %3028 = vmatprep.subr.bf16.mxu0 0
    %3029 = vmatpush1.bf16.msra.mxu0 0
    %3030 = vmatprep.subr.bf16.mxu0 0
    %3031 = vmatpush1.bf16.msra.mxu0 0
    %3032 = vmatprep.subr.bf16.mxu0 0
    %3033 = vmatpush1.bf16.msra.mxu0 0
    %3034 = vmatprep.subr.bf16.mxu0 0
    %3035 = vmatpush1.bf16.msra.mxu0 0
    %3036 = vmatprep.subr.bf16.mxu0 0
    %3037 = vmatpush1.bf16.msra.mxu0 0
    %3038 = vmatprep.subr.bf16.mxu0 0
    %3039 = vmatpush1.bf16.msra.mxu0 0
    %3040 = vmatprep.subr.bf16.mxu0 0
    %3041 = vmatpush1.bf16.msra.mxu0 0
    %3042 = vmatprep.subr.bf16.mxu0 0
    %3043 = vmatpush1.bf16.msra.mxu0 0
    %3044 = vmatprep.subr.bf16.mxu0 0
    %3045 = vmatpush1.bf16.msra.mxu0 0
    %3046 = vmatprep.mubr.bf16.mxu0 0
    %3047 = vmatmul.mubr.bf16.gmra.mrb[0].mxu0 %v3012
    %v3048 = vpop.f32.mrb[0].mxu0
    %v3049 = vadd.f32 %v2985, %v3048
    %v3050 = vpop.f32.mrb[0].mxu0
    %v3051 = vpop.f32.mrb[0].mxu0
    %v3052 = vadd.f32 %v2985, %v3051
    %v3053 = vpop.f32.mrb[0].mxu0
    %3054 = vdwg.mxu0
    %v3055 = vadd.f32 %v2879, %v3049
    %v3056 = vadd.f32 %v2880, %v3052
    %s3057 = scalar_lea.vmem %s15, 1
    %v3058 = vld [vmem:[%s3057] sm:$0x1]
    %s3059 = scalar_lea.vmem %s16, 1
    %v3060 = vld [vmem:[%s3059] sm:$0x1]
    %v3061 = vsel %vm196, %v3055, 0.0
    %3062 = vadd.xlane.f32.xlu0 %v3061
    %v3063 = vpop.xlane.xlu0 %3062
    %v3064 = vsel %vm196, %v3056, 0.0
    %3065 = vadd.xlane.f32.xlu0 %v3064
    %v3066 = vpop.xlane.xlu0 %3065
    %v3067 = vmul.f32 %v3063, %v203
    %v3068 = vmul.f32 %v3066, %v203
    %v3069 = vsub.f32 %v3055, %v3067
    %v3070 = vsub.f32 %v3056, %v3068
    %v3071 = vmul.f32 %v3069, %v3069
    %v3072 = vmul.f32 %v3070, %v3070
    %v3073 = vsel %vm196, %v3071, 0.0
    %3074 = vadd.xlane.f32.xlu0 %v3073
    %v3075 = vpop.xlane.xlu0 %3074
    %v3076 = vsel %vm196, %v3072, 0.0
    %3077 = vadd.xlane.f32.xlu0 %v3076
    %v3078 = vpop.xlane.xlu0 %3077
    %v3079 = vmul.f32 %v3075, %v203
    %v3080 = vmul.f32 %v3078, %v203
    %v3081 = vadd.f32 %v3079, 1e-12
    %v3082 = vadd.f32 %v3080, 1e-12
    %v3083 = vrsqrt.pop %v3081
    %v3084 = vrsqrt.pop %v3082
    %v3085 = vmul.f32 %v3069, %v3083
    %v3086 = vmul.f32 %v3070, %v3084
    %v3088 = vlaneseq
    %v3089 = vshrl.u32 %v3088, 7
    %v3090 = vsub.s32 0, %v3089
    %v3091 = vrot.slane %v3058, %v3090
    %v3093 = vmul.f32 %v3085, %v3091
    %v3094 = vmul.f32 %v3086, %v3091
    %v3096 = vlaneseq
    %v3097 = vshrl.u32 %v3096, 7
    %v3098 = vsub.s32 0, %v3097
    %v3099 = vrot.slane %v3060, %v3098
    %v3101 = vadd.f32 %v3093, %v3099
    %v3102 = vadd.f32 %v3094, %v3099
    %v3103 = vpack.c.bf16 %v3101, %v3101
    %v3104 = vpack.c.bf16 %v3102, %v3102
    %v3105 = vld [vmem:[%s17] sm:$0xf]
    %v3106 = vld [vmem:[%s17 + $0x4] sm:$0xf]
    %v3107 = vld [vmem:[%s17 + $0x8] sm:$0xf]
    %v3108 = vld [vmem:[%s17 + $0xc] sm:$0xf]
    %v3109 = vld [vmem:[%s18] sm:$0x1]
    %v3111 = vlaneseq
    %v3112 = vshrl.u32 %v3111, 7
    %v3113 = vsub.s32 0, %v3112
    %v3114 = vrot.slane %v3109, %v3113
    %v3118 = vunpack.c.l.b16 %v3103
    %v3119 = vunpack.c.l.b16 %v3104
    %v3120 = vrot.slane %v3119, 7
    %vm3121 = vcmask 1041409
    %v3122 = vsel %vm3121, %v3120, %v3118
    %v3123 = vpack.c.b16 %v3122, %v3122
    %v3128 = vunpack.c.l.b16 %v3105
    %v3129 = vunpack.c.l.b16 %v3106
    %v3130 = vunpack.c.l.b16 %v3107
    %v3131 = vunpack.c.l.b16 %v3108
    %v3132 = vpack.c.b16 %v3129, %v3128
    %v3133 = vpack.c.b16 %v3131, %v3130
    %v3137 = vsel %vm196, %v3123, 0
    %3139 = vmatprep.subr.bf16.mxu0 0
    %3140 = vmatpush1.bf16.msra.mxu0 %v3132
    %3141 = vmatprep.subr.bf16.mxu0 0
    %3142 = vmatpush1.bf16.msra.mxu0 %v3133
    %3143 = vmatprep.subr.bf16.mxu0 0
    %3144 = vmatpush1.bf16.msra.mxu0 0
    %3145 = vmatprep.subr.bf16.mxu0 0
    %3146 = vmatpush1.bf16.msra.mxu0 0
    %3147 = vmatprep.subr.bf16.mxu0 0
    %3148 = vmatpush1.bf16.msra.mxu0 0
    %3149 = vmatprep.subr.bf16.mxu0 0
    %3150 = vmatpush1.bf16.msra.mxu0 0
    %3151 = vmatprep.subr.bf16.mxu0 0
    %3152 = vmatpush1.bf16.msra.mxu0 0
    %3153 = vmatprep.subr.bf16.mxu0 0
    %3154 = vmatpush1.bf16.msra.mxu0 0
    %3155 = vmatprep.subr.bf16.mxu0 0
    %3156 = vmatpush1.bf16.msra.mxu0 0
    %3157 = vmatprep.subr.bf16.mxu0 0
    %3158 = vmatpush1.bf16.msra.mxu0 0
    %3159 = vmatprep.subr.bf16.mxu0 0
    %3160 = vmatpush1.bf16.msra.mxu0 0
    %3161 = vmatprep.subr.bf16.mxu0 0
    %3162 = vmatpush1.bf16.msra.mxu0 0
    %3163 = vmatprep.subr.bf16.mxu0 0
    %3164 = vmatpush1.bf16.msra.mxu0 0
    %3165 = vmatprep.subr.bf16.mxu0 0
    %3166 = vmatpush1.bf16.msra.mxu0 0
    %3167 = vmatprep.subr.bf16.mxu0 0
    %3168 = vmatpush1.bf16.msra.mxu0 0
    %3169 = vmatprep.subr.bf16.mxu0 0
    %3170 = vmatpush1.bf16.msra.mxu0 0
    %3171 = vmatprep.mubr.bf16.mxu0 0
    %3172 = vmatmul.mubr.bf16.gmra.mrb[0].mxu0 %v3137
    %v3173 = vpop.f32.mrb[0].mxu0
    %v3174 = vadd.f32 %v3114, %v3173
    %v3175 = vpop.f32.mrb[0].mxu0
    %v3176 = vpop.f32.mrb[0].mxu0
    %v3177 = vpop.f32.mrb[0].mxu0
    %3178 = vdwg.mxu0
    %v3179 = vtanh.pop %v3174
    %v3180 = vpack.c.bf16 %v3179, %v3179
    %v3181 = vld [vmem:[%s19] sm:$0xff]
    %v3182 = vld [vmem:[%s19 + $0x8] sm:$0xff]
    %v3183 = vld [vmem:[%s19 + $0x10] sm:$0xff]
    %v3184 = vld [vmem:[%s19 + $0x18] sm:$0xff]
    %v3185 = vld [vmem:[%s20] sm:$0x3]
    %v3187 = vlaneseq
    %v3188 = vshrl.u32 %v3187, 7
    %v3189 = vsub.s32 0, %v3188
    %v3190 = vrot.slane %v3185, %v3189
    %v3191 = vlaneseq
    %v3192 = vshrl.u32 %v3191, 7
    %v3193 = vsub.s32 1, %v3192
    %v3194 = vrot.slane %v3185, %v3193
    %v3201 = vunpack.c.l.b16 %v3181
    %v3202 = vunpack.c.h.b16 %v3181
    %v3203 = vunpack.c.l.b16 %v3182
    %v3204 = vunpack.c.h.b16 %v3182
    %v3205 = vunpack.c.l.b16 %v3183
    %v3206 = vunpack.c.h.b16 %v3183
    %v3207 = vunpack.c.l.b16 %v3184
    %v3208 = vunpack.c.h.b16 %v3184
    %v3209 = vpack.c.b16 %v3203, %v3201
    %v3210 = vpack.c.b16 %v3204, %v3202
    %v3211 = vpack.c.b16 %v3207, %v3205
    %v3212 = vpack.c.b16 %v3208, %v3206
    %v3218 = vsel %vm196, %v3180, 0
    %3220 = vmatprep.subr.bf16.mxu0 %v3210
    %3221 = vmatpush1.bf16.msra.mxu0 %v3209
    %3222 = vmatprep.subr.bf16.mxu0 %v3212
    %3223 = vmatpush1.bf16.msra.mxu0 %v3211
    %3224 = vmatprep.subr.bf16.mxu0 0
    %3225 = vmatpush1.bf16.msra.mxu0 0
    %3226 = vmatprep.subr.bf16.mxu0 0
    %3227 = vmatpush1.bf16.msra.mxu0 0
    %3228 = vmatprep.subr.bf16.mxu0 0
    %3229 = vmatpush1.bf16.msra.mxu0 0
    %3230 = vmatprep.subr.bf16.mxu0 0
    %3231 = vmatpush1.bf16.msra.mxu0 0
    %3232 = vmatprep.subr.bf16.mxu0 0
    %3233 = vmatpush1.bf16.msra.mxu0 0
    %3234 = vmatprep.subr.bf16.mxu0 0
    %3235 = vmatpush1.bf16.msra.mxu0 0
    %3236 = vmatprep.subr.bf16.mxu0 0
    %3237 = vmatpush1.bf16.msra.mxu0 0
    %3238 = vmatprep.subr.bf16.mxu0 0
    %3239 = vmatpush1.bf16.msra.mxu0 0
    %3240 = vmatprep.subr.bf16.mxu0 0
    %3241 = vmatpush1.bf16.msra.mxu0 0
    %3242 = vmatprep.subr.bf16.mxu0 0
    %3243 = vmatpush1.bf16.msra.mxu0 0
    %3244 = vmatprep.subr.bf16.mxu0 0
    %3245 = vmatpush1.bf16.msra.mxu0 0
    %3246 = vmatprep.subr.bf16.mxu0 0
    %3247 = vmatpush1.bf16.msra.mxu0 0
    %3248 = vmatprep.subr.bf16.mxu0 0
    %3249 = vmatpush1.bf16.msra.mxu0 0
    %3250 = vmatprep.subr.bf16.mxu0 0
    %3251 = vmatpush1.bf16.msra.mxu0 0
    %3252 = vmatprep.mubr.bf16.mxu0 0
    %3253 = vmatmul.mubr.bf16.gmra.mrb[0].mxu0 %v3218
    %v3254 = vpop.f32.mrb[0].mxu0
    %v3255 = vadd.f32 %v3190, %v3254
    %v3256 = vpop.f32.mrb[0].mxu0
    %v3257 = vadd.f32 %v3194, %v3256
    %v3258 = vpop.f32.mrb[0].mxu0
    %v3259 = vpop.f32.mrb[0].mxu0
    %3260 = vdwg.mxu0
    %v3261 = vmax.f32 %v3255, 0.0
    %v3262 = vmax.f32 %v3257, 0.0
    %v3263 = vpack.c.bf16 %v3261, %v3261
    %v3264 = vpack.c.bf16 %v3262, %v3262
    %v3265 = vld [vmem:[%s21] sm:$0xf]
    %v3266 = vld [vmem:[%s21 + $0x4] sm:$0xf]
    %v3267 = vld [vmem:[%s21 + $0x8] sm:$0xf]
    %v3268 = vld [vmem:[%s21 + $0xc] sm:$0xf]
    %v3269 = vld [vmem:[%s21 + $0x10] sm:$0xf]
    %v3270 = vld [vmem:[%s21 + $0x14] sm:$0xf]
    %v3271 = vld [vmem:[%s21 + $0x18] sm:$0xf]
    %v3272 = vld [vmem:[%s21 + $0x1c] sm:$0xf]
    %v3273 = vld [vmem:[%s21 + $0x20] sm:$0xf]
    %v3274 = vld [vmem:[%s21 + $0x24] sm:$0xf]
    %v3275 = vld [vmem:[%s21 + $0x28] sm:$0xf]
    %v3276 = vld [vmem:[%s21 + $0x2c] sm:$0xf]
    %v3277 = vld [vmem:[%s21 + $0x30] sm:$0xf]
    %v3278 = vld [vmem:[%s21 + $0x34] sm:$0xf]
    %v3279 = vld [vmem:[%s21 + $0x38] sm:$0xf]
    %v3280 = vld [vmem:[%s21 + $0x3c] sm:$0xf]
    %v3281 = vld [vmem:[%s21 + $0x40] sm:$0xf]
    %v3282 = vld [vmem:[%s21 + $0x44] sm:$0xf]
    %v3283 = vld [vmem:[%s21 + $0x48] sm:$0xf]
    %v3284 = vld [vmem:[%s21 + $0x4c] sm:$0xf]
    %v3285 = vld [vmem:[%s21 + $0x50] sm:$0xf]
    %v3286 = vld [vmem:[%s21 + $0x54] sm:$0xf]
    %v3287 = vld [vmem:[%s21 + $0x58] sm:$0xf]
    %v3288 = vld [vmem:[%s21 + $0x5c] sm:$0xf]
    %v3289 = vld [vmem:[%s21 + $0x60] sm:$0xf]
    %v3290 = vld [vmem:[%s21 + $0x64] sm:$0xf]
    %v3291 = vld [vmem:[%s21 + $0x68] sm:$0xf]
    %v3292 = vld [vmem:[%s21 + $0x6c] sm:$0xf]
    %v3293 = vld [vmem:[%s21 + $0x70] sm:$0xf]
    %v3294 = vld [vmem:[%s21 + $0x74] sm:$0xf]
    %v3295 = vld [vmem:[%s21 + $0x78] sm:$0xf]
    %v3296 = vld [vmem:[%s21 + $0x7c] sm:$0xf]
    %v3297 = vld [vmem:[%s22] sm:$0x1]
    %v3299 = vlaneseq
    %v3300 = vshrl.u32 %v3299, 7
    %v3301 = vsub.s32 0, %v3300
    %v3302 = vrot.slane %v3297, %v3301
    %v3336 = vunpack.c.l.b16 %v3265
    %v3337 = vunpack.c.l.b16 %v3266
    %v3338 = vunpack.c.l.b16 %v3267
    %v3339 = vunpack.c.l.b16 %v3268
    %v3340 = vunpack.c.l.b16 %v3269
    %v3341 = vunpack.c.l.b16 %v3270
    %v3342 = vunpack.c.l.b16 %v3271
    %v3343 = vunpack.c.l.b16 %v3272
    %v3344 = vunpack.c.l.b16 %v3273
    %v3345 = vunpack.c.l.b16 %v3274
    %v3346 = vunpack.c.l.b16 %v3275
    %v3347 = vunpack.c.l.b16 %v3276
    %v3348 = vunpack.c.l.b16 %v3277
    %v3349 = vunpack.c.l.b16 %v3278
    %v3350 = vunpack.c.l.b16 %v3279
    %v3351 = vunpack.c.l.b16 %v3280
    %v3352 = vunpack.c.l.b16 %v3281
    %v3353 = vunpack.c.l.b16 %v3282
    %v3354 = vunpack.c.l.b16 %v3283
    %v3355 = vunpack.c.l.b16 %v3284
    %v3356 = vunpack.c.l.b16 %v3285
    %v3357 = vunpack.c.l.b16 %v3286
    %v3358 = vunpack.c.l.b16 %v3287
    %v3359 = vunpack.c.l.b16 %v3288
    %v3360 = vunpack.c.l.b16 %v3289
    %v3361 = vunpack.c.l.b16 %v3290
    %v3362 = vunpack.c.l.b16 %v3291
    %v3363 = vunpack.c.l.b16 %v3292
    %v3364 = vunpack.c.l.b16 %v3293
    %v3365 = vunpack.c.l.b16 %v3294
    %v3366 = vunpack.c.l.b16 %v3295
    %v3367 = vunpack.c.l.b16 %v3296
    %v3368 = vpack.c.b16 %v3337, %v3336
    %v3369 = vpack.c.b16 %v3339, %v3338
    %v3370 = vpack.c.b16 %v3341, %v3340
    %v3371 = vpack.c.b16 %v3343, %v3342
    %v3372 = vpack.c.b16 %v3345, %v3344
    %v3373 = vpack.c.b16 %v3347, %v3346
    %v3374 = vpack.c.b16 %v3349, %v3348
    %v3375 = vpack.c.b16 %v3351, %v3350
    %v3376 = vpack.c.b16 %v3353, %v3352
    %v3377 = vpack.c.b16 %v3355, %v3354
    %v3378 = vpack.c.b16 %v3357, %v3356
    %v3379 = vpack.c.b16 %v3359, %v3358
    %v3380 = vpack.c.b16 %v3361, %v3360
    %v3381 = vpack.c.b16 %v3363, %v3362
    %v3382 = vpack.c.b16 %v3365, %v3364
    %v3383 = vpack.c.b16 %v3367, %v3366
    %3400 = vmatprep.subr.bf16.mxu0 0
    %3401 = vmatpush1.bf16.msra.mxu0 %v3368
    %3402 = vmatprep.subr.bf16.mxu0 0
    %3403 = vmatpush1.bf16.msra.mxu0 %v3369
    %3404 = vmatprep.subr.bf16.mxu0 0
    %3405 = vmatpush1.bf16.msra.mxu0 %v3370
    %3406 = vmatprep.subr.bf16.mxu0 0
    %3407 = vmatpush1.bf16.msra.mxu0 %v3371
    %3408 = vmatprep.subr.bf16.mxu0 0
    %3409 = vmatpush1.bf16.msra.mxu0 %v3372
    %3410 = vmatprep.subr.bf16.mxu0 0
    %3411 = vmatpush1.bf16.msra.mxu0 %v3373
    %3412 = vmatprep.subr.bf16.mxu0 0
    %3413 = vmatpush1.bf16.msra.mxu0 %v3374
    %3414 = vmatprep.subr.bf16.mxu0 0
    %3415 = vmatpush1.bf16.msra.mxu0 %v3375
    %3416 = vmatprep.subr.bf16.mxu0 0
    %3417 = vmatpush1.bf16.msra.mxu0 %v3376
    %3418 = vmatprep.subr.bf16.mxu0 0
    %3419 = vmatpush1.bf16.msra.mxu0 %v3377
    %3420 = vmatprep.subr.bf16.mxu0 0
    %3421 = vmatpush1.bf16.msra.mxu0 %v3378
    %3422 = vmatprep.subr.bf16.mxu0 0
    %3423 = vmatpush1.bf16.msra.mxu0 %v3379
    %3424 = vmatprep.subr.bf16.mxu0 0
    %3425 = vmatpush1.bf16.msra.mxu0 %v3380
    %3426 = vmatprep.subr.bf16.mxu0 0
    %3427 = vmatpush1.bf16.msra.mxu0 %v3381
    %3428 = vmatprep.subr.bf16.mxu0 0
    %3429 = vmatpush1.bf16.msra.mxu0 %v3382
    %3430 = vmatprep.subr.bf16.mxu0 0
    %3431 = vmatpush1.bf16.msra.mxu0 %v3383
    %3432 = vmatprep.mubr.bf16.mxu0 %v3264
    %3433 = vmatmul.mubr.bf16.gmra.mrb[0].mxu0 %v3263
    %v3434 = vpop.f32.mrb[0].mxu0
    %v3435 = vadd.f32 %v3302, %v3434
    %v3436 = vpop.f32.mrb[0].mxu0
    %v3437 = vpop.f32.mrb[0].mxu0
    %v3438 = vpop.f32.mrb[0].mxu0
    %3439 = vdwg.mxu0
    %v3440 = vmax.f32 %v3435, 0.0
    %v3441 = vpack.c.bf16 %v3440, %v3440
    %v3442 = vld [vmem:[%s23] sm:$0xf]
    %v3443 = vld [vmem:[%s23 + $0x4] sm:$0xf]
    %v3444 = vld [vmem:[%s23 + $0x8] sm:$0xf]
    %v3445 = vld [vmem:[%s23 + $0xc] sm:$0xf]
    %v3446 = vld [vmem:[%s23 + $0x10] sm:$0xf]
    %v3447 = vld [vmem:[%s23 + $0x14] sm:$0xf]
    %v3448 = vld [vmem:[%s23 + $0x18] sm:$0xf]
    %v3449 = vld [vmem:[%s23 + $0x1c] sm:$0xf]
    %v3450 = vld [vmem:[%s24] sm:$0x1]
    %v3452 = vlaneseq
    %v3453 = vshrl.u32 %v3452, 7
    %v3454 = vsub.s32 0, %v3453
    %v3455 = vrot.slane %v3450, %v3454
    %v3465 = vunpack.c.l.b16 %v3442
    %v3466 = vunpack.c.l.b16 %v3443
    %v3467 = vunpack.c.l.b16 %v3444
    %v3468 = vunpack.c.l.b16 %v3445
    %v3469 = vunpack.c.l.b16 %v3446
    %v3470 = vunpack.c.l.b16 %v3447
    %v3471 = vunpack.c.l.b16 %v3448
    %v3472 = vunpack.c.l.b16 %v3449
    %v3473 = vpack.c.b16 %v3466, %v3465
    %v3474 = vpack.c.b16 %v3468, %v3467
    %v3475 = vpack.c.b16 %v3470, %v3469
    %v3476 = vpack.c.b16 %v3472, %v3471
    %v3482 = vsel %vm1576, %v3441, 0
    %3484 = vmatprep.subr.bf16.mxu0 0
    %3485 = vmatpush1.bf16.msra.mxu0 %v3473
    %3486 = vmatprep.subr.bf16.mxu0 0
    %3487 = vmatpush1.bf16.msra.mxu0 %v3474
    %3488 = vmatprep.subr.bf16.mxu0 0
    %3489 = vmatpush1.bf16.msra.mxu0 %v3475
    %3490 = vmatprep.subr.bf16.mxu0 0
    %3491 = vmatpush1.bf16.msra.mxu0 %v3476
    %3492 = vmatprep.subr.bf16.mxu0 0
    %3493 = vmatpush1.bf16.msra.mxu0 0
    %3494 = vmatprep.subr.bf16.mxu0 0
    %3495 = vmatpush1.bf16.msra.mxu0 0
    %3496 = vmatprep.subr.bf16.mxu0 0
    %3497 = vmatpush1.bf16.msra.mxu0 0
    %3498 = vmatprep.subr.bf16.mxu0 0
    %3499 = vmatpush1.bf16.msra.mxu0 0
    %3500 = vmatprep.subr.bf16.mxu0 0
    %3501 = vmatpush1.bf16.msra.mxu0 0
    %3502 = vmatprep.subr.bf16.mxu0 0
    %3503 = vmatpush1.bf16.msra.mxu0 0
    %3504 = vmatprep.subr.bf16.mxu0 0
    %3505 = vmatpush1.bf16.msra.mxu0 0
    %3506 = vmatprep.subr.bf16.mxu0 0
    %3507 = vmatpush1.bf16.msra.mxu0 0
    %3508 = vmatprep.subr.bf16.mxu0 0
    %3509 = vmatpush1.bf16.msra.mxu0 0
    %3510 = vmatprep.subr.bf16.mxu0 0
    %3511 = vmatpush1.bf16.msra.mxu0 0
    %3512 = vmatprep.subr.bf16.mxu0 0
    %3513 = vmatpush1.bf16.msra.mxu0 0
    %3514 = vmatprep.subr.bf16.mxu0 0
    %3515 = vmatpush1.bf16.msra.mxu0 0
    %3516 = vmatprep.mubr.bf16.mxu0 0
    %3517 = vmatmul.mubr.bf16.gmra.mrb[0].mxu0 %v3482
    %v3518 = vpop.f32.mrb[0].mxu0
    %v3519 = vadd.f32 %v3455, %v3518
    %v3520 = vpop.f32.mrb[0].mxu0
    %v3521 = vpop.f32.mrb[0].mxu0
    %v3522 = vpop.f32.mrb[0].mxu0
    %3523 = vdwg.mxu0
    %3524 = vst [vmem:[#allocation6] sm:$0x3] %v3519
    // Predicated region
    $region106: #{text_transformer_forward.1} parent=1 // pred_check
      _
    $region107: #{text_transformer_forward.1} parent=1 // pred_check_branch
      %3526 = sbr.rel (0) target = $region109
    $region108: #{text_transformer_forward.1} parent=1 // pred_region
      %s3528 = ssub.s32 32, 32
      %3529 = vsyncadd [#allocation4], %s3528
      %s3531 = sshll.u32 [#allocation6], 4
      %s3532 = int_to_ptr.vmem [resolvable:$true] %s3531
      %3534 = dma.vmem_to_hbm [thread:$0]  %s3532, 32, %s25, [#allocation4]
    $region109: #{text_transformer_forward.1} parent=1 // pred_fallthru
      _
    // Predicated region
    $region110: #{text_transformer_forward.1} parent=1 // pred_check
      _
    $region111: #{text_transformer_forward.1} parent=1 // pred_check_branch
      %3536 = sbr.rel (0) target = $region113
    $region112: #{text_transformer_forward.1} parent=1 // pred_region
      %3537 = dma.done [#allocation4], 32
    $region113: #{text_transformer_forward.1} parent=1 // pred_fallthru
      _
    %3538 = vsyncpa [#allocation4], 1
    %3539 = vsyncpa [#allocation5], 1

</llo_original>
